<compile_context>
chip_gen: v5e
topology: v5e:2x2
jax: 0.10.0
libtpu: 0.0.40
codegen_flags: <defaults>
</compile_context>

<pallas_src>
import functools

import jax
import jax.numpy as jnp
from jax.experimental import pallas as pl
from jax.experimental.pallas import tpu as pltpu


# ----------------------------------------------------------------------------
# Bilinear resize matrix with PyTorch F.interpolate(align_corners=False)
# semantics (plain-JAX parameter/constant setup, not kernel code).
# ----------------------------------------------------------------------------
def bilinear_matrix(out_size: int, in_size: int, dtype=jnp.float32):
    if out_size == in_size:
        return jnp.eye(out_size, dtype=dtype)
    scale = in_size / out_size
    o = jnp.arange(out_size, dtype=jnp.float32)
    src = jnp.maximum(scale * (o + 0.5) - 0.5, 0.0)
    i0 = jnp.clip(jnp.floor(src).astype(jnp.int32), 0, in_size - 1)
    i1 = jnp.minimum(i0 + 1, in_size - 1)
    w1 = src - i0.astype(jnp.float32)
    w0 = 1.0 - w1
    m = jnp.zeros((out_size, in_size), dtype=dtype)
    rows = jnp.arange(out_size)
    m = m.at[rows, i0].add(w0.astype(dtype))
    m = m.at[rows, i1].add(w1.astype(dtype))
    return m


def _pick_row_tile(mask_h: int, n_batch: int, per_row_bytes: int, budget: int) -> int:
    """Largest row tile that divides mask_h, fits the VMEM budget and (preferably)
    makes the total parallel step count even (keeps both v7x TCs busy)."""
    cands = [t for t in (256, 128, 64, 32, 16, 8) if mask_h % t == 0]
    if not cands:
        return mask_h                       # odd mask heights: one full-height tile
    fit = [t for t in cands if t * per_row_bytes <= budget] or [cands[-1]]
    even = [t for t in fit if (n_batch * (mask_h // t)) % 2 == 0]
    return (even or fit)[0]


# ----------------------------------------------------------------------------
# Fused kernel.  Per (batch, output-row-tile) grid step:
#   Stage 1: F lane-dense width-resize matmuls -> bf16 scratch T (K_tot, mask_w)
#   Stage 2: cout big-K matmuls (tile_r, K_tot) @ (K_tot, mask_w), channel
#            stored immediately (bounded accumulator liveness).
# ----------------------------------------------------------------------------
def _seg_head_kernel(num_features, cout, seg_rows, b_ref, *refs):
    x_refs = refs[:num_features]                  # (1, cin*H_i (padded), W_i) bf16
    cw_refs = refs[num_features:2 * num_features]  # (W_i, mask_w)             bf16
    chw_ref = refs[2 * num_features]              # (cout, tile_r, K_tot)      bf16
    o_ref = refs[2 * num_features + 1]            # (1, cout, tile_r, mask_w)
    t_ref = refs[2 * num_features + 2]            # VMEM scratch (K_tot, mask_w) bf16

    # Stage 1: separable width resize, one MXU matmul per feature (M = cin*H_i).
    off = 0
    for i in range(num_features):
        rows = seg_rows[i]
        t = jnp.dot(x_refs[i][0], cw_refs[i][...],
                    preferred_element_type=jnp.float32)       # (rows, mask_w) f32
        t_ref[off:off + rows, :] = t.astype(jnp.bfloat16)
        off += rows

    # Stage 2: fused channel-mix + height resize, K = K_tot (~256-450+).
    # One matmul per output channel; store right away -> one (tile_r, mask_w)
    # f32 value live at a time.
    for c in range(cout):
        y = jnp.dot(chw_ref[c], t_ref[...],
                    preferred_element_type=jnp.float32)       # (tile_r, mask_w) f32
        o_ref[0, c] = (y + b_ref[c]).astype(o_ref.dtype)


# ----------------------------------------------------------------------------
# Wrapper: folds weights, composes resize operators (plain JAX constant setup)
# and launches one fused pallas_call.  Inputs / output are NCHW like PyTorch.
# ----------------------------------------------------------------------------
def seg_head_forward(inputs, mask_size, params, out_dtype=jnp.float32):
    """inputs: list of (N, Cin, H_i, W_i).  Returns (N, num_classes, mask_h, mask_w)."""
    mask_h, mask_w = mask_size
    h4, w4 = mask_h // 4, mask_w // 4
    num_features = len(inputs)
    N, cin = inputs[0].shape[0], inputs[0].shape[1]
    cout = params["final_w"].shape[0]
    out_planes = params["conv_w"][0].shape[0]

    bh = bilinear_matrix(mask_h, h4)              # (mask_h, h4)
    bw = bilinear_matrix(mask_w, w4)              # (mask_w, w4)

    x_args, cw_args, chw_blocks = [], [], []
    x_specs, cw_specs = [], []
    seg_rows = []
    b_total = params["final_b"].astype(jnp.float32)

    for i, x in enumerate(inputs):
        _, _, H, W = x.shape
        ch_i = bh @ bilinear_matrix(h4, H)        # composed height resize (mask_h, H)
        cw_t = (bw @ bilinear_matrix(w4, W)).T    # composed width resize  (W, mask_w)

        # Fold the final 1x1 conv into the per-feature 1x1 conv (exact: all linear).
        wf_i = params["final_w"][:, i * out_planes:(i + 1) * out_planes]
        w_fold = wf_i @ params["conv_w"][i]       # (cout, cin)
        b_total = b_total + wf_i @ params["conv_b"][i].astype(jnp.float32)

        rows = cin * H
        rows_pad = -(-rows // 8) * 8              # sublane-align each K segment
        seg_rows.append(rows_pad)

        xi = x.reshape(N, rows, W)
        if rows_pad != rows:
            xi = jnp.pad(xi, ((0, 0), (0, rows_pad - rows), (0, 0)))
        x_args.append(xi.astype(jnp.bfloat16))
        cw_args.append(cw_t.astype(jnp.bfloat16))

        # Weight-folded height operator: CHW_i[c, r, k*H+h] = w_fold[c,k] * ch_i[r,h].
        chw_i = jnp.einsum("ck,rh->crkh", w_fold, ch_i).reshape(cout, mask_h, rows)
        if rows_pad != rows:
            chw_i = jnp.pad(chw_i, ((0, 0), (0, 0), (0, rows_pad - rows)))
        chw_blocks.append(chw_i)

        x_specs.append(pl.BlockSpec((1, rows_pad, W), lambda n, r: (n, 0, 0)))
        cw_specs.append(pl.BlockSpec((W, mask_w), lambda n, r: (0, 0)))

    k_tot = sum(seg_rows)
    chw = jnp.concatenate(chw_blocks, axis=-1).astype(jnp.bfloat16)  # (cout, mask_h, k_tot)

    # VMEM-budget-aware row tile (conservative so it also fits v7x's 64 MiB part).
    out_bytes = jnp.dtype(out_dtype).itemsize
    per_row = cout * mask_w * out_bytes * 2 + cout * k_tot * 2 * 2   # dbl-buffered out + CHW
    resident = (sum(a.size for a in x_args) // N * 2                 # one batch of x (bf16)
                + sum(a.size for a in cw_args) * 2                   # composed width operators
                + k_tot * mask_w * 2)                                # T scratch
    budget = 24 * 1024 * 1024
    tile_r = _pick_row_tile(mask_h, N, per_row,
                            max(budget - 2 * resident, 4 * 1024 * 1024))

    grid = (N, mask_h // tile_r)
    est = tile_r * per_row + 2 * resident
    vmem_limit = int(min(max(2 * est, 32 * 1024 * 1024), 48 * 1024 * 1024))

    kernel = functools.partial(_seg_head_kernel, num_features, cout, tuple(seg_rows))
    out = pl.pallas_call(
        kernel,
        out_shape=jax.ShapeDtypeStruct((N, cout, mask_h, mask_w), out_dtype),
        grid=grid,
        in_specs=[pl.BlockSpec(memory_space=pltpu.MemorySpace.SMEM)]        # folded bias
                 + x_specs + cw_specs
                 + [pl.BlockSpec((cout, tile_r, k_tot), lambda n, r: (0, r, 0))],
        out_specs=pl.BlockSpec((1, cout, tile_r, mask_w),
                               lambda n, r: (n, 0, r, 0)),
        scratch_shapes=[pltpu.VMEM((k_tot, mask_w), jnp.bfloat16)],
        compiler_params=pltpu.CompilerParams(
            dimension_semantics=("parallel", "parallel"),
            vmem_limit_bytes=vmem_limit),
    )(b_total, *x_args, *cw_args, chw)
    return out


# ----------------------------------------------------------------------------
# Pure-JAX reference: the original two-stage math (conv -> resize -> concat ->
# final conv -> resize), f32, NCHW — mirrors the PyTorch module exactly.
# ----------------------------------------------------------------------------
def _ref_forward(inputs, mask_size, params):
    h4, w4 = mask_size[0] // 4, mask_size[1] // 4
    outs = []
    for i, x in enumerate(inputs):
        _, _, H, W = x.shape
        y = jnp.einsum("oc,nchw->nohw", params["conv_w"][i], x)
        y = y + params["conv_b"][i][None, :, None, None]
        ah, aw = bilinear_matrix(h4, H), bilinear_matrix(w4, W)
        outs.append(jnp.einsum("ph,nchw,qw->ncpq", ah, y, aw))
    z = jnp.concatenate(outs, axis=1)
    z = jnp.einsum("oc,nchw->nohw", params["final_w"], z)
    z = z + params["final_b"][None, :, None, None]
    bh = bilinear_matrix(mask_size[0], h4)
    bw = bilinear_matrix(mask_size[1], w4)
    return jnp.einsum("ph,nchw,qw->ncpq", bh, z, bw)


if __name__ == "__main__":
    # Small deterministic configuration (mirrors the module's __init__):
    #   in_planes = 4 -> per-feature input channels = in_planes * 4 = 16
    #   out_planes = 8, num_en_features = 3, num_classes = 5
    in_planes, out_planes, num_en_features, num_classes = 4, 8, 3, 5
    cin = in_planes * 4
    batch = 2
    mask_size = (64, 64)
    feat_hw = [(16, 16), (8, 8), (4, 4)]       # pyramid feature resolutions

    key = jax.random.PRNGKey(0)
    keys = jax.random.split(key, 2 * num_en_features + 2 + num_en_features)
    k_it = iter(keys)

    params = {
        "conv_w": [0.1 * jax.random.normal(next(k_it), (out_planes, cin), jnp.float32)
                   for _ in range(num_en_features)],
        "conv_b": [0.1 * jax.random.normal(next(k_it), (out_planes,), jnp.float32)
                   for _ in range(num_en_features)],
        "final_w": 0.1 * jax.random.normal(
            next(k_it), (num_classes, out_planes * num_en_features), jnp.float32),
        "final_b": 0.1 * jax.random.normal(next(k_it), (num_classes,), jnp.float32),
    }

    # NCHW inputs, exactly like the PyTorch module.
    inputs = [jax.random.normal(next(k_it), (batch, cin, h, w), jnp.float32)
              for (h, w) in feat_hw]

    out = seg_head_forward(inputs, mask_size, params)
    out = jax.block_until_ready(out)
    assert out.shape == (batch, num_classes, mask_size[0], mask_size[1]), out.shape

    ref = jax.block_until_ready(_ref_forward(inputs, mask_size, params))
    err = float(jnp.max(jnp.abs(out - ref)))
    # bf16 operands (x, composed resize, folded weights) / f32 accumulation.
    assert jnp.allclose(out, ref, atol=2e-2, rtol=2e-2), err

    print("KERNEL_OK")
</pallas_src>

<mosaic_0001>
module attributes {stable_mosaic.version = 11 : i64} {
  func.func @_seg_head_kernel(%arg0: i32, %arg1: i32, %arg2: memref<5xf32, #tpu.memory_space<smem>>, %arg3: memref<1x256x16xbf16, #tpu.memory_space<vmem>>, %arg4: memref<1x128x8xbf16, #tpu.memory_space<vmem>>, %arg5: memref<1x64x4xbf16, #tpu.memory_space<vmem>>, %arg6: memref<16x64xbf16, #tpu.memory_space<vmem>>, %arg7: memref<8x64xbf16, #tpu.memory_space<vmem>>, %arg8: memref<4x64xbf16, #tpu.memory_space<vmem>>, %arg9: memref<5x64x448xbf16, #tpu.memory_space<vmem>>, %arg10: memref<1x5x64x64xf32, #tpu.memory_space<vmem>>, %arg11: memref<448x64xbf16, #tpu.memory_space<vmem>>) attributes {dimension_semantics = [#tpu.dimension_semantics<parallel>, #tpu.dimension_semantics<parallel>], iteration_bounds = array<i64: 2, 1>, scalar_prefetch = 0 : i64, scratch_operands = 1 : i64, tpu.core_type = #tpu.core_type<tc>, window_params = [{transform_indices = @transform_0, window_bounds = array<i64: 5>}, {transform_indices = @transform_1, window_bounds = array<i64: 1, 256, 16>}, {transform_indices = @transform_2, window_bounds = array<i64: 1, 128, 8>}, {transform_indices = @transform_3, window_bounds = array<i64: 1, 64, 4>}, {pipeline_mode = #tpu.pipeline_mode<synchronous>, transform_indices = @transform_4, window_bounds = array<i64: 16, 64>}, {pipeline_mode = #tpu.pipeline_mode<synchronous>, transform_indices = @transform_5, window_bounds = array<i64: 8, 64>}, {pipeline_mode = #tpu.pipeline_mode<synchronous>, transform_indices = @transform_6, window_bounds = array<i64: 4, 64>}, {transform_indices = @transform_7, window_bounds = array<i64: 5, 64, 448>}, {transform_indices = @transform_8, window_bounds = array<i64: 1, 5, 64, 64>}]} {
    %c0 = arith.constant 0 : index
    %c0_0 = arith.constant 0 : index
    %c0_1 = arith.constant 0 : index
    %0 = vector.load %arg3[%c0, %c0_0, %c0_1] : memref<1x256x16xbf16, #tpu.memory_space<vmem>>, vector<1x256x16xbf16>
    %1 = vector.shape_cast %0 : vector<1x256x16xbf16> to vector<256x16xbf16>
    %c0_2 = arith.constant 0 : index
    %c0_3 = arith.constant 0 : index
    %2 = vector.load %arg6[%c0_2, %c0_3] : memref<16x64xbf16, #tpu.memory_space<vmem>>, vector<16x64xbf16>
    %cst = arith.constant dense<0.000000e+00> : vector<256x64xf32>
    %3 = tpu.matmul %1, %2, %cst {dimension_numbers = #tpu.dot_dimension_numbers<[1], [0], [0], [1], [0, 0, 1, 1], [], []>} : vector<256x16xbf16>, vector<16x64xbf16>, vector<256x64xf32> -> vector<256x64xf32>
    %4 = arith.truncf %3 : vector<256x64xf32> to vector<256x64xbf16>
    %c0_4 = arith.constant 0 : index
    %c0_5 = arith.constant 0 : index
    %5 = vector.load %arg11[%c0_4, %c0_5] : memref<448x64xbf16, #tpu.memory_space<vmem>>, vector<256x64xbf16>
    tpu.vector_store %arg11[%c0_4, %c0_5], %4 {strides = array<i32>} : memref<448x64xbf16, #tpu.memory_space<vmem>>, vector<256x64xbf16>,
    %c0_6 = arith.constant 0 : index
    %c0_7 = arith.constant 0 : index
    %c0_8 = arith.constant 0 : index
    %6 = vector.load %arg4[%c0_6, %c0_7, %c0_8] : memref<1x128x8xbf16, #tpu.memory_space<vmem>>, vector<1x128x8xbf16>
    %7 = vector.shape_cast %6 : vector<1x128x8xbf16> to vector<128x8xbf16>
    %c0_9 = arith.constant 0 : index
    %c0_10 = arith.constant 0 : index
    %8 = vector.load %arg7[%c0_9, %c0_10] : memref<8x64xbf16, #tpu.memory_space<vmem>>, vector<8x64xbf16>
    %cst_11 = arith.constant dense<0.000000e+00> : vector<128x64xf32>
    %9 = tpu.matmul %7, %8, %cst_11 {dimension_numbers = #tpu.dot_dimension_numbers<[1], [0], [0], [1], [0, 0, 1, 1], [], []>} : vector<128x8xbf16>, vector<8x64xbf16>, vector<128x64xf32> -> vector<128x64xf32>
    %10 = arith.truncf %9 : vector<128x64xf32> to vector<128x64xbf16>
    %c256 = arith.constant 256 : index
    %c0_12 = arith.constant 0 : index
    %11 = vector.load %arg11[%c256, %c0_12] : memref<448x64xbf16, #tpu.memory_space<vmem>>, vector<128x64xbf16>
    tpu.vector_store %arg11[%c256, %c0_12], %10 {strides = array<i32>} : memref<448x64xbf16, #tpu.memory_space<vmem>>, vector<128x64xbf16>,
    %c0_13 = arith.constant 0 : index
    %c0_14 = arith.constant 0 : index
    %c0_15 = arith.constant 0 : index
    %12 = vector.load %arg5[%c0_13, %c0_14, %c0_15] : memref<1x64x4xbf16, #tpu.memory_space<vmem>>, vector<1x64x4xbf16>
    %13 = vector.shape_cast %12 : vector<1x64x4xbf16> to vector<64x4xbf16>
    %c0_16 = arith.constant 0 : index
    %c0_17 = arith.constant 0 : index
    %14 = vector.load %arg8[%c0_16, %c0_17] : memref<4x64xbf16, #tpu.memory_space<vmem>>, vector<4x64xbf16>
    %cst_18 = arith.constant dense<0.000000e+00> : vector<64x64xf32>
    %15 = tpu.matmul %13, %14, %cst_18 {dimension_numbers = #tpu.dot_dimension_numbers<[1], [0], [0], [1], [0, 0, 1, 1], [], []>} : vector<64x4xbf16>, vector<4x64xbf16>, vector<64x64xf32> -> vector<64x64xf32>
    %16 = arith.truncf %15 : vector<64x64xf32> to vector<64x64xbf16>
    %c384 = arith.constant 384 : index
    %c0_19 = arith.constant 0 : index
    %17 = vector.load %arg11[%c384, %c0_19] : memref<448x64xbf16, #tpu.memory_space<vmem>>, vector<64x64xbf16>
    tpu.vector_store %arg11[%c384, %c0_19], %16 {strides = array<i32>} : memref<448x64xbf16, #tpu.memory_space<vmem>>, vector<64x64xbf16>,
    %c0_20 = arith.constant 0 : index
    %c0_21 = arith.constant 0 : index
    %c0_22 = arith.constant 0 : index
    %18 = vector.load %arg9[%c0_20, %c0_21, %c0_22] : memref<5x64x448xbf16, #tpu.memory_space<vmem>>, vector<1x64x448xbf16>
    %19 = vector.shape_cast %18 : vector<1x64x448xbf16> to vector<64x448xbf16>
    %c0_23 = arith.constant 0 : index
    %c0_24 = arith.constant 0 : index
    %20 = vector.load %arg11[%c0_23, %c0_24] : memref<448x64xbf16, #tpu.memory_space<vmem>>, vector<448x64xbf16>
    %cst_25 = arith.constant dense<0.000000e+00> : vector<64x64xf32>
    %21 = tpu.matmul %19, %20, %cst_25 {dimension_numbers = #tpu.dot_dimension_numbers<[1], [0], [0], [1], [0, 0, 1, 1], [], []>} : vector<64x448xbf16>, vector<448x64xbf16>, vector<64x64xf32> -> vector<64x64xf32>
    %c0_26 = arith.constant 0 : index
    %22 = memref.load %arg2[%c0_26] : memref<5xf32, #tpu.memory_space<smem>>
    %23 = vector.broadcast %22 : f32 to vector<64x64xf32>
    %24 = arith.addf %21, %23 : vector<64x64xf32>
    %c0_27 = arith.constant 0 : index
    %c0_28 = arith.constant 0 : index
    %c0_29 = arith.constant 0 : index
    %c0_30 = arith.constant 0 : index
    %25 = vector.load %arg10[%c0_27, %c0_28, %c0_29, %c0_30] : memref<1x5x64x64xf32, #tpu.memory_space<vmem>>, vector<1x1x64x64xf32>
    %26 = vector.shape_cast %25 : vector<1x1x64x64xf32> to vector<64x64xf32>
    %27 = vector.shape_cast %24 : vector<64x64xf32> to vector<1x1x64x64xf32>
    tpu.vector_store %arg10[%c0_27, %c0_28, %c0_29, %c0_30], %27 {strides = array<i32>} : memref<1x5x64x64xf32, #tpu.memory_space<vmem>>, vector<1x1x64x64xf32>,
    %c1 = arith.constant 1 : index
    %c0_31 = arith.constant 0 : index
    %c0_32 = arith.constant 0 : index
    %28 = vector.load %arg9[%c1, %c0_31, %c0_32] : memref<5x64x448xbf16, #tpu.memory_space<vmem>>, vector<1x64x448xbf16>
    %29 = vector.shape_cast %28 : vector<1x64x448xbf16> to vector<64x448xbf16>
    %c0_33 = arith.constant 0 : index
    %c0_34 = arith.constant 0 : index
    %30 = vector.load %arg11[%c0_33, %c0_34] : memref<448x64xbf16, #tpu.memory_space<vmem>>, vector<448x64xbf16>
    %cst_35 = arith.constant dense<0.000000e+00> : vector<64x64xf32>
    %31 = tpu.matmul %29, %30, %cst_35 {dimension_numbers = #tpu.dot_dimension_numbers<[1], [0], [0], [1], [0, 0, 1, 1], [], []>} : vector<64x448xbf16>, vector<448x64xbf16>, vector<64x64xf32> -> vector<64x64xf32>
    %c1_36 = arith.constant 1 : index
    %32 = memref.load %arg2[%c1_36] : memref<5xf32, #tpu.memory_space<smem>>
    %33 = vector.broadcast %32 : f32 to vector<64x64xf32>
    %34 = arith.addf %31, %33 : vector<64x64xf32>
    %c0_37 = arith.constant 0 : index
    %c1_38 = arith.constant 1 : index
    %c0_39 = arith.constant 0 : index
    %c0_40 = arith.constant 0 : index
    %35 = vector.load %arg10[%c0_37, %c1_38, %c0_39, %c0_40] : memref<1x5x64x64xf32, #tpu.memory_space<vmem>>, vector<1x1x64x64xf32>
    %36 = vector.shape_cast %35 : vector<1x1x64x64xf32> to vector<64x64xf32>
    %37 = vector.shape_cast %34 : vector<64x64xf32> to vector<1x1x64x64xf32>
    tpu.vector_store %arg10[%c0_37, %c1_38, %c0_39, %c0_40], %37 {strides = array<i32>} : memref<1x5x64x64xf32, #tpu.memory_space<vmem>>, vector<1x1x64x64xf32>,
    %c2 = arith.constant 2 : index
    %c0_41 = arith.constant 0 : index
    %c0_42 = arith.constant 0 : index
    %38 = vector.load %arg9[%c2, %c0_41, %c0_42] : memref<5x64x448xbf16, #tpu.memory_space<vmem>>, vector<1x64x448xbf16>
    %39 = vector.shape_cast %38 : vector<1x64x448xbf16> to vector<64x448xbf16>
    %c0_43 = arith.constant 0 : index
    %c0_44 = arith.constant 0 : index
    %40 = vector.load %arg11[%c0_43, %c0_44] : memref<448x64xbf16, #tpu.memory_space<vmem>>, vector<448x64xbf16>
    %cst_45 = arith.constant dense<0.000000e+00> : vector<64x64xf32>
    %41 = tpu.matmul %39, %40, %cst_45 {dimension_numbers = #tpu.dot_dimension_numbers<[1], [0], [0], [1], [0, 0, 1, 1], [], []>} : vector<64x448xbf16>, vector<448x64xbf16>, vector<64x64xf32> -> vector<64x64xf32>
    %c2_46 = arith.constant 2 : index
    %42 = memref.load %arg2[%c2_46] : memref<5xf32, #tpu.memory_space<smem>>
    %43 = vector.broadcast %42 : f32 to vector<64x64xf32>
    %44 = arith.addf %41, %43 : vector<64x64xf32>
    %c0_47 = arith.constant 0 : index
    %c2_48 = arith.constant 2 : index
    %c0_49 = arith.constant 0 : index
    %c0_50 = arith.constant 0 : index
    %45 = vector.load %arg10[%c0_47, %c2_48, %c0_49, %c0_50] : memref<1x5x64x64xf32, #tpu.memory_space<vmem>>, vector<1x1x64x64xf32>
    %46 = vector.shape_cast %45 : vector<1x1x64x64xf32> to vector<64x64xf32>
    %47 = vector.shape_cast %44 : vector<64x64xf32> to vector<1x1x64x64xf32>
    tpu.vector_store %arg10[%c0_47, %c2_48, %c0_49, %c0_50], %47 {strides = array<i32>} : memref<1x5x64x64xf32, #tpu.memory_space<vmem>>, vector<1x1x64x64xf32>,
    %c3 = arith.constant 3 : index
    %c0_51 = arith.constant 0 : index
    %c0_52 = arith.constant 0 : index
    %48 = vector.load %arg9[%c3, %c0_51, %c0_52] : memref<5x64x448xbf16, #tpu.memory_space<vmem>>, vector<1x64x448xbf16>
    %49 = vector.shape_cast %48 : vector<1x64x448xbf16> to vector<64x448xbf16>
    %c0_53 = arith.constant 0 : index
    %c0_54 = arith.constant 0 : index
    %50 = vector.load %arg11[%c0_53, %c0_54] : memref<448x64xbf16, #tpu.memory_space<vmem>>, vector<448x64xbf16>
    %cst_55 = arith.constant dense<0.000000e+00> : vector<64x64xf32>
    %51 = tpu.matmul %49, %50, %cst_55 {dimension_numbers = #tpu.dot_dimension_numbers<[1], [0], [0], [1], [0, 0, 1, 1], [], []>} : vector<64x448xbf16>, vector<448x64xbf16>, vector<64x64xf32> -> vector<64x64xf32>
    %c3_56 = arith.constant 3 : index
    %52 = memref.load %arg2[%c3_56] : memref<5xf32, #tpu.memory_space<smem>>
    %53 = vector.broadcast %52 : f32 to vector<64x64xf32>
    %54 = arith.addf %51, %53 : vector<64x64xf32>
    %c0_57 = arith.constant 0 : index
    %c3_58 = arith.constant 3 : index
    %c0_59 = arith.constant 0 : index
    %c0_60 = arith.constant 0 : index
    %55 = vector.load %arg10[%c0_57, %c3_58, %c0_59, %c0_60] : memref<1x5x64x64xf32, #tpu.memory_space<vmem>>, vector<1x1x64x64xf32>
    %56 = vector.shape_cast %55 : vector<1x1x64x64xf32> to vector<64x64xf32>
    %57 = vector.shape_cast %54 : vector<64x64xf32> to vector<1x1x64x64xf32>
    tpu.vector_store %arg10[%c0_57, %c3_58, %c0_59, %c0_60], %57 {strides = array<i32>} : memref<1x5x64x64xf32, #tpu.memory_space<vmem>>, vector<1x1x64x64xf32>,
    %c4 = arith.constant 4 : index
    %c0_61 = arith.constant 0 : index
    %c0_62 = arith.constant 0 : index
    %58 = vector.load %arg9[%c4, %c0_61, %c0_62] : memref<5x64x448xbf16, #tpu.memory_space<vmem>>, vector<1x64x448xbf16>
    %59 = vector.shape_cast %58 : vector<1x64x448xbf16> to vector<64x448xbf16>
    %c0_63 = arith.constant 0 : index
    %c0_64 = arith.constant 0 : index
    %60 = vector.load %arg11[%c0_63, %c0_64] : memref<448x64xbf16, #tpu.memory_space<vmem>>, vector<448x64xbf16>
    %cst_65 = arith.constant dense<0.000000e+00> : vector<64x64xf32>
    %61 = tpu.matmul %59, %60, %cst_65 {dimension_numbers = #tpu.dot_dimension_numbers<[1], [0], [0], [1], [0, 0, 1, 1], [], []>} : vector<64x448xbf16>, vector<448x64xbf16>, vector<64x64xf32> -> vector<64x64xf32>
    %c4_66 = arith.constant 4 : index
    %62 = memref.load %arg2[%c4_66] : memref<5xf32, #tpu.memory_space<smem>>
    %63 = vector.broadcast %62 : f32 to vector<64x64xf32>
    %64 = arith.addf %61, %63 : vector<64x64xf32>
    %c0_67 = arith.constant 0 : index
    %c4_68 = arith.constant 4 : index
    %c0_69 = arith.constant 0 : index
    %c0_70 = arith.constant 0 : index
    %65 = vector.load %arg10[%c0_67, %c4_68, %c0_69, %c0_70] : memref<1x5x64x64xf32, #tpu.memory_space<vmem>>, vector<1x1x64x64xf32>
    %66 = vector.shape_cast %65 : vector<1x1x64x64xf32> to vector<64x64xf32>
    %67 = vector.shape_cast %64 : vector<64x64xf32> to vector<1x1x64x64xf32>
    tpu.vector_store %arg10[%c0_67, %c4_68, %c0_69, %c0_70], %67 {strides = array<i32>} : memref<1x5x64x64xf32, #tpu.memory_space<vmem>>, vector<1x1x64x64xf32>,
    return
  }
  func.func @transform_0(%arg0: i32, %arg1: i32) -> i32 {
    %c0_i32 = arith.constant 0 : i32
    %c0_i32_0 = arith.constant 0 : i32
    return %c0_i32 : i32
  }
  func.func @transform_1(%arg0: i32, %arg1: i32) -> (i32, i32, i32) {
    %c0_i32 = arith.constant 0 : i32
    %c0_i32_0 = arith.constant 0 : i32
    %c0_i32_1 = arith.constant 0 : i32
    return %arg0, %c0_i32, %c0_i32_0 : i32, i32, i32
  }
  func.func @transform_2(%arg0: i32, %arg1: i32) -> (i32, i32, i32) {
    %c0_i32 = arith.constant 0 : i32
    %c0_i32_0 = arith.constant 0 : i32
    %c0_i32_1 = arith.constant 0 : i32
    return %arg0, %c0_i32, %c0_i32_0 : i32, i32, i32
  }
  func.func @transform_3(%arg0: i32, %arg1: i32) -> (i32, i32, i32) {
    %c0_i32 = arith.constant 0 : i32
    %c0_i32_0 = arith.constant 0 : i32
    %c0_i32_1 = arith.constant 0 : i32
    return %arg0, %c0_i32, %c0_i32_0 : i32, i32, i32
  }
  func.func @transform_4(%arg0: i32, %arg1: i32) -> (i32, i32) {
    %c0_i32 = arith.constant 0 : i32
    %c0_i32_0 = arith.constant 0 : i32
    %c0_i32_1 = arith.constant 0 : i32
    return %c0_i32, %c0_i32_0 : i32, i32
  }
  func.func @transform_5(%arg0: i32, %arg1: i32) -> (i32, i32) {
    %c0_i32 = arith.constant 0 : i32
    %c0_i32_0 = arith.constant 0 : i32
    %c0_i32_1 = arith.constant 0 : i32
    return %c0_i32, %c0_i32_0 : i32, i32
  }
  func.func @transform_6(%arg0: i32, %arg1: i32) -> (i32, i32) {
    %c0_i32 = arith.constant 0 : i32
    %c0_i32_0 = arith.constant 0 : i32
    %c0_i32_1 = arith.constant 0 : i32
    return %c0_i32, %c0_i32_0 : i32, i32
  }
  func.func @transform_7(%arg0: i32, %arg1: i32) -> (i32, i32, i32) {
    %c0_i32 = arith.constant 0 : i32
    %c0_i32_0 = arith.constant 0 : i32
    %c0_i32_1 = arith.constant 0 : i32
    return %c0_i32, %arg1, %c0_i32_0 : i32, i32, i32
  }
  func.func @transform_8(%arg0: i32, %arg1: i32) -> (i32, i32, i32, i32) {
    %c0_i32 = arith.constant 0 : i32
    %c0_i32_0 = arith.constant 0 : i32
    %c0_i32_1 = arith.constant 0 : i32
    return %arg0, %c0_i32, %arg1, %c0_i32_0 : i32, i32, i32, i32
  }
}

</mosaic_0001>

<llo_original>
// kernel: tpu_custom_call.1
$region0: #{tpu_custom_call.1}
  #allocation0 [shape = 'u32[]', space=smem, size = 0x4, offset = 0x4, fixed_abs, tag = 'smem constant byte address 0x4 - core index']
  #allocation1 [shape = 'u32[72,128]{1,0:T(1,128)}', space=vmem, size = 0x9000, scoped, tag = 'internal scratch']
  #allocation2 [shape = 'bf16[448,64]{1,0:T(8,128)(2,1)}', space=vmem, size = 0x1c000, scoped, tag = 'scratch operand']
  %s0 = inlined_call_operand.vmem [shape: f32[5], index: 0, kind: input, shape index: {}]
  %s1 = inlined_call_operand.vmem [shape: bf16[2,256,16], index: 1, kind: input, shape index: {}]
  %s2 = inlined_call_operand.vmem [shape: bf16[2,128,8], index: 2, kind: input, shape index: {}]
  %s3 = inlined_call_operand.vmem [shape: bf16[2,64,4], index: 3, kind: input, shape index: {}]
  %s4 = inlined_call_operand.vmem [shape: bf16[16,64], index: 4, kind: input, shape index: {}]
  %s5 = inlined_call_operand.vmem [shape: bf16[8,64], index: 5, kind: input, shape index: {}]
  %s6 = inlined_call_operand.vmem [shape: bf16[4,64], index: 6, kind: input, shape index: {}]
  %s7 = inlined_call_operand.hbm [shape: bf16[5,64,448], index: 7, kind: input, shape index: {}]
  %s8 = inlined_call_operand.hbm [shape: f32[2,5,64,64], index: 8, kind: output, shape index: {}]
  %s9 = sld [smem:[#allocation0]]
  $region73: #{tpu_custom_call.1} parent=0
    _
  %s11 = ssub.s32 1, %s9
  %s12 = scalar_select 0, %s11, %s9
  $region1: #{tpu_custom_call.1} parent=0
    #allocation3 [shape = 'u8[512]{0}', space=smem, size = 0x200, scoped, tag = 'input window, operand 0, single buffered']
    #allocation4 [shape = 's32[2]{0}', space=sflag, size = 0x8, scoped, tag = 'scoped memory for tpu_custom_call.1']
    #allocation5 [shape = 's32[2]{0}', space=sflag, size = 0x8, scoped, tag = 'scoped memory for tpu_custom_call.1']
    #allocation6 [shape = 's32[2]{0}', space=sflag, size = 0x8, scoped, tag = 'scoped memory for tpu_custom_call.1']
    #allocation7 [shape = 'u8[327680]{0}', space=vmem, size = 0x50000, scoped, tag = 'input window, operand 7, single buffered']
    #allocation8 [shape = 'u8[327680]{0}', space=vmem, size = 0x50000, scoped, tag = 'output window, operand 0']
    %13 = vsyncpa [#allocation6], 0
    %14 = vsyncpa [#allocation4], 0
    %15 = vsyncpa [#allocation5], 0
    %s16 = scalar_lea.sflag [#allocation5], 1
    %17 = vsyncpa %s16, 0
    loop: start=0, step=1, limit=4
    $region2: #{tpu_custom_call.1} parent=1 // loop_pre_header
      _
    $region3: #{tpu_custom_call.1} parent=1 // loop_header
      %s19 = sphi 0, %s23
      %p20 = scmp.ge.s32.totalorder %s19, 4
      %s26 = sphi 0, %s38
      %s27 = sphi 0, %s34
      %s28 = sphi 0, %s26
      %s29 = sphi 0, %s27
      %s30 = sphi 0, %s28
      %s31 = sphi 0, %s29
      %s39 = sphi 0, %s39
      %s41 = sphi 0, %s39
      %s42 = sphi 0, %s41
      %s56 = sphi 0, %s42
      %s62 = sphi 0, %s64
      %s65 = sphi 0, %s62
      %s66 = sphi 0, %s65
      %s82 = sphi 0, %s66
      %s88 = sphi 0, %s90
      %s91 = sphi 0, %s88
      %s92 = sphi 0, %s91
      %s108 = sphi 0, %s92
      %s114 = sphi 0, %s116
      %s117 = sphi 0, %s114
      %s118 = sphi 0, %s117
      %s134 = sphi 0, %s118
      %s138 = sphi 0, %s138
      %s140 = sphi 0, %s138
      %s141 = sphi 0, %s140
      %s155 = sphi 0, %s141
      %s159 = sphi 0, %s159
      %s161 = sphi 0, %s159
      %s162 = sphi 0, %s161
      %s176 = sphi 0, %s162
      %s180 = sphi 0, %s180
      %s182 = sphi 0, %s180
      %s183 = sphi 0, %s182
      %s197 = sphi 0, %s183
      %s203 = sphi 0, %s205
      %s206 = sphi 0, %s203
      %s207 = sphi 0, %s206
      %s223 = sphi 0, %s207
      %s231 = sphi 0, %s233
      %s234 = sphi 0, %s231
      %s235 = sphi 0, %s234
      %s251 = sphi 0, %s235
    $region4: #{tpu_custom_call.1} parent=1 // loop_header_branch
      %22 = sbr.rel (%p20) target = $region8
    $region5: #{tpu_custom_call.1} parent=1 // loop_body
      %s24 = ssub.s32 %s19, 1
      %s25 = ssub.s32 %s19, 2
      %s32 = sadd.s32 1, %s27
      %p33 = scmp.ge.s32.totalorder %s32, 1
      %s34 = scalar_select %p33, 0, %s32
      %s35 = sadd.s32 1, %s26
      %s36 = scalar_select %p33, %s35, %s26
      %p37 = scmp.ge.s32.totalorder %s36, 2
      %s38 = scalar_select %p37, 0, %s36
      %s40 = sadd.s32 %s39, 1
      %p43 = scmp.eq.s32.totalorder %s19, 1
      %p44 = scmp.ne.s32.totalorder %s39, %s41
      %p45 = scmp.eq.s32.totalorder %s19, 0
      %p46 = por %p44, %p45
      %p47 = scmp.ne.s32.totalorder %s39, %s41
      %p48 = scmp.eq.s32.totalorder %s24, 1
      %p49 = por %p47, %p48
      %p50 = scmp.ne.s32.totalorder %s41, %s42
      %p51 = scmp.eq.s32.totalorder %s24, 0
      %p52 = por %p50, %p51
      %p53 = scmp.ne.s32.totalorder %s41, %s42
      %p54 = scmp.eq.s32.totalorder %s25, 1
      %p55 = por %p53, %p54
      %p57 = scmp.ne.s32.totalorder %s42, %s56
      %p58 = scmp.eq.s32.totalorder %s25, 0
      %p59 = por %p57, %p58
      %s60 = ssub.s32 %s26, %s38
      %p61 = scmp.eq.s32.totalorder %s60, 0
      %s63 = sadd.s32 %s62, 1
      %s64 = scalar_select %p61, %s62, %s63
      %p67 = pneg %p61
      %p68 = scmp.eq.s32.totalorder %s19, 1
      %p69 = por %p67, %p68
      %p70 = scmp.ne.s32.totalorder %s62, %s65
      %p71 = scmp.eq.s32.totalorder %s19, 0
      %p72 = por %p70, %p71
      %p73 = scmp.ne.s32.totalorder %s62, %s65
      %p74 = scmp.eq.s32.totalorder %s24, 1
      %p75 = por %p73, %p74
      %p76 = scmp.ne.s32.totalorder %s65, %s66
      %p77 = scmp.eq.s32.totalorder %s24, 0
      %p78 = por %p76, %p77
      %p79 = scmp.ne.s32.totalorder %s65, %s66
      %p80 = scmp.eq.s32.totalorder %s25, 1
      %p81 = por %p79, %p80
      %p83 = scmp.ne.s32.totalorder %s66, %s82
      %p84 = scmp.eq.s32.totalorder %s25, 0
      %p85 = por %p83, %p84
      %s86 = ssub.s32 %s26, %s38
      %p87 = scmp.eq.s32.totalorder %s86, 0
      %s89 = sadd.s32 %s88, 1
      %s90 = scalar_select %p87, %s88, %s89
      %p93 = pneg %p87
      %p94 = scmp.eq.s32.totalorder %s19, 1
      %p95 = por %p93, %p94
      %p96 = scmp.ne.s32.totalorder %s88, %s91
      %p97 = scmp.eq.s32.totalorder %s19, 0
      %p98 = por %p96, %p97
      %p99 = scmp.ne.s32.totalorder %s88, %s91
      %p100 = scmp.eq.s32.totalorder %s24, 1
      %p101 = por %p99, %p100
      %p102 = scmp.ne.s32.totalorder %s91, %s92
      %p103 = scmp.eq.s32.totalorder %s24, 0
      %p104 = por %p102, %p103
      %p105 = scmp.ne.s32.totalorder %s91, %s92
      %p106 = scmp.eq.s32.totalorder %s25, 1
      %p107 = por %p105, %p106
      %p109 = scmp.ne.s32.totalorder %s92, %s108
      %p110 = scmp.eq.s32.totalorder %s25, 0
      %p111 = por %p109, %p110
      %s112 = ssub.s32 %s26, %s38
      %p113 = scmp.eq.s32.totalorder %s112, 0
      %s115 = sadd.s32 %s114, 1
      %s116 = scalar_select %p113, %s114, %s115
      %p119 = pneg %p113
      %p120 = scmp.eq.s32.totalorder %s19, 1
      %p121 = por %p119, %p120
      %p122 = scmp.ne.s32.totalorder %s114, %s117
      %p123 = scmp.eq.s32.totalorder %s19, 0
      %p124 = por %p122, %p123
      %p125 = scmp.ne.s32.totalorder %s114, %s117
      %p126 = scmp.eq.s32.totalorder %s24, 1
      %p127 = por %p125, %p126
      %p128 = scmp.ne.s32.totalorder %s117, %s118
      %p129 = scmp.eq.s32.totalorder %s24, 0
      %p130 = por %p128, %p129
      %p131 = scmp.ne.s32.totalorder %s117, %s118
      %p132 = scmp.eq.s32.totalorder %s25, 1
      %p133 = por %p131, %p132
      %p135 = scmp.ne.s32.totalorder %s118, %s134
      %p136 = scmp.eq.s32.totalorder %s25, 0
      %p137 = por %p135, %p136
      %s139 = sadd.s32 %s138, 1
      %p142 = scmp.eq.s32.totalorder %s19, 1
      %p143 = scmp.ne.s32.totalorder %s138, %s140
      %p144 = scmp.eq.s32.totalorder %s19, 0
      %p145 = por %p143, %p144
      %p146 = scmp.ne.s32.totalorder %s138, %s140
      %p147 = scmp.eq.s32.totalorder %s24, 1
      %p148 = por %p146, %p147
      %p149 = scmp.ne.s32.totalorder %s140, %s141
      %p150 = scmp.eq.s32.totalorder %s24, 0
      %p151 = por %p149, %p150
      %p152 = scmp.ne.s32.totalorder %s140, %s141
      %p153 = scmp.eq.s32.totalorder %s25, 1
      %p154 = por %p152, %p153
      %p156 = scmp.ne.s32.totalorder %s141, %s155
      %p157 = scmp.eq.s32.totalorder %s25, 0
      %p158 = por %p156, %p157
      %s160 = sadd.s32 %s159, 1
      %p163 = scmp.eq.s32.totalorder %s19, 1
      %p164 = scmp.ne.s32.totalorder %s159, %s161
      %p165 = scmp.eq.s32.totalorder %s19, 0
      %p166 = por %p164, %p165
      %p167 = scmp.ne.s32.totalorder %s159, %s161
      %p168 = scmp.eq.s32.totalorder %s24, 1
      %p169 = por %p167, %p168
      %p170 = scmp.ne.s32.totalorder %s161, %s162
      %p171 = scmp.eq.s32.totalorder %s24, 0
      %p172 = por %p170, %p171
      %p173 = scmp.ne.s32.totalorder %s161, %s162
      %p174 = scmp.eq.s32.totalorder %s25, 1
      %p175 = por %p173, %p174
      %p177 = scmp.ne.s32.totalorder %s162, %s176
      %p178 = scmp.eq.s32.totalorder %s25, 0
      %p179 = por %p177, %p178
      %s181 = sadd.s32 %s180, 1
      %p184 = scmp.eq.s32.totalorder %s19, 1
      %p185 = scmp.ne.s32.totalorder %s180, %s182
      %p186 = scmp.eq.s32.totalorder %s19, 0
      %p187 = por %p185, %p186
      %p188 = scmp.ne.s32.totalorder %s180, %s182
      %p189 = scmp.eq.s32.totalorder %s24, 1
      %p190 = por %p188, %p189
      %p191 = scmp.ne.s32.totalorder %s182, %s183
      %p192 = scmp.eq.s32.totalorder %s24, 0
      %p193 = por %p191, %p192
      %p194 = scmp.ne.s32.totalorder %s182, %s183
      %p195 = scmp.eq.s32.totalorder %s25, 1
      %p196 = por %p194, %p195
      %p198 = scmp.ne.s32.totalorder %s183, %s197
      %p199 = scmp.eq.s32.totalorder %s25, 0
      %p200 = por %p198, %p199
      %s201 = ssub.s32 %s27, %s34
      %p202 = scmp.eq.s32.totalorder %s201, 0
      %s204 = sadd.s32 %s203, 1
      %s205 = scalar_select %p202, %s203, %s204
      %p208 = pneg %p202
      %p209 = scmp.eq.s32.totalorder %s19, 1
      %p210 = por %p208, %p209
      %p211 = scmp.ne.s32.totalorder %s203, %s206
      %p212 = scmp.eq.s32.totalorder %s19, 0
      %p213 = por %p211, %p212
      %p214 = scmp.ne.s32.totalorder %s203, %s206
      %p215 = scmp.eq.s32.totalorder %s24, 1
      %p216 = por %p214, %p215
      %p217 = scmp.ne.s32.totalorder %s206, %s207
      %p218 = scmp.eq.s32.totalorder %s24, 0
      %p219 = por %p217, %p218
      %p220 = scmp.ne.s32.totalorder %s206, %s207
      %p221 = scmp.eq.s32.totalorder %s25, 1
      %p222 = por %p220, %p221
      %p224 = scmp.ne.s32.totalorder %s207, %s223
      %p225 = scmp.eq.s32.totalorder %s25, 0
      %p226 = por %p224, %p225
      %s227 = ssub.s32 %s26, %s38
      %s228 = ssub.s32 %s27, %s34
      %s229 = sor.u32 %s227, %s228
      %p230 = scmp.eq.s32.totalorder %s229, 0
      %s232 = sadd.s32 %s231, 1
      %s233 = scalar_select %p230, %s231, %s232
      %p236 = pneg %p230
      %p237 = scmp.eq.s32.totalorder %s19, 1
      %p238 = por %p236, %p237
      %p239 = scmp.ne.s32.totalorder %s231, %s234
      %p240 = scmp.eq.s32.totalorder %s19, 0
      %p241 = por %p239, %p240
      %p242 = scmp.ne.s32.totalorder %s231, %s234
      %p243 = scmp.eq.s32.totalorder %s24, 1
      %p244 = por %p242, %p243
      %p245 = scmp.ne.s32.totalorder %s234, %s235
      %p246 = scmp.eq.s32.totalorder %s24, 0
      %p247 = por %p245, %p246
      %p248 = scmp.ne.s32.totalorder %s234, %s235
      %p249 = scmp.eq.s32.totalorder %s25, 1
      %p250 = por %p248, %p249
      %p252 = scmp.ne.s32.totalorder %s235, %s251
      %p253 = scmp.eq.s32.totalorder %s25, 0
      %p254 = por %p252, %p253
      %p255 = scmp.le.s32.totalorder 1, %s19
      %p256 = scmp.lt.s32.totalorder %s19, 3
      %p257 = pnand %p255, %p256
      %p258 = pneg %p257
      // Predicated region
      $region9: #{tpu_custom_call.1} parent=5 // pred_check
        _
      $region10: #{tpu_custom_call.1} parent=5 // pred_check_branch
        %260 = sbr.rel (%p257) target = $region12
      $region11: #{tpu_custom_call.1} parent=5 // pred_region
        %s261 = ssub.s32 %s19, 1
        // Predicated region
        $region13: #{tpu_custom_call.1} parent=11 // pred_check
          %p262 = pneg %p52
        $region14: #{tpu_custom_call.1} parent=11 // pred_check_branch
          %264 = sbr.rel (%p262) target = $region16
        $region15: #{tpu_custom_call.1} parent=11 // pred_region
          %266 = vsyncadd [#allocation6], 0
          %s268 = sshll.u32 %s0, 4
          %s269 = int_to_ptr.vmem [resolvable:$true] %s268
          %271 = dma.vmem_to_smem %s269, 16, [#allocation3], [#allocation6]
        $region16: #{tpu_custom_call.1} parent=11 // pred_fallthru
          _
        // Predicated region
        $region17: #{tpu_custom_call.1} parent=11 // pred_check
          %p272 = pneg %p151
        $region18: #{tpu_custom_call.1} parent=11 // pred_check_branch
          %274 = sbr.rel (%p272) target = $region20
        $region19: #{tpu_custom_call.1} parent=11 // pred_region
          _
        $region20: #{tpu_custom_call.1} parent=11 // pred_fallthru
          _
        // Predicated region
        $region21: #{tpu_custom_call.1} parent=11 // pred_check
          %p275 = pneg %p172
        $region22: #{tpu_custom_call.1} parent=11 // pred_check_branch
          %277 = sbr.rel (%p275) target = $region24
        $region23: #{tpu_custom_call.1} parent=11 // pred_region
          _
        $region24: #{tpu_custom_call.1} parent=11 // pred_fallthru
          _
        // Predicated region
        $region25: #{tpu_custom_call.1} parent=11 // pred_check
          %p278 = pneg %p193
        $region26: #{tpu_custom_call.1} parent=11 // pred_check_branch
          %280 = sbr.rel (%p278) target = $region28
        $region27: #{tpu_custom_call.1} parent=11 // pred_region
          _
        $region28: #{tpu_custom_call.1} parent=11 // pred_fallthru
          _
        // Predicated region
        $region29: #{tpu_custom_call.1} parent=11 // pred_check
          %p281 = pneg %p219
        $region30: #{tpu_custom_call.1} parent=11 // pred_check_branch
          %283 = sbr.rel (%p281) target = $region32
        $region31: #{tpu_custom_call.1} parent=11 // pred_region
          %s284 = smul.u32 8, %s29
          %286 = vsyncadd [#allocation4], 0
          %s287 = smul.addr %s284, 4
          %s288 = smul.addr %s287, 4
          %s289 = scalar_lea.hbm %s7, %s288
          %s290 = sshll.u32 %s289, 4
          %s291 = int_to_ptr.hbm [resolvable:$true] %s290
          %s292 = sshll.u32 [#allocation7], 4
          %s293 = int_to_ptr.vmem [resolvable:$true] %s292
          %298 = dma.hbm_to_vmem [thread:$0]  %s291, 10240, %s293, [#allocation4], 256, 256, 16
        $region32: #{tpu_custom_call.1} parent=11 // pred_fallthru
          _
      $region12: #{tpu_custom_call.1} parent=5 // pred_fallthru
        _
      %p299 = scmp.lt.s32.totalorder %s19, 2
      // Predicated region
      $region33: #{tpu_custom_call.1} parent=5 // pred_check
        %p300 = pneg %p299
      $region34: #{tpu_custom_call.1} parent=5 // pred_check_branch
        %302 = sbr.rel (%p300) target = $region36
      $region35: #{tpu_custom_call.1} parent=5 // pred_region
        // Predicated region
        $region37: #{tpu_custom_call.1} parent=35 // pred_check
          %p303 = pneg %p72
        $region38: #{tpu_custom_call.1} parent=35 // pred_check_branch
          %305 = sbr.rel (%p303) target = $region40
        $region39: #{tpu_custom_call.1} parent=35 // pred_region
          %p306 = scmp.lt.s32.totalorder %s26, 1
          %s307 = scalar_select %p306, %s26, 1
          %s308 = smul.addr %s307, 32
          %s309 = smul.addr %s308, 4
          %s310 = scalar_lea.vmem %s1, %s309
        $region40: #{tpu_custom_call.1} parent=35 // pred_fallthru
          _
        // Predicated region
        $region41: #{tpu_custom_call.1} parent=35 // pred_check
          %p311 = pneg %p98
        $region42: #{tpu_custom_call.1} parent=35 // pred_check_branch
          %313 = sbr.rel (%p311) target = $region44
        $region43: #{tpu_custom_call.1} parent=35 // pred_region
          %p314 = scmp.lt.s32.totalorder %s26, 1
          %s315 = scalar_select %p314, %s26, 1
          %s316 = smul.addr %s315, 16
          %s317 = smul.addr %s316, 4
          %s318 = scalar_lea.vmem %s2, %s317
        $region44: #{tpu_custom_call.1} parent=35 // pred_fallthru
          _
        // Predicated region
        $region45: #{tpu_custom_call.1} parent=35 // pred_check
          %p319 = pneg %p124
        $region46: #{tpu_custom_call.1} parent=35 // pred_check_branch
          %321 = sbr.rel (%p319) target = $region48
        $region47: #{tpu_custom_call.1} parent=35 // pred_region
          %p322 = scmp.lt.s32.totalorder %s26, 1
          %s323 = scalar_select %p322, %s26, 1
          %s324 = smul.addr %s323, 8
          %s325 = smul.addr %s324, 4
          %s326 = scalar_lea.vmem %s3, %s325
        $region48: #{tpu_custom_call.1} parent=35 // pred_fallthru
          _
      $region36: #{tpu_custom_call.1} parent=5 // pred_fallthru
        _
      %p327 = scmp.le.s32.totalorder 1, %s19
      %p328 = scmp.lt.s32.totalorder %s19, 3
      %p329 = pnand %p327, %p328
      %p330 = pneg %p329
      // Predicated region
      $region49: #{tpu_custom_call.1} parent=5 // pred_check
        _
      $region50: #{tpu_custom_call.1} parent=5 // pred_check_branch
        %332 = sbr.rel (%p329) target = $region52
      $region51: #{tpu_custom_call.1} parent=5 // pred_region
        %s333 = ssub.s32 %s19, 1
        // Predicated region
        $region53: #{tpu_custom_call.1} parent=51 // pred_check
          %p334 = pneg %p52
        $region54: #{tpu_custom_call.1} parent=51 // pred_check_branch
          %336 = sbr.rel (%p334) target = $region56
        $region55: #{tpu_custom_call.1} parent=51 // pred_region
          %338 = dma.done [#allocation6], 16
        $region56: #{tpu_custom_call.1} parent=51 // pred_fallthru
          _
        // Predicated region
        $region57: #{tpu_custom_call.1} parent=51 // pred_check
          %p339 = pneg %p219
        $region58: #{tpu_custom_call.1} parent=51 // pred_check_branch
          %341 = sbr.rel (%p339) target = $region60
        $region59: #{tpu_custom_call.1} parent=51 // pred_region
          %343 = dma.done [#allocation4], 10240
        $region60: #{tpu_custom_call.1} parent=51 // pred_fallthru
          _
        %344 = sfence
        %p345 = pneg %p52
        %p346 = pneg %p49
        %p347 = scmp.lt.s32.totalorder %s28, 1
        %s348 = scalar_select %p347, %s28, 1
        %s349 = smul.addr %s348, 32
        %s350 = smul.addr %s349, 4
        %s351 = scalar_lea.vmem %s1, %s350
        %p352 = pneg %p78
        %p353 = pneg %p75
        %p354 = scmp.lt.s32.totalorder %s28, 1
        %s355 = scalar_select %p354, %s28, 1
        %s356 = smul.addr %s355, 16
        %s357 = smul.addr %s356, 4
        %s358 = scalar_lea.vmem %s2, %s357
        %p359 = pneg %p104
        %p360 = pneg %p101
        %p361 = scmp.lt.s32.totalorder %s28, 1
        %s362 = scalar_select %p361, %s28, 1
        %s363 = smul.addr %s362, 8
        %s364 = smul.addr %s363, 4
        %s365 = scalar_lea.vmem %s3, %s364
        %p366 = pneg %p130
        %p367 = pneg %p127
        %p368 = pneg %p151
        %p369 = pneg %p148
        %p370 = pneg %p172
        %p371 = pneg %p169
        %p372 = pneg %p193
        %p373 = pneg %p190
        %p374 = pneg %p219
        %p375 = pneg %p216
        %p376 = pneg %p247
        %p377 = pneg %p244
        %s378 = sand.u32 %s234, 1
        %s379 = scalar_lea.sflag [#allocation5], %s378
        %s380 = sand.u32 %s234, 1
        %s381 = smul.addr %s380, 320
        %s382 = scalar_lea.vmem [#allocation8], %s381
        %p383 = scmp.lt.s32.totalorder %s28, 1
        %s384 = scalar_select %p383, %s28, 1
        %s385 = smul.addr %s384, 32
        %s386 = smul.addr %s385, 4
        %s387 = scalar_lea.vmem %s1, %s386
        %p388 = scmp.lt.s32.totalorder %s28, 1
        %s389 = scalar_select %p388, %s28, 1
        %s390 = smul.addr %s389, 16
        %s391 = smul.addr %s390, 4
        %s392 = scalar_lea.vmem %s2, %s391
        %p393 = scmp.lt.s32.totalorder %s28, 1
        %s394 = scalar_select %p393, %s28, 1
        %s395 = smul.addr %s394, 8
        %s396 = smul.addr %s395, 4
        %s397 = scalar_lea.vmem %s3, %s396
        %s398 = smul.u32 8, %s29
        %s399 = smul.u32 8, %s29
        %v401 = vld [vmem:[%s387] sm:$0xf]
        %v402 = vld [vmem:[%s387 + $0x4] sm:$0xf]
        %v403 = vld [vmem:[%s387 + $0x8] sm:$0xf]
        %v404 = vld [vmem:[%s387 + $0xc] sm:$0xf]
        %v405 = vld [vmem:[%s387 + $0x10] sm:$0xf]
        %v406 = vld [vmem:[%s387 + $0x14] sm:$0xf]
        %v407 = vld [vmem:[%s387 + $0x18] sm:$0xf]
        %v408 = vld [vmem:[%s387 + $0x1c] sm:$0xf]
        %v409 = vld [vmem:[%s387 + $0x20] sm:$0xf]
        %v410 = vld [vmem:[%s387 + $0x24] sm:$0xf]
        %v411 = vld [vmem:[%s387 + $0x28] sm:$0xf]
        %v412 = vld [vmem:[%s387 + $0x2c] sm:$0xf]
        %v413 = vld [vmem:[%s387 + $0x30] sm:$0xf]
        %v414 = vld [vmem:[%s387 + $0x34] sm:$0xf]
        %v415 = vld [vmem:[%s387 + $0x38] sm:$0xf]
        %v416 = vld [vmem:[%s387 + $0x3c] sm:$0xf]
        %v417 = vld [vmem:[%s387 + $0x40] sm:$0xf]
        %v418 = vld [vmem:[%s387 + $0x44] sm:$0xf]
        %v419 = vld [vmem:[%s387 + $0x48] sm:$0xf]
        %v420 = vld [vmem:[%s387 + $0x4c] sm:$0xf]
        %v421 = vld [vmem:[%s387 + $0x50] sm:$0xf]
        %v422 = vld [vmem:[%s387 + $0x54] sm:$0xf]
        %v423 = vld [vmem:[%s387 + $0x58] sm:$0xf]
        %v424 = vld [vmem:[%s387 + $0x5c] sm:$0xf]
        %v425 = vld [vmem:[%s387 + $0x60] sm:$0xf]
        %v426 = vld [vmem:[%s387 + $0x64] sm:$0xf]
        %v427 = vld [vmem:[%s387 + $0x68] sm:$0xf]
        %v428 = vld [vmem:[%s387 + $0x6c] sm:$0xf]
        %v429 = vld [vmem:[%s387 + $0x70] sm:$0xf]
        %v430 = vld [vmem:[%s387 + $0x74] sm:$0xf]
        %v431 = vld [vmem:[%s387 + $0x78] sm:$0xf]
        %v432 = vld [vmem:[%s387 + $0x7c] sm:$0xf]
        %v433 = vld [vmem:[%s4] sm:$0xf]
        %v434 = vld [vmem:[%s4 + $0x4] sm:$0xf]
        %v467 = vunpack.c.l.b16 %v401
        %v468 = vunpack.c.l.b16 %v402
        %v469 = vunpack.c.l.b16 %v403
        %v470 = vunpack.c.l.b16 %v404
        %v471 = vunpack.c.l.b16 %v405
        %v472 = vunpack.c.l.b16 %v406
        %v473 = vunpack.c.l.b16 %v407
        %v474 = vunpack.c.l.b16 %v408
        %v475 = vunpack.c.l.b16 %v409
        %v476 = vunpack.c.l.b16 %v410
        %v477 = vunpack.c.l.b16 %v411
        %v478 = vunpack.c.l.b16 %v412
        %v479 = vunpack.c.l.b16 %v413
        %v480 = vunpack.c.l.b16 %v414
        %v481 = vunpack.c.l.b16 %v415
        %v482 = vunpack.c.l.b16 %v416
        %v483 = vunpack.c.l.b16 %v417
        %v484 = vunpack.c.l.b16 %v418
        %v485 = vunpack.c.l.b16 %v419
        %v486 = vunpack.c.l.b16 %v420
        %v487 = vunpack.c.l.b16 %v421
        %v488 = vunpack.c.l.b16 %v422
        %v489 = vunpack.c.l.b16 %v423
        %v490 = vunpack.c.l.b16 %v424
        %v491 = vunpack.c.l.b16 %v425
        %v492 = vunpack.c.l.b16 %v426
        %v493 = vunpack.c.l.b16 %v427
        %v494 = vunpack.c.l.b16 %v428
        %v495 = vunpack.c.l.b16 %v429
        %v496 = vunpack.c.l.b16 %v430
        %v497 = vunpack.c.l.b16 %v431
        %v498 = vunpack.c.l.b16 %v432
        %v499 = vpack.c.b16 %v468, %v467
        %v500 = vpack.c.b16 %v470, %v469
        %v501 = vpack.c.b16 %v472, %v471
        %v502 = vpack.c.b16 %v474, %v473
        %v503 = vpack.c.b16 %v476, %v475
        %v504 = vpack.c.b16 %v478, %v477
        %v505 = vpack.c.b16 %v480, %v479
        %v506 = vpack.c.b16 %v482, %v481
        %v507 = vpack.c.b16 %v484, %v483
        %v508 = vpack.c.b16 %v486, %v485
        %v509 = vpack.c.b16 %v488, %v487
        %v510 = vpack.c.b16 %v490, %v489
        %v511 = vpack.c.b16 %v492, %v491
        %v512 = vpack.c.b16 %v494, %v493
        %v513 = vpack.c.b16 %v496, %v495
        %v514 = vpack.c.b16 %v498, %v497
        %v517 = vunpack.c.l.b16 %v433
        %v518 = vunpack.c.l.b16 %v434
        %v519 = vpack.c.b16 %v518, %v517
        %vm521 = vcmask 130048
        %v523 = vsel %vm521, %v499, 0
        %v526 = vsel %vm521, %v500, 0
        %v529 = vsel %vm521, %v501, 0
        %v532 = vsel %vm521, %v502, 0
        %v535 = vsel %vm521, %v503, 0
        %v538 = vsel %vm521, %v504, 0
        %v541 = vsel %vm521, %v505, 0
        %v544 = vsel %vm521, %v506, 0
        %v547 = vsel %vm521, %v507, 0
        %v550 = vsel %vm521, %v508, 0
        %v553 = vsel %vm521, %v509, 0
        %v556 = vsel %vm521, %v510, 0
        %v559 = vsel %vm521, %v511, 0
        %v562 = vsel %vm521, %v512, 0
        %v565 = vsel %vm521, %v513, 0
        %v568 = vsel %vm521, %v514, 0
        %570 = vmatpush.bf16.msra.mxu0 0
        %571 = vmatpush.bf16.msra.mxu0 0
        %572 = vmatpush.bf16.msra.mxu0 0
        %573 = vmatpush.bf16.msra.mxu0 0
        %574 = vmatpush.bf16.msra.mxu0 0
        %575 = vmatpush.bf16.msra.mxu0 0
        %576 = vmatpush.bf16.msra.mxu0 0
        %577 = vmatpush.bf16.msra.mxu0 %v519
        %578 = vmatmul.bf16.gmra.mxu0 %v523
        %v579 = vpop.f32.mrf.mxu0
        %v580 = vadd.f32 0.0, %v579
        %v581 = vpop.f32.mrf.mxu0
        %v582 = vadd.f32 0.0, %v581
        %583 = vmatmul.bf16.gmra.mxu0 %v526
        %v584 = vpop.f32.mrf.mxu0
        %v585 = vadd.f32 0.0, %v584
        %v586 = vpop.f32.mrf.mxu0
        %v587 = vadd.f32 0.0, %v586
        %588 = vmatmul.bf16.gmra.mxu0 %v529
        %v589 = vpop.f32.mrf.mxu0
        %v590 = vadd.f32 0.0, %v589
        %v591 = vpop.f32.mrf.mxu0
        %v592 = vadd.f32 0.0, %v591
        %593 = vmatmul.bf16.gmra.mxu0 %v532
        %v594 = vpop.f32.mrf.mxu0
        %v595 = vadd.f32 0.0, %v594
        %v596 = vpop.f32.mrf.mxu0
        %v597 = vadd.f32 0.0, %v596
        %598 = vmatmul.bf16.gmra.mxu0 %v535
        %v599 = vpop.f32.mrf.mxu0
        %v600 = vadd.f32 0.0, %v599
        %v601 = vpop.f32.mrf.mxu0
        %v602 = vadd.f32 0.0, %v601
        %603 = vmatmul.bf16.gmra.mxu0 %v538
        %v604 = vpop.f32.mrf.mxu0
        %v605 = vadd.f32 0.0, %v604
        %v606 = vpop.f32.mrf.mxu0
        %v607 = vadd.f32 0.0, %v606
        %608 = vmatmul.bf16.gmra.mxu0 %v541
        %v609 = vpop.f32.mrf.mxu0
        %v610 = vadd.f32 0.0, %v609
        %v611 = vpop.f32.mrf.mxu0
        %v612 = vadd.f32 0.0, %v611
        %613 = vmatmul.bf16.gmra.mxu0 %v544
        %v614 = vpop.f32.mrf.mxu0
        %v615 = vadd.f32 0.0, %v614
        %v616 = vpop.f32.mrf.mxu0
        %v617 = vadd.f32 0.0, %v616
        %618 = vmatmul.bf16.gmra.mxu0 %v547
        %v619 = vpop.f32.mrf.mxu0
        %v620 = vadd.f32 0.0, %v619
        %v621 = vpop.f32.mrf.mxu0
        %v622 = vadd.f32 0.0, %v621
        %623 = vmatmul.bf16.gmra.mxu0 %v550
        %v624 = vpop.f32.mrf.mxu0
        %v625 = vadd.f32 0.0, %v624
        %v626 = vpop.f32.mrf.mxu0
        %v627 = vadd.f32 0.0, %v626
        %628 = vmatmul.bf16.gmra.mxu0 %v553
        %v629 = vpop.f32.mrf.mxu0
        %v630 = vadd.f32 0.0, %v629
        %v631 = vpop.f32.mrf.mxu0
        %v632 = vadd.f32 0.0, %v631
        %633 = vmatmul.bf16.gmra.mxu0 %v556
        %v634 = vpop.f32.mrf.mxu0
        %v635 = vadd.f32 0.0, %v634
        %v636 = vpop.f32.mrf.mxu0
        %v637 = vadd.f32 0.0, %v636
        %638 = vmatmul.bf16.gmra.mxu0 %v559
        %v639 = vpop.f32.mrf.mxu0
        %v640 = vadd.f32 0.0, %v639
        %v641 = vpop.f32.mrf.mxu0
        %v642 = vadd.f32 0.0, %v641
        %643 = vmatmul.bf16.gmra.mxu0 %v562
        %v644 = vpop.f32.mrf.mxu0
        %v645 = vadd.f32 0.0, %v644
        %v646 = vpop.f32.mrf.mxu0
        %v647 = vadd.f32 0.0, %v646
        %648 = vmatmul.bf16.gmra.mxu0 %v565
        %v649 = vpop.f32.mrf.mxu0
        %v650 = vadd.f32 0.0, %v649
        %v651 = vpop.f32.mrf.mxu0
        %v652 = vadd.f32 0.0, %v651
        %653 = vmatmul.bf16.gmra.mxu0 %v568
        %v654 = vpop.f32.mrf.mxu0
        %v655 = vadd.f32 0.0, %v654
        %v656 = vpop.f32.mrf.mxu0
        %v657 = vadd.f32 0.0, %v656
        %658 = vdwg.mxu0
        %v659 = vpack.c.bf16 %v580, %v580
        %v660 = vpack.c.bf16 %v582, %v582
        %v661 = vpack.c.bf16 %v585, %v585
        %v662 = vpack.c.bf16 %v587, %v587
        %v663 = vpack.c.bf16 %v590, %v590
        %v664 = vpack.c.bf16 %v592, %v592
        %v665 = vpack.c.bf16 %v595, %v595
        %v666 = vpack.c.bf16 %v597, %v597
        %v667 = vpack.c.bf16 %v600, %v600
        %v668 = vpack.c.bf16 %v602, %v602
        %v669 = vpack.c.bf16 %v605, %v605
        %v670 = vpack.c.bf16 %v607, %v607
        %v671 = vpack.c.bf16 %v610, %v610
        %v672 = vpack.c.bf16 %v612, %v612
        %v673 = vpack.c.bf16 %v615, %v615
        %v674 = vpack.c.bf16 %v617, %v617
        %v675 = vpack.c.bf16 %v620, %v620
        %v676 = vpack.c.bf16 %v622, %v622
        %v677 = vpack.c.bf16 %v625, %v625
        %v678 = vpack.c.bf16 %v627, %v627
        %v679 = vpack.c.bf16 %v630, %v630
        %v680 = vpack.c.bf16 %v632, %v632
        %v681 = vpack.c.bf16 %v635, %v635
        %v682 = vpack.c.bf16 %v637, %v637
        %v683 = vpack.c.bf16 %v640, %v640
        %v684 = vpack.c.bf16 %v642, %v642
        %v685 = vpack.c.bf16 %v645, %v645
        %v686 = vpack.c.bf16 %v647, %v647
        %v687 = vpack.c.bf16 %v650, %v650
        %v688 = vpack.c.bf16 %v652, %v652
        %v689 = vpack.c.bf16 %v655, %v655
        %v690 = vpack.c.bf16 %v657, %v657
        %vm691 = vcmask 519168
        %692 = vst.msk [vmem:[#allocation2] sm:$0xf] %vm691, %v659
        %693 = vst.msk [vmem:[#allocation2 + $0x4] sm:$0xf] %vm691, %v660
        %694 = vst.msk [vmem:[#allocation2 + $0x8] sm:$0xf] %vm691, %v661
        %695 = vst.msk [vmem:[#allocation2 + $0xc] sm:$0xf] %vm691, %v662
        %696 = vst.msk [vmem:[#allocation2 + $0x10] sm:$0xf] %vm691, %v663
        %697 = vst.msk [vmem:[#allocation2 + $0x14] sm:$0xf] %vm691, %v664
        %698 = vst.msk [vmem:[#allocation2 + $0x18] sm:$0xf] %vm691, %v665
        %699 = vst.msk [vmem:[#allocation2 + $0x1c] sm:$0xf] %vm691, %v666
        %700 = vst.msk [vmem:[#allocation2 + $0x20] sm:$0xf] %vm691, %v667
        %701 = vst.msk [vmem:[#allocation2 + $0x24] sm:$0xf] %vm691, %v668
        %702 = vst.msk [vmem:[#allocation2 + $0x28] sm:$0xf] %vm691, %v669
        %703 = vst.msk [vmem:[#allocation2 + $0x2c] sm:$0xf] %vm691, %v670
        %704 = vst.msk [vmem:[#allocation2 + $0x30] sm:$0xf] %vm691, %v671
        %705 = vst.msk [vmem:[#allocation2 + $0x34] sm:$0xf] %vm691, %v672
        %706 = vst.msk [vmem:[#allocation2 + $0x38] sm:$0xf] %vm691, %v673
        %707 = vst.msk [vmem:[#allocation2 + $0x3c] sm:$0xf] %vm691, %v674
        %708 = vst.msk [vmem:[#allocation2 + $0x40] sm:$0xf] %vm691, %v675
        %709 = vst.msk [vmem:[#allocation2 + $0x44] sm:$0xf] %vm691, %v676
        %710 = vst.msk [vmem:[#allocation2 + $0x48] sm:$0xf] %vm691, %v677
        %711 = vst.msk [vmem:[#allocation2 + $0x4c] sm:$0xf] %vm691, %v678
        %712 = vst.msk [vmem:[#allocation2 + $0x50] sm:$0xf] %vm691, %v679
        %713 = vst.msk [vmem:[#allocation2 + $0x54] sm:$0xf] %vm691, %v680
        %714 = vst.msk [vmem:[#allocation2 + $0x58] sm:$0xf] %vm691, %v681
        %715 = vst.msk [vmem:[#allocation2 + $0x5c] sm:$0xf] %vm691, %v682
        %716 = vst.msk [vmem:[#allocation2 + $0x60] sm:$0xf] %vm691, %v683
        %717 = vst.msk [vmem:[#allocation2 + $0x64] sm:$0xf] %vm691, %v684
        %718 = vst.msk [vmem:[#allocation2 + $0x68] sm:$0xf] %vm691, %v685
        %719 = vst.msk [vmem:[#allocation2 + $0x6c] sm:$0xf] %vm691, %v686
        %720 = vst.msk [vmem:[#allocation2 + $0x70] sm:$0xf] %vm691, %v687
        %721 = vst.msk [vmem:[#allocation2 + $0x74] sm:$0xf] %vm691, %v688
        %722 = vst.msk [vmem:[#allocation2 + $0x78] sm:$0xf] %vm691, %v689
        %723 = vst.msk [vmem:[#allocation2 + $0x7c] sm:$0xf] %vm691, %v690
        %v724 = vld [vmem:[%s392] sm:$0xf]
        %v725 = vld [vmem:[%s392 + $0x4] sm:$0xf]
        %v726 = vld [vmem:[%s392 + $0x8] sm:$0xf]
        %v727 = vld [vmem:[%s392 + $0xc] sm:$0xf]
        %v728 = vld [vmem:[%s392 + $0x10] sm:$0xf]
        %v729 = vld [vmem:[%s392 + $0x14] sm:$0xf]
        %v730 = vld [vmem:[%s392 + $0x18] sm:$0xf]
        %v731 = vld [vmem:[%s392 + $0x1c] sm:$0xf]
        %v732 = vld [vmem:[%s392 + $0x20] sm:$0xf]
        %v733 = vld [vmem:[%s392 + $0x24] sm:$0xf]
        %v734 = vld [vmem:[%s392 + $0x28] sm:$0xf]
        %v735 = vld [vmem:[%s392 + $0x2c] sm:$0xf]
        %v736 = vld [vmem:[%s392 + $0x30] sm:$0xf]
        %v737 = vld [vmem:[%s392 + $0x34] sm:$0xf]
        %v738 = vld [vmem:[%s392 + $0x38] sm:$0xf]
        %v739 = vld [vmem:[%s392 + $0x3c] sm:$0xf]
        %v740 = vld [vmem:[%s5] sm:$0xf]
        %v757 = vunpack.c.l.b16 %v724
        %v758 = vunpack.c.l.b16 %v725
        %v759 = vunpack.c.l.b16 %v726
        %v760 = vunpack.c.l.b16 %v727
        %v761 = vunpack.c.l.b16 %v728
        %v762 = vunpack.c.l.b16 %v729
        %v763 = vunpack.c.l.b16 %v730
        %v764 = vunpack.c.l.b16 %v731
        %v765 = vunpack.c.l.b16 %v732
        %v766 = vunpack.c.l.b16 %v733
        %v767 = vunpack.c.l.b16 %v734
        %v768 = vunpack.c.l.b16 %v735
        %v769 = vunpack.c.l.b16 %v736
        %v770 = vunpack.c.l.b16 %v737
        %v771 = vunpack.c.l.b16 %v738
        %v772 = vunpack.c.l.b16 %v739
        %v773 = vpack.c.b16 %v758, %v757
        %v774 = vpack.c.b16 %v760, %v759
        %v775 = vpack.c.b16 %v762, %v761
        %v776 = vpack.c.b16 %v764, %v763
        %v777 = vpack.c.b16 %v766, %v765
        %v778 = vpack.c.b16 %v768, %v767
        %v779 = vpack.c.b16 %v770, %v769
        %v780 = vpack.c.b16 %v772, %v771
        %vm781 = vcmask 64512
        %v783 = vsel %vm781, %v773, 0
        %v786 = vsel %vm781, %v774, 0
        %v789 = vsel %vm781, %v775, 0
        %v792 = vsel %vm781, %v776, 0
        %v795 = vsel %vm781, %v777, 0
        %v798 = vsel %vm781, %v778, 0
        %v801 = vsel %vm781, %v779, 0
        %v804 = vsel %vm781, %v780, 0
        %vm806 = vcmask 1043456
        %v808 = vsel %vm806, %v740, 0
        %810 = vmatpush.bf16.msra.mxu0 0
        %811 = vmatpush.bf16.msra.mxu0 0
        %812 = vmatpush.bf16.msra.mxu0 0
        %813 = vmatpush.bf16.msra.mxu0 0
        %814 = vmatpush.bf16.msra.mxu0 0
        %815 = vmatpush.bf16.msra.mxu0 0
        %816 = vmatpush.bf16.msra.mxu0 0
        %817 = vmatpush.bf16.msra.mxu0 %v808
        %818 = vmatmul.bf16.gmra.mxu0 %v783
        %v819 = vpop.f32.mrf.mxu0
        %v820 = vadd.f32 0.0, %v819
        %v821 = vpop.f32.mrf.mxu0
        %v822 = vadd.f32 0.0, %v821
        %823 = vmatmul.bf16.gmra.mxu0 %v786
        %v824 = vpop.f32.mrf.mxu0
        %v825 = vadd.f32 0.0, %v824
        %v826 = vpop.f32.mrf.mxu0
        %v827 = vadd.f32 0.0, %v826
        %828 = vmatmul.bf16.gmra.mxu0 %v789
        %v829 = vpop.f32.mrf.mxu0
        %v830 = vadd.f32 0.0, %v829
        %v831 = vpop.f32.mrf.mxu0
        %v832 = vadd.f32 0.0, %v831
        %833 = vmatmul.bf16.gmra.mxu0 %v792
        %v834 = vpop.f32.mrf.mxu0
        %v835 = vadd.f32 0.0, %v834
        %v836 = vpop.f32.mrf.mxu0
        %v837 = vadd.f32 0.0, %v836
        %838 = vmatmul.bf16.gmra.mxu0 %v795
        %v839 = vpop.f32.mrf.mxu0
        %v840 = vadd.f32 0.0, %v839
        %v841 = vpop.f32.mrf.mxu0
        %v842 = vadd.f32 0.0, %v841
        %843 = vmatmul.bf16.gmra.mxu0 %v798
        %v844 = vpop.f32.mrf.mxu0
        %v845 = vadd.f32 0.0, %v844
        %v846 = vpop.f32.mrf.mxu0
        %v847 = vadd.f32 0.0, %v846
        %848 = vmatmul.bf16.gmra.mxu0 %v801
        %v849 = vpop.f32.mrf.mxu0
        %v850 = vadd.f32 0.0, %v849
        %v851 = vpop.f32.mrf.mxu0
        %v852 = vadd.f32 0.0, %v851
        %853 = vmatmul.bf16.gmra.mxu0 %v804
        %v854 = vpop.f32.mrf.mxu0
        %v855 = vadd.f32 0.0, %v854
        %v856 = vpop.f32.mrf.mxu0
        %v857 = vadd.f32 0.0, %v856
        %858 = vdwg.mxu0
        %v859 = vpack.c.bf16 %v820, %v820
        %v860 = vpack.c.bf16 %v822, %v822
        %v861 = vpack.c.bf16 %v825, %v825
        %v862 = vpack.c.bf16 %v827, %v827
        %v863 = vpack.c.bf16 %v830, %v830
        %v864 = vpack.c.bf16 %v832, %v832
        %v865 = vpack.c.bf16 %v835, %v835
        %v866 = vpack.c.bf16 %v837, %v837
        %v867 = vpack.c.bf16 %v840, %v840
        %v868 = vpack.c.bf16 %v842, %v842
        %v869 = vpack.c.bf16 %v845, %v845
        %v870 = vpack.c.bf16 %v847, %v847
        %v871 = vpack.c.bf16 %v850, %v850
        %v872 = vpack.c.bf16 %v852, %v852
        %v873 = vpack.c.bf16 %v855, %v855
        %v874 = vpack.c.bf16 %v857, %v857
        %875 = vst.msk [vmem:[#allocation2 + $0x80] sm:$0xf] %vm691, %v859
        %876 = vst.msk [vmem:[#allocation2 + $0x84] sm:$0xf] %vm691, %v860
        %877 = vst.msk [vmem:[#allocation2 + $0x88] sm:$0xf] %vm691, %v861
        %878 = vst.msk [vmem:[#allocation2 + $0x8c] sm:$0xf] %vm691, %v862
        %879 = vst.msk [vmem:[#allocation2 + $0x90] sm:$0xf] %vm691, %v863
        %880 = vst.msk [vmem:[#allocation2 + $0x94] sm:$0xf] %vm691, %v864
        %881 = vst.msk [vmem:[#allocation2 + $0x98] sm:$0xf] %vm691, %v865
        %882 = vst.msk [vmem:[#allocation2 + $0x9c] sm:$0xf] %vm691, %v866
        %883 = vst.msk [vmem:[#allocation2 + $0xa0] sm:$0xf] %vm691, %v867
        %884 = vst.msk [vmem:[#allocation2 + $0xa4] sm:$0xf] %vm691, %v868
        %885 = vst.msk [vmem:[#allocation2 + $0xa8] sm:$0xf] %vm691, %v869
        %886 = vst.msk [vmem:[#allocation2 + $0xac] sm:$0xf] %vm691, %v870
        %887 = vst.msk [vmem:[#allocation2 + $0xb0] sm:$0xf] %vm691, %v871
        %888 = vst.msk [vmem:[#allocation2 + $0xb4] sm:$0xf] %vm691, %v872
        %889 = vst.msk [vmem:[#allocation2 + $0xb8] sm:$0xf] %vm691, %v873
        %890 = vst.msk [vmem:[#allocation2 + $0xbc] sm:$0xf] %vm691, %v874
        %v891 = vld [vmem:[%s397] sm:$0xf]
        %v892 = vld [vmem:[%s397 + $0x4] sm:$0xf]
        %v893 = vld [vmem:[%s397 + $0x8] sm:$0xf]
        %v894 = vld [vmem:[%s397 + $0xc] sm:$0xf]
        %v895 = vld [vmem:[%s397 + $0x10] sm:$0xf]
        %v896 = vld [vmem:[%s397 + $0x14] sm:$0xf]
        %v897 = vld [vmem:[%s397 + $0x18] sm:$0xf]
        %v898 = vld [vmem:[%s397 + $0x1c] sm:$0xf]
        %v899 = vld [vmem:[%s6] sm:$0x3]
        %v908 = vunpack.c.l.b16 %v891
        %v909 = vunpack.c.l.b16 %v892
        %v910 = vunpack.c.l.b16 %v893
        %v911 = vunpack.c.l.b16 %v894
        %v912 = vunpack.c.l.b16 %v895
        %v913 = vunpack.c.l.b16 %v896
        %v914 = vunpack.c.l.b16 %v897
        %v915 = vunpack.c.l.b16 %v898
        %v916 = vpack.c.b16 %v909, %v908
        %v917 = vpack.c.b16 %v911, %v910
        %v918 = vpack.c.b16 %v913, %v912
        %v919 = vpack.c.b16 %v915, %v914
        %vm920 = vcmask 31744
        %v922 = vsel %vm920, %v916, 0
        %v925 = vsel %vm920, %v917, 0
        %v928 = vsel %vm920, %v918, 0
        %v931 = vsel %vm920, %v919, 0
        %vm933 = vcmask 1041408
        %v935 = vsel %vm933, %v899, 0
        %937 = vmatpush.bf16.msra.mxu0 0
        %938 = vmatpush.bf16.msra.mxu0 0
        %939 = vmatpush.bf16.msra.mxu0 0
        %940 = vmatpush.bf16.msra.mxu0 0
        %941 = vmatpush.bf16.msra.mxu0 0
        %942 = vmatpush.bf16.msra.mxu0 0
        %943 = vmatpush.bf16.msra.mxu0 0
        %944 = vmatpush.bf16.msra.mxu0 %v935
        %945 = vmatmul.bf16.gmra.mxu0 %v922
        %v946 = vpop.f32.mrf.mxu0
        %v947 = vadd.f32 0.0, %v946
        %v948 = vpop.f32.mrf.mxu0
        %v949 = vadd.f32 0.0, %v948
        %950 = vmatmul.bf16.gmra.mxu0 %v925
        %v951 = vpop.f32.mrf.mxu0
        %v952 = vadd.f32 0.0, %v951
        %v953 = vpop.f32.mrf.mxu0
        %v954 = vadd.f32 0.0, %v953
        %955 = vmatmul.bf16.gmra.mxu0 %v928
        %v956 = vpop.f32.mrf.mxu0
        %v957 = vadd.f32 0.0, %v956
        %v958 = vpop.f32.mrf.mxu0
        %v959 = vadd.f32 0.0, %v958
        %960 = vmatmul.bf16.gmra.mxu0 %v931
        %v961 = vpop.f32.mrf.mxu0
        %v962 = vadd.f32 0.0, %v961
        %v963 = vpop.f32.mrf.mxu0
        %v964 = vadd.f32 0.0, %v963
        %965 = vdwg.mxu0
        %v966 = vpack.c.bf16 %v947, %v947
        %v967 = vpack.c.bf16 %v949, %v949
        %v968 = vpack.c.bf16 %v952, %v952
        %v969 = vpack.c.bf16 %v954, %v954
        %v970 = vpack.c.bf16 %v957, %v957
        %v971 = vpack.c.bf16 %v959, %v959
        %v972 = vpack.c.bf16 %v962, %v962
        %v973 = vpack.c.bf16 %v964, %v964
        %974 = vst.msk [vmem:[#allocation2 + $0xc0] sm:$0xf] %vm691, %v966
        %975 = vst.msk [vmem:[#allocation2 + $0xc4] sm:$0xf] %vm691, %v967
        %976 = vst.msk [vmem:[#allocation2 + $0xc8] sm:$0xf] %vm691, %v968
        %977 = vst.msk [vmem:[#allocation2 + $0xcc] sm:$0xf] %vm691, %v969
        %978 = vst.msk [vmem:[#allocation2 + $0xd0] sm:$0xf] %vm691, %v970
        %979 = vst.msk [vmem:[#allocation2 + $0xd4] sm:$0xf] %vm691, %v971
        %980 = vst.msk [vmem:[#allocation2 + $0xd8] sm:$0xf] %vm691, %v972
        %981 = vst.msk [vmem:[#allocation2 + $0xdc] sm:$0xf] %vm691, %v973
        %v982 = vld [vmem:[#allocation7] sm:$0xff]
        %v983 = vld [vmem:[#allocation7 + $0x8] sm:$0xff]
        %v984 = vld [vmem:[#allocation7 + $0x10] sm:$0xff]
        %v985 = vld [vmem:[#allocation7 + $0x18] sm:$0xff]
        %v986 = vld [vmem:[#allocation7 + $0x20] sm:$0xff]
        %v987 = vld [vmem:[#allocation7 + $0x28] sm:$0xff]
        %v988 = vld [vmem:[#allocation7 + $0x30] sm:$0xff]
        %v989 = vld [vmem:[#allocation7 + $0x38] sm:$0xff]
        %v990 = vld [vmem:[#allocation7 + $0x40] sm:$0xff]
        %v991 = vld [vmem:[#allocation7 + $0x48] sm:$0xff]
        %v992 = vld [vmem:[#allocation7 + $0x50] sm:$0xff]
        %v993 = vld [vmem:[#allocation7 + $0x58] sm:$0xff]
        %v994 = vld [vmem:[#allocation7 + $0x60] sm:$0xff]
        %v995 = vld [vmem:[#allocation7 + $0x68] sm:$0xff]
        %v996 = vld [vmem:[#allocation7 + $0x70] sm:$0xff]
        %v997 = vld [vmem:[#allocation7 + $0x78] sm:$0xff]
        %v998 = vld [vmem:[#allocation2] sm:$0xf]
        %v999 = vld [vmem:[#allocation2 + $0x4] sm:$0xf]
        %v1000 = vld [vmem:[#allocation2 + $0x8] sm:$0xf]
        %v1001 = vld [vmem:[#allocation2 + $0xc] sm:$0xf]
        %v1002 = vld [vmem:[#allocation2 + $0x10] sm:$0xf]
        %v1003 = vld [vmem:[#allocation2 + $0x14] sm:$0xf]
        %v1004 = vld [vmem:[#allocation2 + $0x18] sm:$0xf]
        %v1005 = vld [vmem:[#allocation2 + $0x1c] sm:$0xf]
        %v1006 = vld [vmem:[#allocation2 + $0x20] sm:$0xf]
        %v1007 = vld [vmem:[#allocation2 + $0x24] sm:$0xf]
        %v1008 = vld [vmem:[#allocation2 + $0x28] sm:$0xf]
        %v1009 = vld [vmem:[#allocation2 + $0x2c] sm:$0xf]
        %v1010 = vld [vmem:[#allocation2 + $0x30] sm:$0xf]
        %v1011 = vld [vmem:[#allocation2 + $0x34] sm:$0xf]
        %v1012 = vld [vmem:[#allocation2 + $0x38] sm:$0xf]
        %v1013 = vld [vmem:[#allocation2 + $0x3c] sm:$0xf]
        %v1014 = vld [vmem:[#allocation2 + $0x40] sm:$0xf]
        %v1015 = vld [vmem:[#allocation2 + $0x44] sm:$0xf]
        %v1016 = vld [vmem:[#allocation2 + $0x48] sm:$0xf]
        %v1017 = vld [vmem:[#allocation2 + $0x4c] sm:$0xf]
        %v1018 = vld [vmem:[#allocation2 + $0x50] sm:$0xf]
        %v1019 = vld [vmem:[#allocation2 + $0x54] sm:$0xf]
        %v1020 = vld [vmem:[#allocation2 + $0x58] sm:$0xf]
        %v1021 = vld [vmem:[#allocation2 + $0x5c] sm:$0xf]
        %v1022 = vld [vmem:[#allocation2 + $0x60] sm:$0xf]
        %v1023 = vld [vmem:[#allocation2 + $0x64] sm:$0xf]
        %v1024 = vld [vmem:[#allocation2 + $0x68] sm:$0xf]
        %v1025 = vld [vmem:[#allocation2 + $0x6c] sm:$0xf]
        %v1026 = vld [vmem:[#allocation2 + $0x70] sm:$0xf]
        %v1027 = vld [vmem:[#allocation2 + $0x74] sm:$0xf]
        %v1028 = vld [vmem:[#allocation2 + $0x78] sm:$0xf]
        %v1029 = vld [vmem:[#allocation2 + $0x7c] sm:$0xf]
        %v1030 = vld [vmem:[#allocation2 + $0x80] sm:$0xf]
        %v1031 = vld [vmem:[#allocation2 + $0x84] sm:$0xf]
        %v1032 = vld [vmem:[#allocation2 + $0x88] sm:$0xf]
        %v1033 = vld [vmem:[#allocation2 + $0x8c] sm:$0xf]
        %v1034 = vld [vmem:[#allocation2 + $0x90] sm:$0xf]
        %v1035 = vld [vmem:[#allocation2 + $0x94] sm:$0xf]
        %v1036 = vld [vmem:[#allocation2 + $0x98] sm:$0xf]
        %v1037 = vld [vmem:[#allocation2 + $0x9c] sm:$0xf]
        %v1038 = vld [vmem:[#allocation2 + $0xa0] sm:$0xf]
        %v1039 = vld [vmem:[#allocation2 + $0xa4] sm:$0xf]
        %v1040 = vld [vmem:[#allocation2 + $0xa8] sm:$0xf]
        %v1041 = vld [vmem:[#allocation2 + $0xac] sm:$0xf]
        %v1042 = vld [vmem:[#allocation2 + $0xb0] sm:$0xf]
        %v1043 = vld [vmem:[#allocation2 + $0xb4] sm:$0xf]
        %v1044 = vld [vmem:[#allocation2 + $0xb8] sm:$0xf]
        %v1045 = vld [vmem:[#allocation2 + $0xbc] sm:$0xf]
        %v1046 = vld [vmem:[#allocation2 + $0xc0] sm:$0xf]
        %v1047 = vld [vmem:[#allocation2 + $0xc4] sm:$0xf]
        %v1048 = vld [vmem:[#allocation2 + $0xc8] sm:$0xf]
        %v1049 = vld [vmem:[#allocation2 + $0xcc] sm:$0xf]
        %v1050 = vld [vmem:[#allocation2 + $0xd0] sm:$0xf]
        %v1051 = vld [vmem:[#allocation2 + $0xd4] sm:$0xf]
        %v1052 = vld [vmem:[#allocation2 + $0xd8] sm:$0xf]
        %v1053 = vld [vmem:[#allocation2 + $0xdc] sm:$0xf]
        %s1054 = sld [smem:[#allocation3]]
        %v1055 = vstv %s1054
        %v1072 = vunpack.c.l.b16 %v982
        %v1073 = vunpack.c.h.b16 %v982
        %v1074 = vunpack.c.l.b16 %v983
        %v1075 = vunpack.c.h.b16 %v983
        %v1076 = vunpack.c.l.b16 %v984
        %v1077 = vunpack.c.h.b16 %v984
        %v1078 = vunpack.c.l.b16 %v985
        %v1079 = vunpack.c.h.b16 %v985
        %v1080 = vunpack.c.l.b16 %v986
        %v1081 = vunpack.c.h.b16 %v986
        %v1082 = vunpack.c.l.b16 %v987
        %v1083 = vunpack.c.h.b16 %v987
        %v1084 = vunpack.c.l.b16 %v988
        %v1085 = vunpack.c.h.b16 %v988
        %v1086 = vunpack.c.l.b16 %v989
        %v1087 = vunpack.c.h.b16 %v989
        %v1088 = vunpack.c.l.b16 %v990
        %v1089 = vunpack.c.h.b16 %v990
        %v1090 = vunpack.c.l.b16 %v991
        %v1091 = vunpack.c.h.b16 %v991
        %v1092 = vunpack.c.l.b16 %v992
        %v1093 = vunpack.c.h.b16 %v992
        %v1094 = vunpack.c.l.b16 %v993
        %v1095 = vunpack.c.h.b16 %v993
        %v1096 = vunpack.c.l.b16 %v994
        %v1097 = vunpack.c.h.b16 %v994
        %v1098 = vunpack.c.l.b16 %v995
        %v1099 = vunpack.c.h.b16 %v995
        %v1100 = vunpack.c.l.b16 %v996
        %v1101 = vunpack.c.h.b16 %v996
        %v1102 = vunpack.c.l.b16 %v997
        %v1103 = vunpack.c.h.b16 %v997
        %v1104 = vpack.c.b16 %v1076, %v1072
        %v1105 = vpack.c.b16 %v1077, %v1073
        %v1106 = vpack.c.b16 %v1078, %v1074
        %v1107 = vpack.c.b16 %v1079, %v1075
        %v1108 = vpack.c.b16 %v1084, %v1080
        %v1109 = vpack.c.b16 %v1085, %v1081
        %v1110 = vpack.c.b16 %v1086, %v1082
        %v1111 = vpack.c.b16 %v1087, %v1083
        %v1112 = vpack.c.b16 %v1092, %v1088
        %v1113 = vpack.c.b16 %v1093, %v1089
        %v1114 = vpack.c.b16 %v1094, %v1090
        %v1115 = vpack.c.b16 %v1095, %v1091
        %v1116 = vpack.c.b16 %v1100, %v1096
        %v1117 = vpack.c.b16 %v1101, %v1097
        %v1118 = vpack.c.b16 %v1102, %v1098
        %v1119 = vpack.c.b16 %v1103, %v1099
        %v1188 = vunpack.c.l.b16 %v998
        %v1189 = vunpack.c.l.b16 %v999
        %v1190 = vunpack.c.l.b16 %v1000
        %v1191 = vunpack.c.l.b16 %v1001
        %v1192 = vunpack.c.l.b16 %v1002
        %v1193 = vunpack.c.l.b16 %v1003
        %v1194 = vunpack.c.l.b16 %v1004
        %v1195 = vunpack.c.l.b16 %v1005
        %v1196 = vunpack.c.l.b16 %v1006
        %v1197 = vunpack.c.l.b16 %v1007
        %v1198 = vunpack.c.l.b16 %v1008
        %v1199 = vunpack.c.l.b16 %v1009
        %v1200 = vunpack.c.l.b16 %v1010
        %v1201 = vunpack.c.l.b16 %v1011
        %v1202 = vunpack.c.l.b16 %v1012
        %v1203 = vunpack.c.l.b16 %v1013
        %v1204 = vunpack.c.l.b16 %v1014
        %v1205 = vunpack.c.l.b16 %v1015
        %v1206 = vunpack.c.l.b16 %v1016
        %v1207 = vunpack.c.l.b16 %v1017
        %v1208 = vunpack.c.l.b16 %v1018
        %v1209 = vunpack.c.l.b16 %v1019
        %v1210 = vunpack.c.l.b16 %v1020
        %v1211 = vunpack.c.l.b16 %v1021
        %v1212 = vunpack.c.l.b16 %v1022
        %v1213 = vunpack.c.l.b16 %v1023
        %v1214 = vunpack.c.l.b16 %v1024
        %v1215 = vunpack.c.l.b16 %v1025
        %v1216 = vunpack.c.l.b16 %v1026
        %v1217 = vunpack.c.l.b16 %v1027
        %v1218 = vunpack.c.l.b16 %v1028
        %v1219 = vunpack.c.l.b16 %v1029
        %v1220 = vunpack.c.l.b16 %v1030
        %v1221 = vunpack.c.l.b16 %v1031
        %v1222 = vunpack.c.l.b16 %v1032
        %v1223 = vunpack.c.l.b16 %v1033
        %v1224 = vunpack.c.l.b16 %v1034
        %v1225 = vunpack.c.l.b16 %v1035
        %v1226 = vunpack.c.l.b16 %v1036
        %v1227 = vunpack.c.l.b16 %v1037
        %v1228 = vunpack.c.l.b16 %v1038
        %v1229 = vunpack.c.l.b16 %v1039
        %v1230 = vunpack.c.l.b16 %v1040
        %v1231 = vunpack.c.l.b16 %v1041
        %v1232 = vunpack.c.l.b16 %v1042
        %v1233 = vunpack.c.l.b16 %v1043
        %v1234 = vunpack.c.l.b16 %v1044
        %v1235 = vunpack.c.l.b16 %v1045
        %v1236 = vunpack.c.l.b16 %v1046
        %v1237 = vunpack.c.l.b16 %v1047
        %v1238 = vunpack.c.l.b16 %v1048
        %v1239 = vunpack.c.l.b16 %v1049
        %v1240 = vunpack.c.l.b16 %v1050
        %v1241 = vunpack.c.l.b16 %v1051
        %v1242 = vunpack.c.l.b16 %v1052
        %v1243 = vunpack.c.l.b16 %v1053
        %v1244 = vpack.c.b16 %v1189, %v1188
        %v1245 = vpack.c.b16 %v1191, %v1190
        %v1246 = vpack.c.b16 %v1193, %v1192
        %v1247 = vpack.c.b16 %v1195, %v1194
        %v1248 = vpack.c.b16 %v1197, %v1196
        %v1249 = vpack.c.b16 %v1199, %v1198
        %v1250 = vpack.c.b16 %v1201, %v1200
        %v1251 = vpack.c.b16 %v1203, %v1202
        %v1252 = vpack.c.b16 %v1205, %v1204
        %v1253 = vpack.c.b16 %v1207, %v1206
        %v1254 = vpack.c.b16 %v1209, %v1208
        %v1255 = vpack.c.b16 %v1211, %v1210
        %v1256 = vpack.c.b16 %v1213, %v1212
        %v1257 = vpack.c.b16 %v1215, %v1214
        %v1258 = vpack.c.b16 %v1217, %v1216
        %v1259 = vpack.c.b16 %v1219, %v1218
        %v1260 = vpack.c.b16 %v1221, %v1220
        %v1261 = vpack.c.b16 %v1223, %v1222
        %v1262 = vpack.c.b16 %v1225, %v1224
        %v1263 = vpack.c.b16 %v1227, %v1226
        %v1264 = vpack.c.b16 %v1229, %v1228
        %v1265 = vpack.c.b16 %v1231, %v1230
        %v1266 = vpack.c.b16 %v1233, %v1232
        %v1267 = vpack.c.b16 %v1235, %v1234
        %v1268 = vpack.c.b16 %v1237, %v1236
        %v1269 = vpack.c.b16 %v1239, %v1238
        %v1270 = vpack.c.b16 %v1241, %v1240
        %v1271 = vpack.c.b16 %v1243, %v1242
        %vm1300 = vcmask 523264
        %v1302 = vsel %vm1300, %v1107, 0
        %v1305 = vsel %vm1300, %v1111, 0
        %v1308 = vsel %vm1300, %v1115, 0
        %v1311 = vsel %vm1300, %v1119, 0
        %1313 = vmatpush.bf16.msra.mxu0 %v1251
        %1314 = vmatpush.bf16.msra.mxu0 %v1250
        %1315 = vmatpush.bf16.msra.mxu0 %v1249
        %1316 = vmatpush.bf16.msra.mxu0 %v1248
        %1317 = vmatpush.bf16.msra.mxu0 %v1247
        %1318 = vmatpush.bf16.msra.mxu0 %v1246
        %1319 = vmatpush.bf16.msra.mxu0 %v1245
        %1320 = vmatpush.bf16.msra.mxu0 %v1244
        %1321 = vmatmul.bf16.gmra.mxu0 %v1104
        %v1322 = vpop.f32.mrf.mxu0
        %v1323 = vadd.f32 %v1055, %v1322
        %v1324 = vpop.f32.mrf.mxu0
        %v1325 = vadd.f32 %v1055, %v1324
        %1326 = vmatmul.bf16.gmra.mxu0 %v1108
        %v1327 = vpop.f32.mrf.mxu0
        %v1328 = vadd.f32 %v1055, %v1327
        %v1329 = vpop.f32.mrf.mxu0
        %v1330 = vadd.f32 %v1055, %v1329
        %1331 = vmatmul.bf16.gmra.mxu0 %v1112
        %v1332 = vpop.f32.mrf.mxu0
        %v1333 = vadd.f32 %v1055, %v1332
        %v1334 = vpop.f32.mrf.mxu0
        %v1335 = vadd.f32 %v1055, %v1334
        %1336 = vmatmul.bf16.gmra.mxu0 %v1116
        %v1337 = vpop.f32.mrf.mxu0
        %v1338 = vadd.f32 %v1055, %v1337
        %v1339 = vpop.f32.mrf.mxu0
        %v1340 = vadd.f32 %v1055, %v1339
        %1341 = vdwg.mxu0
        %1342 = vmatpush.bf16.msra.mxu0 %v1259
        %1343 = vmatpush.bf16.msra.mxu0 %v1258
        %1344 = vmatpush.bf16.msra.mxu0 %v1257
        %1345 = vmatpush.bf16.msra.mxu0 %v1256
        %1346 = vmatpush.bf16.msra.mxu0 %v1255
        %1347 = vmatpush.bf16.msra.mxu0 %v1254
        %1348 = vmatpush.bf16.msra.mxu0 %v1253
        %1349 = vmatpush.bf16.msra.mxu0 %v1252
        %1350 = vmatmul.bf16.gmra.mxu0 %v1105
        %v1351 = vpop.f32.mrf.mxu0
        %v1352 = vadd.f32 %v1323, %v1351
        %v1353 = vpop.f32.mrf.mxu0
        %v1354 = vadd.f32 %v1325, %v1353
        %1355 = vmatmul.bf16.gmra.mxu0 %v1109
        %v1356 = vpop.f32.mrf.mxu0
        %v1357 = vadd.f32 %v1328, %v1356
        %v1358 = vpop.f32.mrf.mxu0
        %v1359 = vadd.f32 %v1330, %v1358
        %1360 = vmatmul.bf16.gmra.mxu0 %v1113
        %v1361 = vpop.f32.mrf.mxu0
        %v1362 = vadd.f32 %v1333, %v1361
        %v1363 = vpop.f32.mrf.mxu0
        %v1364 = vadd.f32 %v1335, %v1363
        %1365 = vmatmul.bf16.gmra.mxu0 %v1117
        %v1366 = vpop.f32.mrf.mxu0
        %v1367 = vadd.f32 %v1338, %v1366
        %v1368 = vpop.f32.mrf.mxu0
        %v1369 = vadd.f32 %v1340, %v1368
        %1370 = vdwg.mxu0
        %1371 = vmatpush.bf16.msra.mxu0 %v1267
        %1372 = vmatpush.bf16.msra.mxu0 %v1266
        %1373 = vmatpush.bf16.msra.mxu0 %v1265
        %1374 = vmatpush.bf16.msra.mxu0 %v1264
        %1375 = vmatpush.bf16.msra.mxu0 %v1263
        %1376 = vmatpush.bf16.msra.mxu0 %v1262
        %1377 = vmatpush.bf16.msra.mxu0 %v1261
        %1378 = vmatpush.bf16.msra.mxu0 %v1260
        %1379 = vmatmul.bf16.gmra.mxu0 %v1106
        %v1380 = vpop.f32.mrf.mxu0
        %v1381 = vadd.f32 %v1352, %v1380
        %v1382 = vpop.f32.mrf.mxu0
        %v1383 = vadd.f32 %v1354, %v1382
        %1384 = vmatmul.bf16.gmra.mxu0 %v1110
        %v1385 = vpop.f32.mrf.mxu0
        %v1386 = vadd.f32 %v1357, %v1385
        %v1387 = vpop.f32.mrf.mxu0
        %v1388 = vadd.f32 %v1359, %v1387
        %1389 = vmatmul.bf16.gmra.mxu0 %v1114
        %v1390 = vpop.f32.mrf.mxu0
        %v1391 = vadd.f32 %v1362, %v1390
        %v1392 = vpop.f32.mrf.mxu0
        %v1393 = vadd.f32 %v1364, %v1392
        %1394 = vmatmul.bf16.gmra.mxu0 %v1118
        %v1395 = vpop.f32.mrf.mxu0
        %v1396 = vadd.f32 %v1367, %v1395
        %v1397 = vpop.f32.mrf.mxu0
        %v1398 = vadd.f32 %v1369, %v1397
        %1399 = vdwg.mxu0
        %1400 = vmatpush.bf16.msra.mxu0 0
        %1401 = vmatpush.bf16.msra.mxu0 0
        %1402 = vmatpush.bf16.msra.mxu0 0
        %1403 = vmatpush.bf16.msra.mxu0 0
        %1404 = vmatpush.bf16.msra.mxu0 %v1271
        %1405 = vmatpush.bf16.msra.mxu0 %v1270
        %1406 = vmatpush.bf16.msra.mxu0 %v1269
        %1407 = vmatpush.bf16.msra.mxu0 %v1268
        %1408 = vmatmul.bf16.gmra.mxu0 %v1302
        %v1409 = vpop.f32.mrf.mxu0
        %v1410 = vadd.f32 %v1381, %v1409
        %v1411 = vpop.f32.mrf.mxu0
        %v1412 = vadd.f32 %v1383, %v1411
        %1413 = vmatmul.bf16.gmra.mxu0 %v1305
        %v1414 = vpop.f32.mrf.mxu0
        %v1415 = vadd.f32 %v1386, %v1414
        %v1416 = vpop.f32.mrf.mxu0
        %v1417 = vadd.f32 %v1388, %v1416
        %1418 = vmatmul.bf16.gmra.mxu0 %v1308
        %v1419 = vpop.f32.mrf.mxu0
        %v1420 = vadd.f32 %v1391, %v1419
        %v1421 = vpop.f32.mrf.mxu0
        %v1422 = vadd.f32 %v1393, %v1421
        %1423 = vmatmul.bf16.gmra.mxu0 %v1311
        %v1424 = vpop.f32.mrf.mxu0
        %v1425 = vadd.f32 %v1396, %v1424
        %v1426 = vpop.f32.mrf.mxu0
        %v1427 = vadd.f32 %v1398, %v1426
        %1428 = vdwg.mxu0
        %1429 = vst.msk [vmem:[%s382] sm:$0xff] %vm1300, %v1410
        %1430 = vst.msk [vmem:[%s382 + $0x8] sm:$0xff] %vm1300, %v1412
        %1431 = vst.msk [vmem:[%s382 + $0x10] sm:$0xff] %vm1300, %v1415
        %1432 = vst.msk [vmem:[%s382 + $0x18] sm:$0xff] %vm1300, %v1417
        %1433 = vst.msk [vmem:[%s382 + $0x20] sm:$0xff] %vm1300, %v1420
        %1434 = vst.msk [vmem:[%s382 + $0x28] sm:$0xff] %vm1300, %v1422
        %1435 = vst.msk [vmem:[%s382 + $0x30] sm:$0xff] %vm1300, %v1425
        %1436 = vst.msk [vmem:[%s382 + $0x38] sm:$0xff] %vm1300, %v1427
        %s1437 = scalar_lea.vmem [#allocation7], 128
        %v1438 = vld [vmem:[%s1437] sm:$0xff]
        %v1439 = vld [vmem:[%s1437 + $0x8] sm:$0xff]
        %v1440 = vld [vmem:[%s1437 + $0x10] sm:$0xff]
        %v1441 = vld [vmem:[%s1437 + $0x18] sm:$0xff]
        %v1442 = vld [vmem:[%s1437 + $0x20] sm:$0xff]
        %v1443 = vld [vmem:[%s1437 + $0x28] sm:$0xff]
        %v1444 = vld [vmem:[%s1437 + $0x30] sm:$0xff]
        %v1445 = vld [vmem:[%s1437 + $0x38] sm:$0xff]
        %v1446 = vld [vmem:[%s1437 + $0x40] sm:$0xff]
        %v1447 = vld [vmem:[%s1437 + $0x48] sm:$0xff]
        %v1448 = vld [vmem:[%s1437 + $0x50] sm:$0xff]
        %v1449 = vld [vmem:[%s1437 + $0x58] sm:$0xff]
        %v1450 = vld [vmem:[%s1437 + $0x60] sm:$0xff]
        %v1451 = vld [vmem:[%s1437 + $0x68] sm:$0xff]
        %v1452 = vld [vmem:[%s1437 + $0x70] sm:$0xff]
        %v1453 = vld [vmem:[%s1437 + $0x78] sm:$0xff]
        %v1454 = vld [vmem:[#allocation2] sm:$0xf]
        %v1455 = vld [vmem:[#allocation2 + $0x4] sm:$0xf]
        %v1456 = vld [vmem:[#allocation2 + $0x8] sm:$0xf]
        %v1457 = vld [vmem:[#allocation2 + $0xc] sm:$0xf]
        %v1458 = vld [vmem:[#allocation2 + $0x10] sm:$0xf]
        %v1459 = vld [vmem:[#allocation2 + $0x14] sm:$0xf]
        %v1460 = vld [vmem:[#allocation2 + $0x18] sm:$0xf]
        %v1461 = vld [vmem:[#allocation2 + $0x1c] sm:$0xf]
        %v1462 = vld [vmem:[#allocation2 + $0x20] sm:$0xf]
        %v1463 = vld [vmem:[#allocation2 + $0x24] sm:$0xf]
        %v1464 = vld [vmem:[#allocation2 + $0x28] sm:$0xf]
        %v1465 = vld [vmem:[#allocation2 + $0x2c] sm:$0xf]
        %v1466 = vld [vmem:[#allocation2 + $0x30] sm:$0xf]
        %v1467 = vld [vmem:[#allocation2 + $0x34] sm:$0xf]
        %v1468 = vld [vmem:[#allocation2 + $0x38] sm:$0xf]
        %v1469 = vld [vmem:[#allocation2 + $0x3c] sm:$0xf]
        %v1470 = vld [vmem:[#allocation2 + $0x40] sm:$0xf]
        %v1471 = vld [vmem:[#allocation2 + $0x44] sm:$0xf]
        %v1472 = vld [vmem:[#allocation2 + $0x48] sm:$0xf]
        %v1473 = vld [vmem:[#allocation2 + $0x4c] sm:$0xf]
        %v1474 = vld [vmem:[#allocation2 + $0x50] sm:$0xf]
        %v1475 = vld [vmem:[#allocation2 + $0x54] sm:$0xf]
        %v1476 = vld [vmem:[#allocation2 + $0x58] sm:$0xf]
        %v1477 = vld [vmem:[#allocation2 + $0x5c] sm:$0xf]
        %v1478 = vld [vmem:[#allocation2 + $0x60] sm:$0xf]
        %v1479 = vld [vmem:[#allocation2 + $0x64] sm:$0xf]
        %v1480 = vld [vmem:[#allocation2 + $0x68] sm:$0xf]
        %v1481 = vld [vmem:[#allocation2 + $0x6c] sm:$0xf]
        %v1482 = vld [vmem:[#allocation2 + $0x70] sm:$0xf]
        %v1483 = vld [vmem:[#allocation2 + $0x74] sm:$0xf]
        %v1484 = vld [vmem:[#allocation2 + $0x78] sm:$0xf]
        %v1485 = vld [vmem:[#allocation2 + $0x7c] sm:$0xf]
        %v1486 = vld [vmem:[#allocation2 + $0x80] sm:$0xf]
        %v1487 = vld [vmem:[#allocation2 + $0x84] sm:$0xf]
        %v1488 = vld [vmem:[#allocation2 + $0x88] sm:$0xf]
        %v1489 = vld [vmem:[#allocation2 + $0x8c] sm:$0xf]
        %v1490 = vld [vmem:[#allocation2 + $0x90] sm:$0xf]
        %v1491 = vld [vmem:[#allocation2 + $0x94] sm:$0xf]
        %v1492 = vld [vmem:[#allocation2 + $0x98] sm:$0xf]
        %v1493 = vld [vmem:[#allocation2 + $0x9c] sm:$0xf]
        %v1494 = vld [vmem:[#allocation2 + $0xa0] sm:$0xf]
        %v1495 = vld [vmem:[#allocation2 + $0xa4] sm:$0xf]
        %v1496 = vld [vmem:[#allocation2 + $0xa8] sm:$0xf]
        %v1497 = vld [vmem:[#allocation2 + $0xac] sm:$0xf]
        %v1498 = vld [vmem:[#allocation2 + $0xb0] sm:$0xf]
        %v1499 = vld [vmem:[#allocation2 + $0xb4] sm:$0xf]
        %v1500 = vld [vmem:[#allocation2 + $0xb8] sm:$0xf]
        %v1501 = vld [vmem:[#allocation2 + $0xbc] sm:$0xf]
        %v1502 = vld [vmem:[#allocation2 + $0xc0] sm:$0xf]
        %v1503 = vld [vmem:[#allocation2 + $0xc4] sm:$0xf]
        %v1504 = vld [vmem:[#allocation2 + $0xc8] sm:$0xf]
        %v1505 = vld [vmem:[#allocation2 + $0xcc] sm:$0xf]
        %v1506 = vld [vmem:[#allocation2 + $0xd0] sm:$0xf]
        %v1507 = vld [vmem:[#allocation2 + $0xd4] sm:$0xf]
        %v1508 = vld [vmem:[#allocation2 + $0xd8] sm:$0xf]
        %v1509 = vld [vmem:[#allocation2 + $0xdc] sm:$0xf]
        %s1510 = sld [smem:[#allocation3 + $0x1]]
        %v1511 = vstv %s1510
        %v1528 = vunpack.c.l.b16 %v1438
        %v1529 = vunpack.c.h.b16 %v1438
        %v1530 = vunpack.c.l.b16 %v1439
        %v1531 = vunpack.c.h.b16 %v1439
        %v1532 = vunpack.c.l.b16 %v1440
        %v1533 = vunpack.c.h.b16 %v1440
        %v1534 = vunpack.c.l.b16 %v1441
        %v1535 = vunpack.c.h.b16 %v1441
        %v1536 = vunpack.c.l.b16 %v1442
        %v1537 = vunpack.c.h.b16 %v1442
        %v1538 = vunpack.c.l.b16 %v1443
        %v1539 = vunpack.c.h.b16 %v1443
        %v1540 = vunpack.c.l.b16 %v1444
        %v1541 = vunpack.c.h.b16 %v1444
        %v1542 = vunpack.c.l.b16 %v1445
        %v1543 = vunpack.c.h.b16 %v1445
        %v1544 = vunpack.c.l.b16 %v1446
        %v1545 = vunpack.c.h.b16 %v1446
        %v1546 = vunpack.c.l.b16 %v1447
        %v1547 = vunpack.c.h.b16 %v1447
        %v1548 = vunpack.c.l.b16 %v1448
        %v1549 = vunpack.c.h.b16 %v1448
        %v1550 = vunpack.c.l.b16 %v1449
        %v1551 = vunpack.c.h.b16 %v1449
        %v1552 = vunpack.c.l.b16 %v1450
        %v1553 = vunpack.c.h.b16 %v1450
        %v1554 = vunpack.c.l.b16 %v1451
        %v1555 = vunpack.c.h.b16 %v1451
        %v1556 = vunpack.c.l.b16 %v1452
        %v1557 = vunpack.c.h.b16 %v1452
        %v1558 = vunpack.c.l.b16 %v1453
        %v1559 = vunpack.c.h.b16 %v1453
        %v1560 = vpack.c.b16 %v1532, %v1528
        %v1561 = vpack.c.b16 %v1533, %v1529
        %v1562 = vpack.c.b16 %v1534, %v1530
        %v1563 = vpack.c.b16 %v1535, %v1531
        %v1564 = vpack.c.b16 %v1540, %v1536
        %v1565 = vpack.c.b16 %v1541, %v1537
        %v1566 = vpack.c.b16 %v1542, %v1538
        %v1567 = vpack.c.b16 %v1543, %v1539
        %v1568 = vpack.c.b16 %v1548, %v1544
        %v1569 = vpack.c.b16 %v1549, %v1545
        %v1570 = vpack.c.b16 %v1550, %v1546
        %v1571 = vpack.c.b16 %v1551, %v1547
        %v1572 = vpack.c.b16 %v1556, %v1552
        %v1573 = vpack.c.b16 %v1557, %v1553
        %v1574 = vpack.c.b16 %v1558, %v1554
        %v1575 = vpack.c.b16 %v1559, %v1555
        %v1644 = vunpack.c.l.b16 %v1454
        %v1645 = vunpack.c.l.b16 %v1455
        %v1646 = vunpack.c.l.b16 %v1456
        %v1647 = vunpack.c.l.b16 %v1457
        %v1648 = vunpack.c.l.b16 %v1458
        %v1649 = vunpack.c.l.b16 %v1459
        %v1650 = vunpack.c.l.b16 %v1460
        %v1651 = vunpack.c.l.b16 %v1461
        %v1652 = vunpack.c.l.b16 %v1462
        %v1653 = vunpack.c.l.b16 %v1463
        %v1654 = vunpack.c.l.b16 %v1464
        %v1655 = vunpack.c.l.b16 %v1465
        %v1656 = vunpack.c.l.b16 %v1466
        %v1657 = vunpack.c.l.b16 %v1467
        %v1658 = vunpack.c.l.b16 %v1468
        %v1659 = vunpack.c.l.b16 %v1469
        %v1660 = vunpack.c.l.b16 %v1470
        %v1661 = vunpack.c.l.b16 %v1471
        %v1662 = vunpack.c.l.b16 %v1472
        %v1663 = vunpack.c.l.b16 %v1473
        %v1664 = vunpack.c.l.b16 %v1474
        %v1665 = vunpack.c.l.b16 %v1475
        %v1666 = vunpack.c.l.b16 %v1476
        %v1667 = vunpack.c.l.b16 %v1477
        %v1668 = vunpack.c.l.b16 %v1478
        %v1669 = vunpack.c.l.b16 %v1479
        %v1670 = vunpack.c.l.b16 %v1480
        %v1671 = vunpack.c.l.b16 %v1481
        %v1672 = vunpack.c.l.b16 %v1482
        %v1673 = vunpack.c.l.b16 %v1483
        %v1674 = vunpack.c.l.b16 %v1484
        %v1675 = vunpack.c.l.b16 %v1485
        %v1676 = vunpack.c.l.b16 %v1486
        %v1677 = vunpack.c.l.b16 %v1487
        %v1678 = vunpack.c.l.b16 %v1488
        %v1679 = vunpack.c.l.b16 %v1489
        %v1680 = vunpack.c.l.b16 %v1490
        %v1681 = vunpack.c.l.b16 %v1491
        %v1682 = vunpack.c.l.b16 %v1492
        %v1683 = vunpack.c.l.b16 %v1493
        %v1684 = vunpack.c.l.b16 %v1494
        %v1685 = vunpack.c.l.b16 %v1495
        %v1686 = vunpack.c.l.b16 %v1496
        %v1687 = vunpack.c.l.b16 %v1497
        %v1688 = vunpack.c.l.b16 %v1498
        %v1689 = vunpack.c.l.b16 %v1499
        %v1690 = vunpack.c.l.b16 %v1500
        %v1691 = vunpack.c.l.b16 %v1501
        %v1692 = vunpack.c.l.b16 %v1502
        %v1693 = vunpack.c.l.b16 %v1503
        %v1694 = vunpack.c.l.b16 %v1504
        %v1695 = vunpack.c.l.b16 %v1505
        %v1696 = vunpack.c.l.b16 %v1506
        %v1697 = vunpack.c.l.b16 %v1507
        %v1698 = vunpack.c.l.b16 %v1508
        %v1699 = vunpack.c.l.b16 %v1509
        %v1700 = vpack.c.b16 %v1645, %v1644
        %v1701 = vpack.c.b16 %v1647, %v1646
        %v1702 = vpack.c.b16 %v1649, %v1648
        %v1703 = vpack.c.b16 %v1651, %v1650
        %v1704 = vpack.c.b16 %v1653, %v1652
        %v1705 = vpack.c.b16 %v1655, %v1654
        %v1706 = vpack.c.b16 %v1657, %v1656
        %v1707 = vpack.c.b16 %v1659, %v1658
        %v1708 = vpack.c.b16 %v1661, %v1660
        %v1709 = vpack.c.b16 %v1663, %v1662
        %v1710 = vpack.c.b16 %v1665, %v1664
        %v1711 = vpack.c.b16 %v1667, %v1666
        %v1712 = vpack.c.b16 %v1669, %v1668
        %v1713 = vpack.c.b16 %v1671, %v1670
        %v1714 = vpack.c.b16 %v1673, %v1672
        %v1715 = vpack.c.b16 %v1675, %v1674
        %v1716 = vpack.c.b16 %v1677, %v1676
        %v1717 = vpack.c.b16 %v1679, %v1678
        %v1718 = vpack.c.b16 %v1681, %v1680
        %v1719 = vpack.c.b16 %v1683, %v1682
        %v1720 = vpack.c.b16 %v1685, %v1684
        %v1721 = vpack.c.b16 %v1687, %v1686
        %v1722 = vpack.c.b16 %v1689, %v1688
        %v1723 = vpack.c.b16 %v1691, %v1690
        %v1724 = vpack.c.b16 %v1693, %v1692
        %v1725 = vpack.c.b16 %v1695, %v1694
        %v1726 = vpack.c.b16 %v1697, %v1696
        %v1727 = vpack.c.b16 %v1699, %v1698
        %v1757 = vsel %vm1300, %v1563, 0
        %v1760 = vsel %vm1300, %v1567, 0
        %v1763 = vsel %vm1300, %v1571, 0
        %v1766 = vsel %vm1300, %v1575, 0
        %1768 = vmatpush.bf16.msra.mxu0 %v1707
        %1769 = vmatpush.bf16.msra.mxu0 %v1706
        %1770 = vmatpush.bf16.msra.mxu0 %v1705
        %1771 = vmatpush.bf16.msra.mxu0 %v1704
        %1772 = vmatpush.bf16.msra.mxu0 %v1703
        %1773 = vmatpush.bf16.msra.mxu0 %v1702
        %1774 = vmatpush.bf16.msra.mxu0 %v1701
        %1775 = vmatpush.bf16.msra.mxu0 %v1700
        %1776 = vmatmul.bf16.gmra.mxu0 %v1560
        %v1777 = vpop.f32.mrf.mxu0
        %v1778 = vadd.f32 %v1511, %v1777
        %v1779 = vpop.f32.mrf.mxu0
        %v1780 = vadd.f32 %v1511, %v1779
        %1781 = vmatmul.bf16.gmra.mxu0 %v1564
        %v1782 = vpop.f32.mrf.mxu0
        %v1783 = vadd.f32 %v1511, %v1782
        %v1784 = vpop.f32.mrf.mxu0
        %v1785 = vadd.f32 %v1511, %v1784
        %1786 = vmatmul.bf16.gmra.mxu0 %v1568
        %v1787 = vpop.f32.mrf.mxu0
        %v1788 = vadd.f32 %v1511, %v1787
        %v1789 = vpop.f32.mrf.mxu0
        %v1790 = vadd.f32 %v1511, %v1789
        %1791 = vmatmul.bf16.gmra.mxu0 %v1572
        %v1792 = vpop.f32.mrf.mxu0
        %v1793 = vadd.f32 %v1511, %v1792
        %v1794 = vpop.f32.mrf.mxu0
        %v1795 = vadd.f32 %v1511, %v1794
        %1796 = vdwg.mxu0
        %1797 = vmatpush.bf16.msra.mxu0 %v1715
        %1798 = vmatpush.bf16.msra.mxu0 %v1714
        %1799 = vmatpush.bf16.msra.mxu0 %v1713
        %1800 = vmatpush.bf16.msra.mxu0 %v1712
        %1801 = vmatpush.bf16.msra.mxu0 %v1711
        %1802 = vmatpush.bf16.msra.mxu0 %v1710
        %1803 = vmatpush.bf16.msra.mxu0 %v1709
        %1804 = vmatpush.bf16.msra.mxu0 %v1708
        %1805 = vmatmul.bf16.gmra.mxu0 %v1561
        %v1806 = vpop.f32.mrf.mxu0
        %v1807 = vadd.f32 %v1778, %v1806
        %v1808 = vpop.f32.mrf.mxu0
        %v1809 = vadd.f32 %v1780, %v1808
        %1810 = vmatmul.bf16.gmra.mxu0 %v1565
        %v1811 = vpop.f32.mrf.mxu0
        %v1812 = vadd.f32 %v1783, %v1811
        %v1813 = vpop.f32.mrf.mxu0
        %v1814 = vadd.f32 %v1785, %v1813
        %1815 = vmatmul.bf16.gmra.mxu0 %v1569
        %v1816 = vpop.f32.mrf.mxu0
        %v1817 = vadd.f32 %v1788, %v1816
        %v1818 = vpop.f32.mrf.mxu0
        %v1819 = vadd.f32 %v1790, %v1818
        %1820 = vmatmul.bf16.gmra.mxu0 %v1573
        %v1821 = vpop.f32.mrf.mxu0
        %v1822 = vadd.f32 %v1793, %v1821
        %v1823 = vpop.f32.mrf.mxu0
        %v1824 = vadd.f32 %v1795, %v1823
        %1825 = vdwg.mxu0
        %1826 = vmatpush.bf16.msra.mxu0 %v1723
        %1827 = vmatpush.bf16.msra.mxu0 %v1722
        %1828 = vmatpush.bf16.msra.mxu0 %v1721
        %1829 = vmatpush.bf16.msra.mxu0 %v1720
        %1830 = vmatpush.bf16.msra.mxu0 %v1719
        %1831 = vmatpush.bf16.msra.mxu0 %v1718
        %1832 = vmatpush.bf16.msra.mxu0 %v1717
        %1833 = vmatpush.bf16.msra.mxu0 %v1716
        %1834 = vmatmul.bf16.gmra.mxu0 %v1562
        %v1835 = vpop.f32.mrf.mxu0
        %v1836 = vadd.f32 %v1807, %v1835
        %v1837 = vpop.f32.mrf.mxu0
        %v1838 = vadd.f32 %v1809, %v1837
        %1839 = vmatmul.bf16.gmra.mxu0 %v1566
        %v1840 = vpop.f32.mrf.mxu0
        %v1841 = vadd.f32 %v1812, %v1840
        %v1842 = vpop.f32.mrf.mxu0
        %v1843 = vadd.f32 %v1814, %v1842
        %1844 = vmatmul.bf16.gmra.mxu0 %v1570
        %v1845 = vpop.f32.mrf.mxu0
        %v1846 = vadd.f32 %v1817, %v1845
        %v1847 = vpop.f32.mrf.mxu0
        %v1848 = vadd.f32 %v1819, %v1847
        %1849 = vmatmul.bf16.gmra.mxu0 %v1574
        %v1850 = vpop.f32.mrf.mxu0
        %v1851 = vadd.f32 %v1822, %v1850
        %v1852 = vpop.f32.mrf.mxu0
        %v1853 = vadd.f32 %v1824, %v1852
        %1854 = vdwg.mxu0
        %1855 = vmatpush.bf16.msra.mxu0 0
        %1856 = vmatpush.bf16.msra.mxu0 0
        %1857 = vmatpush.bf16.msra.mxu0 0
        %1858 = vmatpush.bf16.msra.mxu0 0
        %1859 = vmatpush.bf16.msra.mxu0 %v1727
        %1860 = vmatpush.bf16.msra.mxu0 %v1726
        %1861 = vmatpush.bf16.msra.mxu0 %v1725
        %1862 = vmatpush.bf16.msra.mxu0 %v1724
        %1863 = vmatmul.bf16.gmra.mxu0 %v1757
        %v1864 = vpop.f32.mrf.mxu0
        %v1865 = vadd.f32 %v1836, %v1864
        %v1866 = vpop.f32.mrf.mxu0
        %v1867 = vadd.f32 %v1838, %v1866
        %1868 = vmatmul.bf16.gmra.mxu0 %v1760
        %v1869 = vpop.f32.mrf.mxu0
        %v1870 = vadd.f32 %v1841, %v1869
        %v1871 = vpop.f32.mrf.mxu0
        %v1872 = vadd.f32 %v1843, %v1871
        %1873 = vmatmul.bf16.gmra.mxu0 %v1763
        %v1874 = vpop.f32.mrf.mxu0
        %v1875 = vadd.f32 %v1846, %v1874
        %v1876 = vpop.f32.mrf.mxu0
        %v1877 = vadd.f32 %v1848, %v1876
        %1878 = vmatmul.bf16.gmra.mxu0 %v1766
        %v1879 = vpop.f32.mrf.mxu0
        %v1880 = vadd.f32 %v1851, %v1879
        %v1881 = vpop.f32.mrf.mxu0
        %v1882 = vadd.f32 %v1853, %v1881
        %1883 = vdwg.mxu0
        %s1884 = scalar_lea.vmem %s382, 64 [#allocation8]
        %1885 = vst.msk [vmem:[%s1884] sm:$0xff] %vm1300, %v1865
        %1886 = vst.msk [vmem:[%s1884 + $0x8] sm:$0xff] %vm1300, %v1867
        %1887 = vst.msk [vmem:[%s1884 + $0x10] sm:$0xff] %vm1300, %v1870
        %1888 = vst.msk [vmem:[%s1884 + $0x18] sm:$0xff] %vm1300, %v1872
        %1889 = vst.msk [vmem:[%s1884 + $0x20] sm:$0xff] %vm1300, %v1875
        %1890 = vst.msk [vmem:[%s1884 + $0x28] sm:$0xff] %vm1300, %v1877
        %1891 = vst.msk [vmem:[%s1884 + $0x30] sm:$0xff] %vm1300, %v1880
        %1892 = vst.msk [vmem:[%s1884 + $0x38] sm:$0xff] %vm1300, %v1882
        %s1893 = scalar_lea.vmem [#allocation7], 256
        %v1894 = vld [vmem:[%s1893] sm:$0xff]
        %v1895 = vld [vmem:[%s1893 + $0x8] sm:$0xff]
        %v1896 = vld [vmem:[%s1893 + $0x10] sm:$0xff]
        %v1897 = vld [vmem:[%s1893 + $0x18] sm:$0xff]
        %v1898 = vld [vmem:[%s1893 + $0x20] sm:$0xff]
        %v1899 = vld [vmem:[%s1893 + $0x28] sm:$0xff]
        %v1900 = vld [vmem:[%s1893 + $0x30] sm:$0xff]
        %v1901 = vld [vmem:[%s1893 + $0x38] sm:$0xff]
        %v1902 = vld [vmem:[%s1893 + $0x40] sm:$0xff]
        %v1903 = vld [vmem:[%s1893 + $0x48] sm:$0xff]
        %v1904 = vld [vmem:[%s1893 + $0x50] sm:$0xff]
        %v1905 = vld [vmem:[%s1893 + $0x58] sm:$0xff]
        %v1906 = vld [vmem:[%s1893 + $0x60] sm:$0xff]
        %v1907 = vld [vmem:[%s1893 + $0x68] sm:$0xff]
        %v1908 = vld [vmem:[%s1893 + $0x70] sm:$0xff]
        %v1909 = vld [vmem:[%s1893 + $0x78] sm:$0xff]
        %v1910 = vld [vmem:[#allocation2] sm:$0xf]
        %v1911 = vld [vmem:[#allocation2 + $0x4] sm:$0xf]
        %v1912 = vld [vmem:[#allocation2 + $0x8] sm:$0xf]
        %v1913 = vld [vmem:[#allocation2 + $0xc] sm:$0xf]
        %v1914 = vld [vmem:[#allocation2 + $0x10] sm:$0xf]
        %v1915 = vld [vmem:[#allocation2 + $0x14] sm:$0xf]
        %v1916 = vld [vmem:[#allocation2 + $0x18] sm:$0xf]
        %v1917 = vld [vmem:[#allocation2 + $0x1c] sm:$0xf]
        %v1918 = vld [vmem:[#allocation2 + $0x20] sm:$0xf]
        %v1919 = vld [vmem:[#allocation2 + $0x24] sm:$0xf]
        %v1920 = vld [vmem:[#allocation2 + $0x28] sm:$0xf]
        %v1921 = vld [vmem:[#allocation2 + $0x2c] sm:$0xf]
        %v1922 = vld [vmem:[#allocation2 + $0x30] sm:$0xf]
        %v1923 = vld [vmem:[#allocation2 + $0x34] sm:$0xf]
        %v1924 = vld [vmem:[#allocation2 + $0x38] sm:$0xf]
        %v1925 = vld [vmem:[#allocation2 + $0x3c] sm:$0xf]
        %v1926 = vld [vmem:[#allocation2 + $0x40] sm:$0xf]
        %v1927 = vld [vmem:[#allocation2 + $0x44] sm:$0xf]
        %v1928 = vld [vmem:[#allocation2 + $0x48] sm:$0xf]
        %v1929 = vld [vmem:[#allocation2 + $0x4c] sm:$0xf]
        %v1930 = vld [vmem:[#allocation2 + $0x50] sm:$0xf]
        %v1931 = vld [vmem:[#allocation2 + $0x54] sm:$0xf]
        %v1932 = vld [vmem:[#allocation2 + $0x58] sm:$0xf]
        %v1933 = vld [vmem:[#allocation2 + $0x5c] sm:$0xf]
        %v1934 = vld [vmem:[#allocation2 + $0x60] sm:$0xf]
        %v1935 = vld [vmem:[#allocation2 + $0x64] sm:$0xf]
        %v1936 = vld [vmem:[#allocation2 + $0x68] sm:$0xf]
        %v1937 = vld [vmem:[#allocation2 + $0x6c] sm:$0xf]
        %v1938 = vld [vmem:[#allocation2 + $0x70] sm:$0xf]
        %v1939 = vld [vmem:[#allocation2 + $0x74] sm:$0xf]
        %v1940 = vld [vmem:[#allocation2 + $0x78] sm:$0xf]
        %v1941 = vld [vmem:[#allocation2 + $0x7c] sm:$0xf]
        %v1942 = vld [vmem:[#allocation2 + $0x80] sm:$0xf]
        %v1943 = vld [vmem:[#allocation2 + $0x84] sm:$0xf]
        %v1944 = vld [vmem:[#allocation2 + $0x88] sm:$0xf]
        %v1945 = vld [vmem:[#allocation2 + $0x8c] sm:$0xf]
        %v1946 = vld [vmem:[#allocation2 + $0x90] sm:$0xf]
        %v1947 = vld [vmem:[#allocation2 + $0x94] sm:$0xf]
        %v1948 = vld [vmem:[#allocation2 + $0x98] sm:$0xf]
        %v1949 = vld [vmem:[#allocation2 + $0x9c] sm:$0xf]
        %v1950 = vld [vmem:[#allocation2 + $0xa0] sm:$0xf]
        %v1951 = vld [vmem:[#allocation2 + $0xa4] sm:$0xf]
        %v1952 = vld [vmem:[#allocation2 + $0xa8] sm:$0xf]
        %v1953 = vld [vmem:[#allocation2 + $0xac] sm:$0xf]
        %v1954 = vld [vmem:[#allocation2 + $0xb0] sm:$0xf]
        %v1955 = vld [vmem:[#allocation2 + $0xb4] sm:$0xf]
        %v1956 = vld [vmem:[#allocation2 + $0xb8] sm:$0xf]
        %v1957 = vld [vmem:[#allocation2 + $0xbc] sm:$0xf]
        %v1958 = vld [vmem:[#allocation2 + $0xc0] sm:$0xf]
        %v1959 = vld [vmem:[#allocation2 + $0xc4] sm:$0xf]
        %v1960 = vld [vmem:[#allocation2 + $0xc8] sm:$0xf]
        %v1961 = vld [vmem:[#allocation2 + $0xcc] sm:$0xf]
        %v1962 = vld [vmem:[#allocation2 + $0xd0] sm:$0xf]
        %v1963 = vld [vmem:[#allocation2 + $0xd4] sm:$0xf]
        %v1964 = vld [vmem:[#allocation2 + $0xd8] sm:$0xf]
        %v1965 = vld [vmem:[#allocation2 + $0xdc] sm:$0xf]
        %s1966 = sld [smem:[#allocation3 + $0x2]]
        %v1967 = vstv %s1966
        %v1984 = vunpack.c.l.b16 %v1894
        %v1985 = vunpack.c.h.b16 %v1894
        %v1986 = vunpack.c.l.b16 %v1895
        %v1987 = vunpack.c.h.b16 %v1895
        %v1988 = vunpack.c.l.b16 %v1896
        %v1989 = vunpack.c.h.b16 %v1896
        %v1990 = vunpack.c.l.b16 %v1897
        %v1991 = vunpack.c.h.b16 %v1897
        %v1992 = vunpack.c.l.b16 %v1898
        %v1993 = vunpack.c.h.b16 %v1898
        %v1994 = vunpack.c.l.b16 %v1899
        %v1995 = vunpack.c.h.b16 %v1899
        %v1996 = vunpack.c.l.b16 %v1900
        %v1997 = vunpack.c.h.b16 %v1900
        %v1998 = vunpack.c.l.b16 %v1901
        %v1999 = vunpack.c.h.b16 %v1901
        %v2000 = vunpack.c.l.b16 %v1902
        %v2001 = vunpack.c.h.b16 %v1902
        %v2002 = vunpack.c.l.b16 %v1903
        %v2003 = vunpack.c.h.b16 %v1903
        %v2004 = vunpack.c.l.b16 %v1904
        %v2005 = vunpack.c.h.b16 %v1904
        %v2006 = vunpack.c.l.b16 %v1905
        %v2007 = vunpack.c.h.b16 %v1905
        %v2008 = vunpack.c.l.b16 %v1906
        %v2009 = vunpack.c.h.b16 %v1906
        %v2010 = vunpack.c.l.b16 %v1907
        %v2011 = vunpack.c.h.b16 %v1907
        %v2012 = vunpack.c.l.b16 %v1908
        %v2013 = vunpack.c.h.b16 %v1908
        %v2014 = vunpack.c.l.b16 %v1909
        %v2015 = vunpack.c.h.b16 %v1909
        %v2016 = vpack.c.b16 %v1988, %v1984
        %v2017 = vpack.c.b16 %v1989, %v1985
        %v2018 = vpack.c.b16 %v1990, %v1986
        %v2019 = vpack.c.b16 %v1991, %v1987
        %v2020 = vpack.c.b16 %v1996, %v1992
        %v2021 = vpack.c.b16 %v1997, %v1993
        %v2022 = vpack.c.b16 %v1998, %v1994
        %v2023 = vpack.c.b16 %v1999, %v1995
        %v2024 = vpack.c.b16 %v2004, %v2000
        %v2025 = vpack.c.b16 %v2005, %v2001
        %v2026 = vpack.c.b16 %v2006, %v2002
        %v2027 = vpack.c.b16 %v2007, %v2003
        %v2028 = vpack.c.b16 %v2012, %v2008
        %v2029 = vpack.c.b16 %v2013, %v2009
        %v2030 = vpack.c.b16 %v2014, %v2010
        %v2031 = vpack.c.b16 %v2015, %v2011
        %v2100 = vunpack.c.l.b16 %v1910
        %v2101 = vunpack.c.l.b16 %v1911
        %v2102 = vunpack.c.l.b16 %v1912
        %v2103 = vunpack.c.l.b16 %v1913
        %v2104 = vunpack.c.l.b16 %v1914
        %v2105 = vunpack.c.l.b16 %v1915
        %v2106 = vunpack.c.l.b16 %v1916
        %v2107 = vunpack.c.l.b16 %v1917
        %v2108 = vunpack.c.l.b16 %v1918
        %v2109 = vunpack.c.l.b16 %v1919
        %v2110 = vunpack.c.l.b16 %v1920
        %v2111 = vunpack.c.l.b16 %v1921
        %v2112 = vunpack.c.l.b16 %v1922
        %v2113 = vunpack.c.l.b16 %v1923
        %v2114 = vunpack.c.l.b16 %v1924
        %v2115 = vunpack.c.l.b16 %v1925
        %v2116 = vunpack.c.l.b16 %v1926
        %v2117 = vunpack.c.l.b16 %v1927
        %v2118 = vunpack.c.l.b16 %v1928
        %v2119 = vunpack.c.l.b16 %v1929
        %v2120 = vunpack.c.l.b16 %v1930
        %v2121 = vunpack.c.l.b16 %v1931
        %v2122 = vunpack.c.l.b16 %v1932
        %v2123 = vunpack.c.l.b16 %v1933
        %v2124 = vunpack.c.l.b16 %v1934
        %v2125 = vunpack.c.l.b16 %v1935
        %v2126 = vunpack.c.l.b16 %v1936
        %v2127 = vunpack.c.l.b16 %v1937
        %v2128 = vunpack.c.l.b16 %v1938
        %v2129 = vunpack.c.l.b16 %v1939
        %v2130 = vunpack.c.l.b16 %v1940
        %v2131 = vunpack.c.l.b16 %v1941
        %v2132 = vunpack.c.l.b16 %v1942
        %v2133 = vunpack.c.l.b16 %v1943
        %v2134 = vunpack.c.l.b16 %v1944
        %v2135 = vunpack.c.l.b16 %v1945
        %v2136 = vunpack.c.l.b16 %v1946
        %v2137 = vunpack.c.l.b16 %v1947
        %v2138 = vunpack.c.l.b16 %v1948
        %v2139 = vunpack.c.l.b16 %v1949
        %v2140 = vunpack.c.l.b16 %v1950
        %v2141 = vunpack.c.l.b16 %v1951
        %v2142 = vunpack.c.l.b16 %v1952
        %v2143 = vunpack.c.l.b16 %v1953
        %v2144 = vunpack.c.l.b16 %v1954
        %v2145 = vunpack.c.l.b16 %v1955
        %v2146 = vunpack.c.l.b16 %v1956
        %v2147 = vunpack.c.l.b16 %v1957
        %v2148 = vunpack.c.l.b16 %v1958
        %v2149 = vunpack.c.l.b16 %v1959
        %v2150 = vunpack.c.l.b16 %v1960
        %v2151 = vunpack.c.l.b16 %v1961
        %v2152 = vunpack.c.l.b16 %v1962
        %v2153 = vunpack.c.l.b16 %v1963
        %v2154 = vunpack.c.l.b16 %v1964
        %v2155 = vunpack.c.l.b16 %v1965
        %v2156 = vpack.c.b16 %v2101, %v2100
        %v2157 = vpack.c.b16 %v2103, %v2102
        %v2158 = vpack.c.b16 %v2105, %v2104
        %v2159 = vpack.c.b16 %v2107, %v2106
        %v2160 = vpack.c.b16 %v2109, %v2108
        %v2161 = vpack.c.b16 %v2111, %v2110
        %v2162 = vpack.c.b16 %v2113, %v2112
        %v2163 = vpack.c.b16 %v2115, %v2114
        %v2164 = vpack.c.b16 %v2117, %v2116
        %v2165 = vpack.c.b16 %v2119, %v2118
        %v2166 = vpack.c.b16 %v2121, %v2120
        %v2167 = vpack.c.b16 %v2123, %v2122
        %v2168 = vpack.c.b16 %v2125, %v2124
        %v2169 = vpack.c.b16 %v2127, %v2126
        %v2170 = vpack.c.b16 %v2129, %v2128
        %v2171 = vpack.c.b16 %v2131, %v2130
        %v2172 = vpack.c.b16 %v2133, %v2132
        %v2173 = vpack.c.b16 %v2135, %v2134
        %v2174 = vpack.c.b16 %v2137, %v2136
        %v2175 = vpack.c.b16 %v2139, %v2138
        %v2176 = vpack.c.b16 %v2141, %v2140
        %v2177 = vpack.c.b16 %v2143, %v2142
        %v2178 = vpack.c.b16 %v2145, %v2144
        %v2179 = vpack.c.b16 %v2147, %v2146
        %v2180 = vpack.c.b16 %v2149, %v2148
        %v2181 = vpack.c.b16 %v2151, %v2150
        %v2182 = vpack.c.b16 %v2153, %v2152
        %v2183 = vpack.c.b16 %v2155, %v2154
        %v2213 = vsel %vm1300, %v2019, 0
        %v2216 = vsel %vm1300, %v2023, 0
        %v2219 = vsel %vm1300, %v2027, 0
        %v2222 = vsel %vm1300, %v2031, 0
        %2224 = vmatpush.bf16.msra.mxu0 %v2163
        %2225 = vmatpush.bf16.msra.mxu0 %v2162
        %2226 = vmatpush.bf16.msra.mxu0 %v2161
        %2227 = vmatpush.bf16.msra.mxu0 %v2160
        %2228 = vmatpush.bf16.msra.mxu0 %v2159
        %2229 = vmatpush.bf16.msra.mxu0 %v2158
        %2230 = vmatpush.bf16.msra.mxu0 %v2157
        %2231 = vmatpush.bf16.msra.mxu0 %v2156
        %2232 = vmatmul.bf16.gmra.mxu0 %v2016
        %v2233 = vpop.f32.mrf.mxu0
        %v2234 = vadd.f32 %v1967, %v2233
        %v2235 = vpop.f32.mrf.mxu0
        %v2236 = vadd.f32 %v1967, %v2235
        %2237 = vmatmul.bf16.gmra.mxu0 %v2020
        %v2238 = vpop.f32.mrf.mxu0
        %v2239 = vadd.f32 %v1967, %v2238
        %v2240 = vpop.f32.mrf.mxu0
        %v2241 = vadd.f32 %v1967, %v2240
        %2242 = vmatmul.bf16.gmra.mxu0 %v2024
        %v2243 = vpop.f32.mrf.mxu0
        %v2244 = vadd.f32 %v1967, %v2243
        %v2245 = vpop.f32.mrf.mxu0
        %v2246 = vadd.f32 %v1967, %v2245
        %2247 = vmatmul.bf16.gmra.mxu0 %v2028
        %v2248 = vpop.f32.mrf.mxu0
        %v2249 = vadd.f32 %v1967, %v2248
        %v2250 = vpop.f32.mrf.mxu0
        %v2251 = vadd.f32 %v1967, %v2250
        %2252 = vdwg.mxu0
        %2253 = vmatpush.bf16.msra.mxu0 %v2171
        %2254 = vmatpush.bf16.msra.mxu0 %v2170
        %2255 = vmatpush.bf16.msra.mxu0 %v2169
        %2256 = vmatpush.bf16.msra.mxu0 %v2168
        %2257 = vmatpush.bf16.msra.mxu0 %v2167
        %2258 = vmatpush.bf16.msra.mxu0 %v2166
        %2259 = vmatpush.bf16.msra.mxu0 %v2165
        %2260 = vmatpush.bf16.msra.mxu0 %v2164
        %2261 = vmatmul.bf16.gmra.mxu0 %v2017
        %v2262 = vpop.f32.mrf.mxu0
        %v2263 = vadd.f32 %v2234, %v2262
        %v2264 = vpop.f32.mrf.mxu0
        %v2265 = vadd.f32 %v2236, %v2264
        %2266 = vmatmul.bf16.gmra.mxu0 %v2021
        %v2267 = vpop.f32.mrf.mxu0
        %v2268 = vadd.f32 %v2239, %v2267
        %v2269 = vpop.f32.mrf.mxu0
        %v2270 = vadd.f32 %v2241, %v2269
        %2271 = vmatmul.bf16.gmra.mxu0 %v2025
        %v2272 = vpop.f32.mrf.mxu0
        %v2273 = vadd.f32 %v2244, %v2272
        %v2274 = vpop.f32.mrf.mxu0
        %v2275 = vadd.f32 %v2246, %v2274
        %2276 = vmatmul.bf16.gmra.mxu0 %v2029
        %v2277 = vpop.f32.mrf.mxu0
        %v2278 = vadd.f32 %v2249, %v2277
        %v2279 = vpop.f32.mrf.mxu0
        %v2280 = vadd.f32 %v2251, %v2279
        %2281 = vdwg.mxu0
        %2282 = vmatpush.bf16.msra.mxu0 %v2179
        %2283 = vmatpush.bf16.msra.mxu0 %v2178
        %2284 = vmatpush.bf16.msra.mxu0 %v2177
        %2285 = vmatpush.bf16.msra.mxu0 %v2176
        %2286 = vmatpush.bf16.msra.mxu0 %v2175
        %2287 = vmatpush.bf16.msra.mxu0 %v2174
        %2288 = vmatpush.bf16.msra.mxu0 %v2173
        %2289 = vmatpush.bf16.msra.mxu0 %v2172
        %2290 = vmatmul.bf16.gmra.mxu0 %v2018
        %v2291 = vpop.f32.mrf.mxu0
        %v2292 = vadd.f32 %v2263, %v2291
        %v2293 = vpop.f32.mrf.mxu0
        %v2294 = vadd.f32 %v2265, %v2293
        %2295 = vmatmul.bf16.gmra.mxu0 %v2022
        %v2296 = vpop.f32.mrf.mxu0
        %v2297 = vadd.f32 %v2268, %v2296
        %v2298 = vpop.f32.mrf.mxu0
        %v2299 = vadd.f32 %v2270, %v2298
        %2300 = vmatmul.bf16.gmra.mxu0 %v2026
        %v2301 = vpop.f32.mrf.mxu0
        %v2302 = vadd.f32 %v2273, %v2301
        %v2303 = vpop.f32.mrf.mxu0
        %v2304 = vadd.f32 %v2275, %v2303
        %2305 = vmatmul.bf16.gmra.mxu0 %v2030
        %v2306 = vpop.f32.mrf.mxu0
        %v2307 = vadd.f32 %v2278, %v2306
        %v2308 = vpop.f32.mrf.mxu0
        %v2309 = vadd.f32 %v2280, %v2308
        %2310 = vdwg.mxu0
        %2311 = vmatpush.bf16.msra.mxu0 0
        %2312 = vmatpush.bf16.msra.mxu0 0
        %2313 = vmatpush.bf16.msra.mxu0 0
        %2314 = vmatpush.bf16.msra.mxu0 0
        %2315 = vmatpush.bf16.msra.mxu0 %v2183
        %2316 = vmatpush.bf16.msra.mxu0 %v2182
        %2317 = vmatpush.bf16.msra.mxu0 %v2181
        %2318 = vmatpush.bf16.msra.mxu0 %v2180
        %2319 = vmatmul.bf16.gmra.mxu0 %v2213
        %v2320 = vpop.f32.mrf.mxu0
        %v2321 = vadd.f32 %v2292, %v2320
        %v2322 = vpop.f32.mrf.mxu0
        %v2323 = vadd.f32 %v2294, %v2322
        %2324 = vmatmul.bf16.gmra.mxu0 %v2216
        %v2325 = vpop.f32.mrf.mxu0
        %v2326 = vadd.f32 %v2297, %v2325
        %v2327 = vpop.f32.mrf.mxu0
        %v2328 = vadd.f32 %v2299, %v2327
        %2329 = vmatmul.bf16.gmra.mxu0 %v2219
        %v2330 = vpop.f32.mrf.mxu0
        %v2331 = vadd.f32 %v2302, %v2330
        %v2332 = vpop.f32.mrf.mxu0
        %v2333 = vadd.f32 %v2304, %v2332
        %2334 = vmatmul.bf16.gmra.mxu0 %v2222
        %v2335 = vpop.f32.mrf.mxu0
        %v2336 = vadd.f32 %v2307, %v2335
        %v2337 = vpop.f32.mrf.mxu0
        %v2338 = vadd.f32 %v2309, %v2337
        %2339 = vdwg.mxu0
        %s2340 = scalar_lea.vmem %s382, 128 [#allocation8]
        %2341 = vst.msk [vmem:[%s2340] sm:$0xff] %vm1300, %v2321
        %2342 = vst.msk [vmem:[%s2340 + $0x8] sm:$0xff] %vm1300, %v2323
        %2343 = vst.msk [vmem:[%s2340 + $0x10] sm:$0xff] %vm1300, %v2326
        %2344 = vst.msk [vmem:[%s2340 + $0x18] sm:$0xff] %vm1300, %v2328
        %2345 = vst.msk [vmem:[%s2340 + $0x20] sm:$0xff] %vm1300, %v2331
        %2346 = vst.msk [vmem:[%s2340 + $0x28] sm:$0xff] %vm1300, %v2333
        %2347 = vst.msk [vmem:[%s2340 + $0x30] sm:$0xff] %vm1300, %v2336
        %2348 = vst.msk [vmem:[%s2340 + $0x38] sm:$0xff] %vm1300, %v2338
        %s2349 = scalar_lea.vmem [#allocation7], 384
        %v2350 = vld [vmem:[%s2349] sm:$0xff]
        %v2351 = vld [vmem:[%s2349 + $0x8] sm:$0xff]
        %v2352 = vld [vmem:[%s2349 + $0x10] sm:$0xff]
        %v2353 = vld [vmem:[%s2349 + $0x18] sm:$0xff]
        %v2354 = vld [vmem:[%s2349 + $0x20] sm:$0xff]
        %v2355 = vld [vmem:[%s2349 + $0x28] sm:$0xff]
        %v2356 = vld [vmem:[%s2349 + $0x30] sm:$0xff]
        %v2357 = vld [vmem:[%s2349 + $0x38] sm:$0xff]
        %v2358 = vld [vmem:[%s2349 + $0x40] sm:$0xff]
        %v2359 = vld [vmem:[%s2349 + $0x48] sm:$0xff]
        %v2360 = vld [vmem:[%s2349 + $0x50] sm:$0xff]
        %v2361 = vld [vmem:[%s2349 + $0x58] sm:$0xff]
        %v2362 = vld [vmem:[%s2349 + $0x60] sm:$0xff]
        %v2363 = vld [vmem:[%s2349 + $0x68] sm:$0xff]
        %v2364 = vld [vmem:[%s2349 + $0x70] sm:$0xff]
        %v2365 = vld [vmem:[%s2349 + $0x78] sm:$0xff]
        %v2366 = vld [vmem:[#allocation2] sm:$0xf]
        %v2367 = vld [vmem:[#allocation2 + $0x4] sm:$0xf]
        %v2368 = vld [vmem:[#allocation2 + $0x8] sm:$0xf]
        %v2369 = vld [vmem:[#allocation2 + $0xc] sm:$0xf]
        %v2370 = vld [vmem:[#allocation2 + $0x10] sm:$0xf]
        %v2371 = vld [vmem:[#allocation2 + $0x14] sm:$0xf]
        %v2372 = vld [vmem:[#allocation2 + $0x18] sm:$0xf]
        %v2373 = vld [vmem:[#allocation2 + $0x1c] sm:$0xf]
        %v2374 = vld [vmem:[#allocation2 + $0x20] sm:$0xf]
        %v2375 = vld [vmem:[#allocation2 + $0x24] sm:$0xf]
        %v2376 = vld [vmem:[#allocation2 + $0x28] sm:$0xf]
        %v2377 = vld [vmem:[#allocation2 + $0x2c] sm:$0xf]
        %v2378 = vld [vmem:[#allocation2 + $0x30] sm:$0xf]
        %v2379 = vld [vmem:[#allocation2 + $0x34] sm:$0xf]
        %v2380 = vld [vmem:[#allocation2 + $0x38] sm:$0xf]
        %v2381 = vld [vmem:[#allocation2 + $0x3c] sm:$0xf]
        %v2382 = vld [vmem:[#allocation2 + $0x40] sm:$0xf]
        %v2383 = vld [vmem:[#allocation2 + $0x44] sm:$0xf]
        %v2384 = vld [vmem:[#allocation2 + $0x48] sm:$0xf]
        %v2385 = vld [vmem:[#allocation2 + $0x4c] sm:$0xf]
        %v2386 = vld [vmem:[#allocation2 + $0x50] sm:$0xf]
        %v2387 = vld [vmem:[#allocation2 + $0x54] sm:$0xf]
        %v2388 = vld [vmem:[#allocation2 + $0x58] sm:$0xf]
        %v2389 = vld [vmem:[#allocation2 + $0x5c] sm:$0xf]
        %v2390 = vld [vmem:[#allocation2 + $0x60] sm:$0xf]
        %v2391 = vld [vmem:[#allocation2 + $0x64] sm:$0xf]
        %v2392 = vld [vmem:[#allocation2 + $0x68] sm:$0xf]
        %v2393 = vld [vmem:[#allocation2 + $0x6c] sm:$0xf]
        %v2394 = vld [vmem:[#allocation2 + $0x70] sm:$0xf]
        %v2395 = vld [vmem:[#allocation2 + $0x74] sm:$0xf]
        %v2396 = vld [vmem:[#allocation2 + $0x78] sm:$0xf]
        %v2397 = vld [vmem:[#allocation2 + $0x7c] sm:$0xf]
        %v2398 = vld [vmem:[#allocation2 + $0x80] sm:$0xf]
        %v2399 = vld [vmem:[#allocation2 + $0x84] sm:$0xf]
        %v2400 = vld [vmem:[#allocation2 + $0x88] sm:$0xf]
        %v2401 = vld [vmem:[#allocation2 + $0x8c] sm:$0xf]
        %v2402 = vld [vmem:[#allocation2 + $0x90] sm:$0xf]
        %v2403 = vld [vmem:[#allocation2 + $0x94] sm:$0xf]
        %v2404 = vld [vmem:[#allocation2 + $0x98] sm:$0xf]
        %v2405 = vld [vmem:[#allocation2 + $0x9c] sm:$0xf]
        %v2406 = vld [vmem:[#allocation2 + $0xa0] sm:$0xf]
        %v2407 = vld [vmem:[#allocation2 + $0xa4] sm:$0xf]
        %v2408 = vld [vmem:[#allocation2 + $0xa8] sm:$0xf]
        %v2409 = vld [vmem:[#allocation2 + $0xac] sm:$0xf]
        %v2410 = vld [vmem:[#allocation2 + $0xb0] sm:$0xf]
        %v2411 = vld [vmem:[#allocation2 + $0xb4] sm:$0xf]
        %v2412 = vld [vmem:[#allocation2 + $0xb8] sm:$0xf]
        %v2413 = vld [vmem:[#allocation2 + $0xbc] sm:$0xf]
        %v2414 = vld [vmem:[#allocation2 + $0xc0] sm:$0xf]
        %v2415 = vld [vmem:[#allocation2 + $0xc4] sm:$0xf]
        %v2416 = vld [vmem:[#allocation2 + $0xc8] sm:$0xf]
        %v2417 = vld [vmem:[#allocation2 + $0xcc] sm:$0xf]
        %v2418 = vld [vmem:[#allocation2 + $0xd0] sm:$0xf]
        %v2419 = vld [vmem:[#allocation2 + $0xd4] sm:$0xf]
        %v2420 = vld [vmem:[#allocation2 + $0xd8] sm:$0xf]
        %v2421 = vld [vmem:[#allocation2 + $0xdc] sm:$0xf]
        %s2422 = sld [smem:[#allocation3 + $0x3]]
        %v2423 = vstv %s2422
        %v2440 = vunpack.c.l.b16 %v2350
        %v2441 = vunpack.c.h.b16 %v2350
        %v2442 = vunpack.c.l.b16 %v2351
        %v2443 = vunpack.c.h.b16 %v2351
        %v2444 = vunpack.c.l.b16 %v2352
        %v2445 = vunpack.c.h.b16 %v2352
        %v2446 = vunpack.c.l.b16 %v2353
        %v2447 = vunpack.c.h.b16 %v2353
        %v2448 = vunpack.c.l.b16 %v2354
        %v2449 = vunpack.c.h.b16 %v2354
        %v2450 = vunpack.c.l.b16 %v2355
        %v2451 = vunpack.c.h.b16 %v2355
        %v2452 = vunpack.c.l.b16 %v2356
        %v2453 = vunpack.c.h.b16 %v2356
        %v2454 = vunpack.c.l.b16 %v2357
        %v2455 = vunpack.c.h.b16 %v2357
        %v2456 = vunpack.c.l.b16 %v2358
        %v2457 = vunpack.c.h.b16 %v2358
        %v2458 = vunpack.c.l.b16 %v2359
        %v2459 = vunpack.c.h.b16 %v2359
        %v2460 = vunpack.c.l.b16 %v2360
        %v2461 = vunpack.c.h.b16 %v2360
        %v2462 = vunpack.c.l.b16 %v2361
        %v2463 = vunpack.c.h.b16 %v2361
        %v2464 = vunpack.c.l.b16 %v2362
        %v2465 = vunpack.c.h.b16 %v2362
        %v2466 = vunpack.c.l.b16 %v2363
        %v2467 = vunpack.c.h.b16 %v2363
        %v2468 = vunpack.c.l.b16 %v2364
        %v2469 = vunpack.c.h.b16 %v2364
        %v2470 = vunpack.c.l.b16 %v2365
        %v2471 = vunpack.c.h.b16 %v2365
        %v2472 = vpack.c.b16 %v2444, %v2440
        %v2473 = vpack.c.b16 %v2445, %v2441
        %v2474 = vpack.c.b16 %v2446, %v2442
        %v2475 = vpack.c.b16 %v2447, %v2443
        %v2476 = vpack.c.b16 %v2452, %v2448
        %v2477 = vpack.c.b16 %v2453, %v2449
        %v2478 = vpack.c.b16 %v2454, %v2450
        %v2479 = vpack.c.b16 %v2455, %v2451
        %v2480 = vpack.c.b16 %v2460, %v2456
        %v2481 = vpack.c.b16 %v2461, %v2457
        %v2482 = vpack.c.b16 %v2462, %v2458
        %v2483 = vpack.c.b16 %v2463, %v2459
        %v2484 = vpack.c.b16 %v2468, %v2464
        %v2485 = vpack.c.b16 %v2469, %v2465
        %v2486 = vpack.c.b16 %v2470, %v2466
        %v2487 = vpack.c.b16 %v2471, %v2467
        %v2556 = vunpack.c.l.b16 %v2366
        %v2557 = vunpack.c.l.b16 %v2367
        %v2558 = vunpack.c.l.b16 %v2368
        %v2559 = vunpack.c.l.b16 %v2369
        %v2560 = vunpack.c.l.b16 %v2370
        %v2561 = vunpack.c.l.b16 %v2371
        %v2562 = vunpack.c.l.b16 %v2372
        %v2563 = vunpack.c.l.b16 %v2373
        %v2564 = vunpack.c.l.b16 %v2374
        %v2565 = vunpack.c.l.b16 %v2375
        %v2566 = vunpack.c.l.b16 %v2376
        %v2567 = vunpack.c.l.b16 %v2377
        %v2568 = vunpack.c.l.b16 %v2378
        %v2569 = vunpack.c.l.b16 %v2379
        %v2570 = vunpack.c.l.b16 %v2380
        %v2571 = vunpack.c.l.b16 %v2381
        %v2572 = vunpack.c.l.b16 %v2382
        %v2573 = vunpack.c.l.b16 %v2383
        %v2574 = vunpack.c.l.b16 %v2384
        %v2575 = vunpack.c.l.b16 %v2385
        %v2576 = vunpack.c.l.b16 %v2386
        %v2577 = vunpack.c.l.b16 %v2387
        %v2578 = vunpack.c.l.b16 %v2388
        %v2579 = vunpack.c.l.b16 %v2389
        %v2580 = vunpack.c.l.b16 %v2390
        %v2581 = vunpack.c.l.b16 %v2391
        %v2582 = vunpack.c.l.b16 %v2392
        %v2583 = vunpack.c.l.b16 %v2393
        %v2584 = vunpack.c.l.b16 %v2394
        %v2585 = vunpack.c.l.b16 %v2395
        %v2586 = vunpack.c.l.b16 %v2396
        %v2587 = vunpack.c.l.b16 %v2397
        %v2588 = vunpack.c.l.b16 %v2398
        %v2589 = vunpack.c.l.b16 %v2399
        %v2590 = vunpack.c.l.b16 %v2400
        %v2591 = vunpack.c.l.b16 %v2401
        %v2592 = vunpack.c.l.b16 %v2402
        %v2593 = vunpack.c.l.b16 %v2403
        %v2594 = vunpack.c.l.b16 %v2404
        %v2595 = vunpack.c.l.b16 %v2405
        %v2596 = vunpack.c.l.b16 %v2406
        %v2597 = vunpack.c.l.b16 %v2407
        %v2598 = vunpack.c.l.b16 %v2408
        %v2599 = vunpack.c.l.b16 %v2409
        %v2600 = vunpack.c.l.b16 %v2410
        %v2601 = vunpack.c.l.b16 %v2411
        %v2602 = vunpack.c.l.b16 %v2412
        %v2603 = vunpack.c.l.b16 %v2413
        %v2604 = vunpack.c.l.b16 %v2414
        %v2605 = vunpack.c.l.b16 %v2415
        %v2606 = vunpack.c.l.b16 %v2416
        %v2607 = vunpack.c.l.b16 %v2417
        %v2608 = vunpack.c.l.b16 %v2418
        %v2609 = vunpack.c.l.b16 %v2419
        %v2610 = vunpack.c.l.b16 %v2420
        %v2611 = vunpack.c.l.b16 %v2421
        %v2612 = vpack.c.b16 %v2557, %v2556
        %v2613 = vpack.c.b16 %v2559, %v2558
        %v2614 = vpack.c.b16 %v2561, %v2560
        %v2615 = vpack.c.b16 %v2563, %v2562
        %v2616 = vpack.c.b16 %v2565, %v2564
        %v2617 = vpack.c.b16 %v2567, %v2566
        %v2618 = vpack.c.b16 %v2569, %v2568
        %v2619 = vpack.c.b16 %v2571, %v2570
        %v2620 = vpack.c.b16 %v2573, %v2572
        %v2621 = vpack.c.b16 %v2575, %v2574
        %v2622 = vpack.c.b16 %v2577, %v2576
        %v2623 = vpack.c.b16 %v2579, %v2578
        %v2624 = vpack.c.b16 %v2581, %v2580
        %v2625 = vpack.c.b16 %v2583, %v2582
        %v2626 = vpack.c.b16 %v2585, %v2584
        %v2627 = vpack.c.b16 %v2587, %v2586
        %v2628 = vpack.c.b16 %v2589, %v2588
        %v2629 = vpack.c.b16 %v2591, %v2590
        %v2630 = vpack.c.b16 %v2593, %v2592
        %v2631 = vpack.c.b16 %v2595, %v2594
        %v2632 = vpack.c.b16 %v2597, %v2596
        %v2633 = vpack.c.b16 %v2599, %v2598
        %v2634 = vpack.c.b16 %v2601, %v2600
        %v2635 = vpack.c.b16 %v2603, %v2602
        %v2636 = vpack.c.b16 %v2605, %v2604
        %v2637 = vpack.c.b16 %v2607, %v2606
        %v2638 = vpack.c.b16 %v2609, %v2608
        %v2639 = vpack.c.b16 %v2611, %v2610
        %v2669 = vsel %vm1300, %v2475, 0
        %v2672 = vsel %vm1300, %v2479, 0
        %v2675 = vsel %vm1300, %v2483, 0
        %v2678 = vsel %vm1300, %v2487, 0
        %2680 = vmatpush.bf16.msra.mxu0 %v2619
        %2681 = vmatpush.bf16.msra.mxu0 %v2618
        %2682 = vmatpush.bf16.msra.mxu0 %v2617
        %2683 = vmatpush.bf16.msra.mxu0 %v2616
        %2684 = vmatpush.bf16.msra.mxu0 %v2615
        %2685 = vmatpush.bf16.msra.mxu0 %v2614
        %2686 = vmatpush.bf16.msra.mxu0 %v2613
        %2687 = vmatpush.bf16.msra.mxu0 %v2612
        %2688 = vmatmul.bf16.gmra.mxu0 %v2472
        %v2689 = vpop.f32.mrf.mxu0
        %v2690 = vadd.f32 %v2423, %v2689
        %v2691 = vpop.f32.mrf.mxu0
        %v2692 = vadd.f32 %v2423, %v2691
        %2693 = vmatmul.bf16.gmra.mxu0 %v2476
        %v2694 = vpop.f32.mrf.mxu0
        %v2695 = vadd.f32 %v2423, %v2694
        %v2696 = vpop.f32.mrf.mxu0
        %v2697 = vadd.f32 %v2423, %v2696
        %2698 = vmatmul.bf16.gmra.mxu0 %v2480
        %v2699 = vpop.f32.mrf.mxu0
        %v2700 = vadd.f32 %v2423, %v2699
        %v2701 = vpop.f32.mrf.mxu0
        %v2702 = vadd.f32 %v2423, %v2701
        %2703 = vmatmul.bf16.gmra.mxu0 %v2484
        %v2704 = vpop.f32.mrf.mxu0
        %v2705 = vadd.f32 %v2423, %v2704
        %v2706 = vpop.f32.mrf.mxu0
        %v2707 = vadd.f32 %v2423, %v2706
        %2708 = vdwg.mxu0
        %2709 = vmatpush.bf16.msra.mxu0 %v2627
        %2710 = vmatpush.bf16.msra.mxu0 %v2626
        %2711 = vmatpush.bf16.msra.mxu0 %v2625
        %2712 = vmatpush.bf16.msra.mxu0 %v2624
        %2713 = vmatpush.bf16.msra.mxu0 %v2623
        %2714 = vmatpush.bf16.msra.mxu0 %v2622
        %2715 = vmatpush.bf16.msra.mxu0 %v2621
        %2716 = vmatpush.bf16.msra.mxu0 %v2620
        %2717 = vmatmul.bf16.gmra.mxu0 %v2473
        %v2718 = vpop.f32.mrf.mxu0
        %v2719 = vadd.f32 %v2690, %v2718
        %v2720 = vpop.f32.mrf.mxu0
        %v2721 = vadd.f32 %v2692, %v2720
        %2722 = vmatmul.bf16.gmra.mxu0 %v2477
        %v2723 = vpop.f32.mrf.mxu0
        %v2724 = vadd.f32 %v2695, %v2723
        %v2725 = vpop.f32.mrf.mxu0
        %v2726 = vadd.f32 %v2697, %v2725
        %2727 = vmatmul.bf16.gmra.mxu0 %v2481
        %v2728 = vpop.f32.mrf.mxu0
        %v2729 = vadd.f32 %v2700, %v2728
        %v2730 = vpop.f32.mrf.mxu0
        %v2731 = vadd.f32 %v2702, %v2730
        %2732 = vmatmul.bf16.gmra.mxu0 %v2485
        %v2733 = vpop.f32.mrf.mxu0
        %v2734 = vadd.f32 %v2705, %v2733
        %v2735 = vpop.f32.mrf.mxu0
        %v2736 = vadd.f32 %v2707, %v2735
        %2737 = vdwg.mxu0
        %2738 = vmatpush.bf16.msra.mxu0 %v2635
        %2739 = vmatpush.bf16.msra.mxu0 %v2634
        %2740 = vmatpush.bf16.msra.mxu0 %v2633
        %2741 = vmatpush.bf16.msra.mxu0 %v2632
        %2742 = vmatpush.bf16.msra.mxu0 %v2631
        %2743 = vmatpush.bf16.msra.mxu0 %v2630
        %2744 = vmatpush.bf16.msra.mxu0 %v2629
        %2745 = vmatpush.bf16.msra.mxu0 %v2628
        %2746 = vmatmul.bf16.gmra.mxu0 %v2474
        %v2747 = vpop.f32.mrf.mxu0
        %v2748 = vadd.f32 %v2719, %v2747
        %v2749 = vpop.f32.mrf.mxu0
        %v2750 = vadd.f32 %v2721, %v2749
        %2751 = vmatmul.bf16.gmra.mxu0 %v2478
        %v2752 = vpop.f32.mrf.mxu0
        %v2753 = vadd.f32 %v2724, %v2752
        %v2754 = vpop.f32.mrf.mxu0
        %v2755 = vadd.f32 %v2726, %v2754
        %2756 = vmatmul.bf16.gmra.mxu0 %v2482
        %v2757 = vpop.f32.mrf.mxu0
        %v2758 = vadd.f32 %v2729, %v2757
        %v2759 = vpop.f32.mrf.mxu0
        %v2760 = vadd.f32 %v2731, %v2759
        %2761 = vmatmul.bf16.gmra.mxu0 %v2486
        %v2762 = vpop.f32.mrf.mxu0
        %v2763 = vadd.f32 %v2734, %v2762
        %v2764 = vpop.f32.mrf.mxu0
        %v2765 = vadd.f32 %v2736, %v2764
        %2766 = vdwg.mxu0
        %2767 = vmatpush.bf16.msra.mxu0 0
        %2768 = vmatpush.bf16.msra.mxu0 0
        %2769 = vmatpush.bf16.msra.mxu0 0
        %2770 = vmatpush.bf16.msra.mxu0 0
        %2771 = vmatpush.bf16.msra.mxu0 %v2639
        %2772 = vmatpush.bf16.msra.mxu0 %v2638
        %2773 = vmatpush.bf16.msra.mxu0 %v2637
        %2774 = vmatpush.bf16.msra.mxu0 %v2636
        %2775 = vmatmul.bf16.gmra.mxu0 %v2669
        %v2776 = vpop.f32.mrf.mxu0
        %v2777 = vadd.f32 %v2748, %v2776
        %v2778 = vpop.f32.mrf.mxu0
        %v2779 = vadd.f32 %v2750, %v2778
        %2780 = vmatmul.bf16.gmra.mxu0 %v2672
        %v2781 = vpop.f32.mrf.mxu0
        %v2782 = vadd.f32 %v2753, %v2781
        %v2783 = vpop.f32.mrf.mxu0
        %v2784 = vadd.f32 %v2755, %v2783
        %2785 = vmatmul.bf16.gmra.mxu0 %v2675
        %v2786 = vpop.f32.mrf.mxu0
        %v2787 = vadd.f32 %v2758, %v2786
        %v2788 = vpop.f32.mrf.mxu0
        %v2789 = vadd.f32 %v2760, %v2788
        %2790 = vmatmul.bf16.gmra.mxu0 %v2678
        %v2791 = vpop.f32.mrf.mxu0
        %v2792 = vadd.f32 %v2763, %v2791
        %v2793 = vpop.f32.mrf.mxu0
        %v2794 = vadd.f32 %v2765, %v2793
        %2795 = vdwg.mxu0
        %s2796 = scalar_lea.vmem %s382, 192 [#allocation8]
        %2797 = vst.msk [vmem:[%s2796] sm:$0xff] %vm1300, %v2777
        %2798 = vst.msk [vmem:[%s2796 + $0x8] sm:$0xff] %vm1300, %v2779
        %2799 = vst.msk [vmem:[%s2796 + $0x10] sm:$0xff] %vm1300, %v2782
        %2800 = vst.msk [vmem:[%s2796 + $0x18] sm:$0xff] %vm1300, %v2784
        %2801 = vst.msk [vmem:[%s2796 + $0x20] sm:$0xff] %vm1300, %v2787
        %2802 = vst.msk [vmem:[%s2796 + $0x28] sm:$0xff] %vm1300, %v2789
        %2803 = vst.msk [vmem:[%s2796 + $0x30] sm:$0xff] %vm1300, %v2792
        %2804 = vst.msk [vmem:[%s2796 + $0x38] sm:$0xff] %vm1300, %v2794
        %s2805 = scalar_lea.vmem [#allocation7], 512
        %v2806 = vld [vmem:[%s2805] sm:$0xff]
        %v2807 = vld [vmem:[%s2805 + $0x8] sm:$0xff]
        %v2808 = vld [vmem:[%s2805 + $0x10] sm:$0xff]
        %v2809 = vld [vmem:[%s2805 + $0x18] sm:$0xff]
        %v2810 = vld [vmem:[%s2805 + $0x20] sm:$0xff]
        %v2811 = vld [vmem:[%s2805 + $0x28] sm:$0xff]
        %v2812 = vld [vmem:[%s2805 + $0x30] sm:$0xff]
        %v2813 = vld [vmem:[%s2805 + $0x38] sm:$0xff]
        %v2814 = vld [vmem:[%s2805 + $0x40] sm:$0xff]
        %v2815 = vld [vmem:[%s2805 + $0x48] sm:$0xff]
        %v2816 = vld [vmem:[%s2805 + $0x50] sm:$0xff]
        %v2817 = vld [vmem:[%s2805 + $0x58] sm:$0xff]
        %v2818 = vld [vmem:[%s2805 + $0x60] sm:$0xff]
        %v2819 = vld [vmem:[%s2805 + $0x68] sm:$0xff]
        %v2820 = vld [vmem:[%s2805 + $0x70] sm:$0xff]
        %v2821 = vld [vmem:[%s2805 + $0x78] sm:$0xff]
        %v2822 = vld [vmem:[#allocation2] sm:$0xf]
        %v2823 = vld [vmem:[#allocation2 + $0x4] sm:$0xf]
        %v2824 = vld [vmem:[#allocation2 + $0x8] sm:$0xf]
        %v2825 = vld [vmem:[#allocation2 + $0xc] sm:$0xf]
        %v2826 = vld [vmem:[#allocation2 + $0x10] sm:$0xf]
        %v2827 = vld [vmem:[#allocation2 + $0x14] sm:$0xf]
        %v2828 = vld [vmem:[#allocation2 + $0x18] sm:$0xf]
        %v2829 = vld [vmem:[#allocation2 + $0x1c] sm:$0xf]
        %v2830 = vld [vmem:[#allocation2 + $0x20] sm:$0xf]
        %v2831 = vld [vmem:[#allocation2 + $0x24] sm:$0xf]
        %v2832 = vld [vmem:[#allocation2 + $0x28] sm:$0xf]
        %v2833 = vld [vmem:[#allocation2 + $0x2c] sm:$0xf]
        %v2834 = vld [vmem:[#allocation2 + $0x30] sm:$0xf]
        %v2835 = vld [vmem:[#allocation2 + $0x34] sm:$0xf]
        %v2836 = vld [vmem:[#allocation2 + $0x38] sm:$0xf]
        %v2837 = vld [vmem:[#allocation2 + $0x3c] sm:$0xf]
        %v2838 = vld [vmem:[#allocation2 + $0x40] sm:$0xf]
        %v2839 = vld [vmem:[#allocation2 + $0x44] sm:$0xf]
        %v2840 = vld [vmem:[#allocation2 + $0x48] sm:$0xf]
        %v2841 = vld [vmem:[#allocation2 + $0x4c] sm:$0xf]
        %v2842 = vld [vmem:[#allocation2 + $0x50] sm:$0xf]
        %v2843 = vld [vmem:[#allocation2 + $0x54] sm:$0xf]
        %v2844 = vld [vmem:[#allocation2 + $0x58] sm:$0xf]
        %v2845 = vld [vmem:[#allocation2 + $0x5c] sm:$0xf]
        %v2846 = vld [vmem:[#allocation2 + $0x60] sm:$0xf]
        %v2847 = vld [vmem:[#allocation2 + $0x64] sm:$0xf]
        %v2848 = vld [vmem:[#allocation2 + $0x68] sm:$0xf]
        %v2849 = vld [vmem:[#allocation2 + $0x6c] sm:$0xf]
        %v2850 = vld [vmem:[#allocation2 + $0x70] sm:$0xf]
        %v2851 = vld [vmem:[#allocation2 + $0x74] sm:$0xf]
        %v2852 = vld [vmem:[#allocation2 + $0x78] sm:$0xf]
        %v2853 = vld [vmem:[#allocation2 + $0x7c] sm:$0xf]
        %v2854 = vld [vmem:[#allocation2 + $0x80] sm:$0xf]
        %v2855 = vld [vmem:[#allocation2 + $0x84] sm:$0xf]
        %v2856 = vld [vmem:[#allocation2 + $0x88] sm:$0xf]
        %v2857 = vld [vmem:[#allocation2 + $0x8c] sm:$0xf]
        %v2858 = vld [vmem:[#allocation2 + $0x90] sm:$0xf]
        %v2859 = vld [vmem:[#allocation2 + $0x94] sm:$0xf]
        %v2860 = vld [vmem:[#allocation2 + $0x98] sm:$0xf]
        %v2861 = vld [vmem:[#allocation2 + $0x9c] sm:$0xf]
        %v2862 = vld [vmem:[#allocation2 + $0xa0] sm:$0xf]
        %v2863 = vld [vmem:[#allocation2 + $0xa4] sm:$0xf]
        %v2864 = vld [vmem:[#allocation2 + $0xa8] sm:$0xf]
        %v2865 = vld [vmem:[#allocation2 + $0xac] sm:$0xf]
        %v2866 = vld [vmem:[#allocation2 + $0xb0] sm:$0xf]
        %v2867 = vld [vmem:[#allocation2 + $0xb4] sm:$0xf]
        %v2868 = vld [vmem:[#allocation2 + $0xb8] sm:$0xf]
        %v2869 = vld [vmem:[#allocation2 + $0xbc] sm:$0xf]
        %v2870 = vld [vmem:[#allocation2 + $0xc0] sm:$0xf]
        %v2871 = vld [vmem:[#allocation2 + $0xc4] sm:$0xf]
        %v2872 = vld [vmem:[#allocation2 + $0xc8] sm:$0xf]
        %v2873 = vld [vmem:[#allocation2 + $0xcc] sm:$0xf]
        %v2874 = vld [vmem:[#allocation2 + $0xd0] sm:$0xf]
        %v2875 = vld [vmem:[#allocation2 + $0xd4] sm:$0xf]
        %v2876 = vld [vmem:[#allocation2 + $0xd8] sm:$0xf]
        %v2877 = vld [vmem:[#allocation2 + $0xdc] sm:$0xf]
        %s2878 = sld [smem:[#allocation3 + $0x4]]
        %v2879 = vstv %s2878
        %v2896 = vunpack.c.l.b16 %v2806
        %v2897 = vunpack.c.h.b16 %v2806
        %v2898 = vunpack.c.l.b16 %v2807
        %v2899 = vunpack.c.h.b16 %v2807
        %v2900 = vunpack.c.l.b16 %v2808
        %v2901 = vunpack.c.h.b16 %v2808
        %v2902 = vunpack.c.l.b16 %v2809
        %v2903 = vunpack.c.h.b16 %v2809
        %v2904 = vunpack.c.l.b16 %v2810
        %v2905 = vunpack.c.h.b16 %v2810
        %v2906 = vunpack.c.l.b16 %v2811
        %v2907 = vunpack.c.h.b16 %v2811
        %v2908 = vunpack.c.l.b16 %v2812
        %v2909 = vunpack.c.h.b16 %v2812
        %v2910 = vunpack.c.l.b16 %v2813
        %v2911 = vunpack.c.h.b16 %v2813
        %v2912 = vunpack.c.l.b16 %v2814
        %v2913 = vunpack.c.h.b16 %v2814
        %v2914 = vunpack.c.l.b16 %v2815
        %v2915 = vunpack.c.h.b16 %v2815
        %v2916 = vunpack.c.l.b16 %v2816
        %v2917 = vunpack.c.h.b16 %v2816
        %v2918 = vunpack.c.l.b16 %v2817
        %v2919 = vunpack.c.h.b16 %v2817
        %v2920 = vunpack.c.l.b16 %v2818
        %v2921 = vunpack.c.h.b16 %v2818
        %v2922 = vunpack.c.l.b16 %v2819
        %v2923 = vunpack.c.h.b16 %v2819
        %v2924 = vunpack.c.l.b16 %v2820
        %v2925 = vunpack.c.h.b16 %v2820
        %v2926 = vunpack.c.l.b16 %v2821
        %v2927 = vunpack.c.h.b16 %v2821
        %v2928 = vpack.c.b16 %v2900, %v2896
        %v2929 = vpack.c.b16 %v2901, %v2897
        %v2930 = vpack.c.b16 %v2902, %v2898
        %v2931 = vpack.c.b16 %v2903, %v2899
        %v2932 = vpack.c.b16 %v2908, %v2904
        %v2933 = vpack.c.b16 %v2909, %v2905
        %v2934 = vpack.c.b16 %v2910, %v2906
        %v2935 = vpack.c.b16 %v2911, %v2907
        %v2936 = vpack.c.b16 %v2916, %v2912
        %v2937 = vpack.c.b16 %v2917, %v2913
        %v2938 = vpack.c.b16 %v2918, %v2914
        %v2939 = vpack.c.b16 %v2919, %v2915
        %v2940 = vpack.c.b16 %v2924, %v2920
        %v2941 = vpack.c.b16 %v2925, %v2921
        %v2942 = vpack.c.b16 %v2926, %v2922
        %v2943 = vpack.c.b16 %v2927, %v2923
        %v3012 = vunpack.c.l.b16 %v2822
        %v3013 = vunpack.c.l.b16 %v2823
        %v3014 = vunpack.c.l.b16 %v2824
        %v3015 = vunpack.c.l.b16 %v2825
        %v3016 = vunpack.c.l.b16 %v2826
        %v3017 = vunpack.c.l.b16 %v2827
        %v3018 = vunpack.c.l.b16 %v2828
        %v3019 = vunpack.c.l.b16 %v2829
        %v3020 = vunpack.c.l.b16 %v2830
        %v3021 = vunpack.c.l.b16 %v2831
        %v3022 = vunpack.c.l.b16 %v2832
        %v3023 = vunpack.c.l.b16 %v2833
        %v3024 = vunpack.c.l.b16 %v2834
        %v3025 = vunpack.c.l.b16 %v2835
        %v3026 = vunpack.c.l.b16 %v2836
        %v3027 = vunpack.c.l.b16 %v2837
        %v3028 = vunpack.c.l.b16 %v2838
        %v3029 = vunpack.c.l.b16 %v2839
        %v3030 = vunpack.c.l.b16 %v2840
        %v3031 = vunpack.c.l.b16 %v2841
        %v3032 = vunpack.c.l.b16 %v2842
        %v3033 = vunpack.c.l.b16 %v2843
        %v3034 = vunpack.c.l.b16 %v2844
        %v3035 = vunpack.c.l.b16 %v2845
        %v3036 = vunpack.c.l.b16 %v2846
        %v3037 = vunpack.c.l.b16 %v2847
        %v3038 = vunpack.c.l.b16 %v2848
        %v3039 = vunpack.c.l.b16 %v2849
        %v3040 = vunpack.c.l.b16 %v2850
        %v3041 = vunpack.c.l.b16 %v2851
        %v3042 = vunpack.c.l.b16 %v2852
        %v3043 = vunpack.c.l.b16 %v2853
        %v3044 = vunpack.c.l.b16 %v2854
        %v3045 = vunpack.c.l.b16 %v2855
        %v3046 = vunpack.c.l.b16 %v2856
        %v3047 = vunpack.c.l.b16 %v2857
        %v3048 = vunpack.c.l.b16 %v2858
        %v3049 = vunpack.c.l.b16 %v2859
        %v3050 = vunpack.c.l.b16 %v2860
        %v3051 = vunpack.c.l.b16 %v2861
        %v3052 = vunpack.c.l.b16 %v2862
        %v3053 = vunpack.c.l.b16 %v2863
        %v3054 = vunpack.c.l.b16 %v2864
        %v3055 = vunpack.c.l.b16 %v2865
        %v3056 = vunpack.c.l.b16 %v2866
        %v3057 = vunpack.c.l.b16 %v2867
        %v3058 = vunpack.c.l.b16 %v2868
        %v3059 = vunpack.c.l.b16 %v2869
        %v3060 = vunpack.c.l.b16 %v2870
        %v3061 = vunpack.c.l.b16 %v2871
        %v3062 = vunpack.c.l.b16 %v2872
        %v3063 = vunpack.c.l.b16 %v2873
        %v3064 = vunpack.c.l.b16 %v2874
        %v3065 = vunpack.c.l.b16 %v2875
        %v3066 = vunpack.c.l.b16 %v2876
        %v3067 = vunpack.c.l.b16 %v2877
        %v3068 = vpack.c.b16 %v3013, %v3012
        %v3069 = vpack.c.b16 %v3015, %v3014
        %v3070 = vpack.c.b16 %v3017, %v3016
        %v3071 = vpack.c.b16 %v3019, %v3018
        %v3072 = vpack.c.b16 %v3021, %v3020
        %v3073 = vpack.c.b16 %v3023, %v3022
        %v3074 = vpack.c.b16 %v3025, %v3024
        %v3075 = vpack.c.b16 %v3027, %v3026
        %v3076 = vpack.c.b16 %v3029, %v3028
        %v3077 = vpack.c.b16 %v3031, %v3030
        %v3078 = vpack.c.b16 %v3033, %v3032
        %v3079 = vpack.c.b16 %v3035, %v3034
        %v3080 = vpack.c.b16 %v3037, %v3036
        %v3081 = vpack.c.b16 %v3039, %v3038
        %v3082 = vpack.c.b16 %v3041, %v3040
        %v3083 = vpack.c.b16 %v3043, %v3042
        %v3084 = vpack.c.b16 %v3045, %v3044
        %v3085 = vpack.c.b16 %v3047, %v3046
        %v3086 = vpack.c.b16 %v3049, %v3048
        %v3087 = vpack.c.b16 %v3051, %v3050
        %v3088 = vpack.c.b16 %v3053, %v3052
        %v3089 = vpack.c.b16 %v3055, %v3054
        %v3090 = vpack.c.b16 %v3057, %v3056
        %v3091 = vpack.c.b16 %v3059, %v3058
        %v3092 = vpack.c.b16 %v3061, %v3060
        %v3093 = vpack.c.b16 %v3063, %v3062
        %v3094 = vpack.c.b16 %v3065, %v3064
        %v3095 = vpack.c.b16 %v3067, %v3066
        %v3125 = vsel %vm1300, %v2931, 0
        %v3128 = vsel %vm1300, %v2935, 0
        %v3131 = vsel %vm1300, %v2939, 0
        %v3134 = vsel %vm1300, %v2943, 0
        %3136 = vmatpush.bf16.msra.mxu0 %v3075
        %3137 = vmatpush.bf16.msra.mxu0 %v3074
        %3138 = vmatpush.bf16.msra.mxu0 %v3073
        %3139 = vmatpush.bf16.msra.mxu0 %v3072
        %3140 = vmatpush.bf16.msra.mxu0 %v3071
        %3141 = vmatpush.bf16.msra.mxu0 %v3070
        %3142 = vmatpush.bf16.msra.mxu0 %v3069
        %3143 = vmatpush.bf16.msra.mxu0 %v3068
        %3144 = vmatmul.bf16.gmra.mxu0 %v2928
        %v3145 = vpop.f32.mrf.mxu0
        %v3146 = vadd.f32 %v2879, %v3145
        %v3147 = vpop.f32.mrf.mxu0
        %v3148 = vadd.f32 %v2879, %v3147
        %3149 = vmatmul.bf16.gmra.mxu0 %v2932
        %v3150 = vpop.f32.mrf.mxu0
        %v3151 = vadd.f32 %v2879, %v3150
        %v3152 = vpop.f32.mrf.mxu0
        %v3153 = vadd.f32 %v2879, %v3152
        %3154 = vmatmul.bf16.gmra.mxu0 %v2936
        %v3155 = vpop.f32.mrf.mxu0
        %v3156 = vadd.f32 %v2879, %v3155
        %v3157 = vpop.f32.mrf.mxu0
        %v3158 = vadd.f32 %v2879, %v3157
        %3159 = vmatmul.bf16.gmra.mxu0 %v2940
        %v3160 = vpop.f32.mrf.mxu0
        %v3161 = vadd.f32 %v2879, %v3160
        %v3162 = vpop.f32.mrf.mxu0
        %v3163 = vadd.f32 %v2879, %v3162
        %3164 = vdwg.mxu0
        %3165 = vmatpush.bf16.msra.mxu0 %v3083
        %3166 = vmatpush.bf16.msra.mxu0 %v3082
        %3167 = vmatpush.bf16.msra.mxu0 %v3081
        %3168 = vmatpush.bf16.msra.mxu0 %v3080
        %3169 = vmatpush.bf16.msra.mxu0 %v3079
        %3170 = vmatpush.bf16.msra.mxu0 %v3078
        %3171 = vmatpush.bf16.msra.mxu0 %v3077
        %3172 = vmatpush.bf16.msra.mxu0 %v3076
        %3173 = vmatmul.bf16.gmra.mxu0 %v2929
        %v3174 = vpop.f32.mrf.mxu0
        %v3175 = vadd.f32 %v3146, %v3174
        %v3176 = vpop.f32.mrf.mxu0
        %v3177 = vadd.f32 %v3148, %v3176
        %3178 = vmatmul.bf16.gmra.mxu0 %v2933
        %v3179 = vpop.f32.mrf.mxu0
        %v3180 = vadd.f32 %v3151, %v3179
        %v3181 = vpop.f32.mrf.mxu0
        %v3182 = vadd.f32 %v3153, %v3181
        %3183 = vmatmul.bf16.gmra.mxu0 %v2937
        %v3184 = vpop.f32.mrf.mxu0
        %v3185 = vadd.f32 %v3156, %v3184
        %v3186 = vpop.f32.mrf.mxu0
        %v3187 = vadd.f32 %v3158, %v3186
        %3188 = vmatmul.bf16.gmra.mxu0 %v2941
        %v3189 = vpop.f32.mrf.mxu0
        %v3190 = vadd.f32 %v3161, %v3189
        %v3191 = vpop.f32.mrf.mxu0
        %v3192 = vadd.f32 %v3163, %v3191
        %3193 = vdwg.mxu0
        %3194 = vmatpush.bf16.msra.mxu0 %v3091
        %3195 = vmatpush.bf16.msra.mxu0 %v3090
        %3196 = vmatpush.bf16.msra.mxu0 %v3089
        %3197 = vmatpush.bf16.msra.mxu0 %v3088
        %3198 = vmatpush.bf16.msra.mxu0 %v3087
        %3199 = vmatpush.bf16.msra.mxu0 %v3086
        %3200 = vmatpush.bf16.msra.mxu0 %v3085
        %3201 = vmatpush.bf16.msra.mxu0 %v3084
        %3202 = vmatmul.bf16.gmra.mxu0 %v2930
        %v3203 = vpop.f32.mrf.mxu0
        %v3204 = vadd.f32 %v3175, %v3203
        %v3205 = vpop.f32.mrf.mxu0
        %v3206 = vadd.f32 %v3177, %v3205
        %3207 = vmatmul.bf16.gmra.mxu0 %v2934
        %v3208 = vpop.f32.mrf.mxu0
        %v3209 = vadd.f32 %v3180, %v3208
        %v3210 = vpop.f32.mrf.mxu0
        %v3211 = vadd.f32 %v3182, %v3210
        %3212 = vmatmul.bf16.gmra.mxu0 %v2938
        %v3213 = vpop.f32.mrf.mxu0
        %v3214 = vadd.f32 %v3185, %v3213
        %v3215 = vpop.f32.mrf.mxu0
        %v3216 = vadd.f32 %v3187, %v3215
        %3217 = vmatmul.bf16.gmra.mxu0 %v2942
        %v3218 = vpop.f32.mrf.mxu0
        %v3219 = vadd.f32 %v3190, %v3218
        %v3220 = vpop.f32.mrf.mxu0
        %v3221 = vadd.f32 %v3192, %v3220
        %3222 = vdwg.mxu0
        %3223 = vmatpush.bf16.msra.mxu0 0
        %3224 = vmatpush.bf16.msra.mxu0 0
        %3225 = vmatpush.bf16.msra.mxu0 0
        %3226 = vmatpush.bf16.msra.mxu0 0
        %3227 = vmatpush.bf16.msra.mxu0 %v3095
        %3228 = vmatpush.bf16.msra.mxu0 %v3094
        %3229 = vmatpush.bf16.msra.mxu0 %v3093
        %3230 = vmatpush.bf16.msra.mxu0 %v3092
        %3231 = vmatmul.bf16.gmra.mxu0 %v3125
        %v3232 = vpop.f32.mrf.mxu0
        %v3233 = vadd.f32 %v3204, %v3232
        %v3234 = vpop.f32.mrf.mxu0
        %v3235 = vadd.f32 %v3206, %v3234
        %3236 = vmatmul.bf16.gmra.mxu0 %v3128
        %v3237 = vpop.f32.mrf.mxu0
        %v3238 = vadd.f32 %v3209, %v3237
        %v3239 = vpop.f32.mrf.mxu0
        %v3240 = vadd.f32 %v3211, %v3239
        %3241 = vmatmul.bf16.gmra.mxu0 %v3131
        %v3242 = vpop.f32.mrf.mxu0
        %v3243 = vadd.f32 %v3214, %v3242
        %v3244 = vpop.f32.mrf.mxu0
        %v3245 = vadd.f32 %v3216, %v3244
        %3246 = vmatmul.bf16.gmra.mxu0 %v3134
        %v3247 = vpop.f32.mrf.mxu0
        %v3248 = vadd.f32 %v3219, %v3247
        %v3249 = vpop.f32.mrf.mxu0
        %v3250 = vadd.f32 %v3221, %v3249
        %3251 = vdwg.mxu0
        %s3252 = scalar_lea.vmem %s382, 256 [#allocation8]
        %3253 = vst.msk [vmem:[%s3252] sm:$0xff] %vm1300, %v3233
        %3254 = vst.msk [vmem:[%s3252 + $0x8] sm:$0xff] %vm1300, %v3235
        %3255 = vst.msk [vmem:[%s3252 + $0x10] sm:$0xff] %vm1300, %v3238
        %3256 = vst.msk [vmem:[%s3252 + $0x18] sm:$0xff] %vm1300, %v3240
        %3257 = vst.msk [vmem:[%s3252 + $0x20] sm:$0xff] %vm1300, %v3243
        %3258 = vst.msk [vmem:[%s3252 + $0x28] sm:$0xff] %vm1300, %v3245
        %3259 = vst.msk [vmem:[%s3252 + $0x30] sm:$0xff] %vm1300, %v3248
        %3260 = vst.msk [vmem:[%s3252 + $0x38] sm:$0xff] %vm1300, %v3250
        %s3261 = sand.u32 %s234, 1
        %s3262 = scalar_lea.sflag [#allocation5], %s3261
        %s3263 = sand.u32 %s234, 1
        %s3264 = smul.addr %s3263, 320
        %s3265 = scalar_lea.vmem [#allocation8], %s3264
        // Predicated region
        $region61: #{tpu_custom_call.1} parent=51 // pred_check
          %p3266 = pneg %p244
        $region62: #{tpu_custom_call.1} parent=51 // pred_check_branch
          %3268 = sbr.rel (%p3266) target = $region64
        $region63: #{tpu_custom_call.1} parent=51 // pred_region
          %s3269 = smul.u32 8, %s29
          %3271 = vsyncadd %s3262, 0
          %s3272 = smul.addr %s28, 40
          %s3273 = sadd.s32 %s3269, %s3272
          %s3274 = smul.addr %s3273, 8
          %s3275 = scalar_lea.hbm %s8, %s3274
          %s3276 = sshll.u32 %s3265, 4
          %s3277 = int_to_ptr.vmem [resolvable:$true] %s3276
          %s3278 = sshll.u32 %s3275, 4
          %s3279 = int_to_ptr.hbm [resolvable:$true] %s3278
          %3284 = dma.vmem_to_hbm [thread:$0]  %s3277, 5120, %s3279, %s3262, 128, 128, 8
        $region64: #{tpu_custom_call.1} parent=51 // pred_fallthru
          _
      $region52: #{tpu_custom_call.1} parent=5 // pred_fallthru
        _
      %p3285 = scmp.le.s32.totalorder 2, %s19
      // Predicated region
      $region65: #{tpu_custom_call.1} parent=5 // pred_check
        %p3286 = pneg %p3285
      $region66: #{tpu_custom_call.1} parent=5 // pred_check_branch
        %3288 = sbr.rel (%p3286) target = $region68
      $region67: #{tpu_custom_call.1} parent=5 // pred_region
        %s3289 = ssub.s32 %s19, 2
        // Predicated region
        $region69: #{tpu_custom_call.1} parent=67 // pred_check
          %p3290 = pneg %p250
        $region70: #{tpu_custom_call.1} parent=67 // pred_check_branch
          %3292 = sbr.rel (%p3290) target = $region72
        $region71: #{tpu_custom_call.1} parent=67 // pred_region
          %s3293 = sand.u32 %s235, 1
          %s3294 = scalar_lea.sflag [#allocation5], %s3293
          %s3295 = sand.u32 %s235, 1
          %s3296 = smul.addr %s3295, 320
          %s3297 = scalar_lea.vmem [#allocation8], %s3296
          %3299 = dma.done %s3294, 5120
        $region72: #{tpu_custom_call.1} parent=67 // pred_fallthru
          _
      $region68: #{tpu_custom_call.1} parent=5 // pred_fallthru
        _
    $region6: #{tpu_custom_call.1} parent=1 // loop_footer
      %s23 = sadd.s32 1, %s19
    $region7: #{tpu_custom_call.1} parent=1 // loop_footer_branch
      %18 = sbr.rel target = $region3
    $region8: #{tpu_custom_call.1} parent=1 // loop_exit
      _
    %3300 = vsyncpa [#allocation4], 1
    %s3301 = scalar_lea.sflag [#allocation4], 1
    %3302 = vsyncpa %s3301, 1
    %3303 = vsyncpa [#allocation5], 1
    %s3304 = scalar_lea.sflag [#allocation5], 1
    %3305 = vsyncpa %s3304, 1
    %3306 = vsyncpa [#allocation6], 1
    %s3307 = scalar_lea.sflag [#allocation6], 1
    %3308 = vsyncpa %s3307, 1

</llo_original>
